<compile_context>
chip_gen: v7x
topology: tpu7x:2x2x1
jax: 0.10.0
libtpu: 0.0.40
codegen_flags: <defaults>
</compile_context>

<pallas_src>
import jax
import jax.numpy as jnp
from jax.experimental import pallas as pl
from jax.experimental.pallas import tpu as pltpu

# Logical (PyTorch) dims.
D_IN, D_H, D_OUT = 784, 500, 10
# Lane-padded feature dims (multiples of 128). The K dim of fc1 stays at 784 (full last dim of x).
D_H_P, D_OUT_P = 512, 128
# Large negative bias for padded logit columns (exp underflows to exactly 0 in f32).
NEG_BIG = -1e30


def mlp_kernel(x_ref, w1_ref, b1_ref, w2_ref, b2_ref, w3_ref, b3_ref,
               w4_ref, b4_ref, o_ref):
    # Cast the f32 activation tile to bf16 in VMEM (MXU inputs), accumulate in f32.
    x = x_ref[...].astype(jnp.bfloat16)
    # fc1 + relu
    h = jnp.dot(x, w1_ref[...], preferred_element_type=jnp.float32) + b1_ref[...]
    h = jnp.maximum(h, 0.0).astype(jnp.bfloat16)
    # fc2 + relu
    h = jnp.dot(h, w2_ref[...], preferred_element_type=jnp.float32) + b2_ref[...]
    h = jnp.maximum(h, 0.0).astype(jnp.bfloat16)
    # fc3 + relu
    h = jnp.dot(h, w3_ref[...], preferred_element_type=jnp.float32) + b3_ref[...]
    h = jnp.maximum(h, 0.0).astype(jnp.bfloat16)
    # fc4 (padded logit columns carry a ~-1e30 bias -> contribute 0 to the softmax sum)
    logits = jnp.dot(h, w4_ref[...], preferred_element_type=jnp.float32) + b4_ref[...]
    # stable log_softmax over the feature axis
    m = jnp.max(logits, axis=-1, keepdims=True)
    lse = m + jnp.log(jnp.sum(jnp.exp(logits - m), axis=-1, keepdims=True))
    o_ref[...] = logits - lse


def _round_up(n, m):
    return ((n + m - 1) // m) * m


def _choose_tb(batch):
    """Pick the batch tile: <=256 rows, multiple of 8, and >=2 grid tiles when batch > 8."""
    if batch >= 512:
        return 256
    if batch > 8:
        # Split into (at least) two tiles so both v7x TensorCores get work.
        return min(256, _round_up((batch + 1) // 2, 8))
    # Tiny batch: single tile, rounded up to the 8-row sublane granule.
    return _round_up(max(batch, 1), 8)


def prepare_params(params_f32):
    """Pad feature dims to lane-friendly shapes and cast weights to bf16 (once, outside kernel)."""
    def pad_w(w, rows, cols):
        out = jnp.zeros((rows, cols), jnp.float32)
        return out.at[: w.shape[0], : w.shape[1]].set(w).astype(jnp.bfloat16)

    def pad_b(b, cols, pad_value=0.0):
        out = jnp.full((1, cols), pad_value, jnp.float32)
        return out.at[:, : b.shape[1]].set(b)

    p = {}
    p["w1"] = pad_w(params_f32["w1"], D_IN, D_H_P)      # K dim stays 784
    p["b1"] = pad_b(params_f32["b1"], D_H_P)
    p["w2"] = pad_w(params_f32["w2"], D_H_P, D_H_P)
    p["b2"] = pad_b(params_f32["b2"], D_H_P)
    p["w3"] = pad_w(params_f32["w3"], D_H_P, D_H_P)
    p["b3"] = pad_b(params_f32["b3"], D_H_P)
    p["w4"] = pad_w(params_f32["w4"], D_H_P, D_OUT_P)
    p["b4"] = pad_b(params_f32["b4"], D_OUT_P, pad_value=NEG_BIG)
    return p


@jax.jit
def mlp_forward(x, padded_params):
    """x: [B, 784] float32. padded_params: output of prepare_params (bf16 weights, f32 biases)."""
    B = x.shape[0]
    TB = _choose_tb(B)
    n_tiles = pl.cdiv(B, TB)
    B_pad = n_tiles * TB

    # Only pad the batch dim, and only when needed (single fused pad; no feature-dim pre-pass).
    if B_pad != B:
        x = jnp.pad(x, ((0, B_pad - B), (0, 0)))

    p = padded_params
    args = (x, p["w1"], p["b1"], p["w2"], p["b2"], p["w3"], p["b3"], p["w4"], p["b4"])

    def resident_spec(a):
        # Full-array block, same block index every grid step -> stays VMEM-resident.
        return pl.BlockSpec(a.shape, lambda i: (0, 0))

    flops = 2 * B_pad * (D_IN * D_H_P + 2 * D_H_P * D_H_P + D_H_P * D_OUT_P)
    bytes_accessed = (
        sum(int(a.size) * a.dtype.itemsize for a in args)
        + B_pad * D_OUT_P * 4
    )

    out = pl.pallas_call(
        mlp_kernel,
        out_shape=jax.ShapeDtypeStruct((B_pad, D_OUT_P), jnp.float32),
        grid=(n_tiles,),
        in_specs=[pl.BlockSpec((TB, D_IN), lambda i: (i, 0))]
        + [resident_spec(a) for a in args[1:]],
        out_specs=pl.BlockSpec((TB, D_OUT_P), lambda i: (i, 0)),
        compiler_params=pltpu.CompilerParams(
            dimension_semantics=("parallel",),
            vmem_limit_bytes=32 << 20,
        ),
        cost_estimate=pl.CostEstimate(
            flops=flops,
            transcendentals=B_pad * (D_OUT_P + 1),
            bytes_accessed=bytes_accessed,
        ),
    )(*args)

    # Drop padded batch rows and padded logit columns.
    return out[:B, :D_OUT]


def init_params(key):
    """Deterministic init mimicking nn.Linear's uniform(-1/sqrt(fan_in), 1/sqrt(fan_in))."""
    dims = [(D_IN, D_H), (D_H, D_H), (D_H, D_H), (D_H, D_OUT)]
    params = {}
    for i, (fan_in, fan_out) in enumerate(dims, start=1):
        key, kw, kb = jax.random.split(key, 3)
        bound = 1.0 / jnp.sqrt(float(fan_in))
        # stored transposed: [in, out]
        params[f"w{i}"] = jax.random.uniform(
            kw, (fan_in, fan_out), jnp.float32, minval=-bound, maxval=bound)
        params[f"b{i}"] = jax.random.uniform(
            kb, (1, fan_out), jnp.float32, minval=-bound, maxval=bound)
    return params


def reference_forward(x, params):
    """Pure-JAX reference using the same bf16-matmul / f32-accumulate recipe."""
    def lin(h, w, b):
        return jnp.dot(h.astype(jnp.bfloat16), w.astype(jnp.bfloat16),
                       preferred_element_type=jnp.float32) + b
    h = jnp.maximum(lin(x, params["w1"], params["b1"]), 0.0)
    h = jnp.maximum(lin(h, params["w2"], params["b2"]), 0.0)
    h = jnp.maximum(lin(h, params["w3"], params["b3"]), 0.0)
    logits = lin(h, params["w4"], params["b4"])
    return jax.nn.log_softmax(logits, axis=-1)


if __name__ == "__main__":
    key = jax.random.PRNGKey(0)
    params = init_params(key)
    padded = prepare_params(params)

    ok = True
    # Small single-tile case and a multi-tile case with ragged batch padding.
    for B in (8, 40):
        key, kx = jax.random.split(key)
        x = jax.random.normal(kx, (B, D_IN), jnp.float32)

        out = jax.block_until_ready(mlp_forward(x, padded))
        ref = reference_forward(x, params)

        assert out.shape == (B, D_OUT)
        assert bool(jnp.all(jnp.isfinite(out)))
        err = float(jnp.max(jnp.abs(out - ref)))
        ok = ok and bool(jnp.allclose(out, ref, atol=2e-3, rtol=2e-3))
        assert ok, f"batch={B} max_abs_err={err}"

    print("KERNEL_OK")
</pallas_src>

<mosaic_0001>
module attributes {stable_mosaic.version = 11 : i64} {
  func.func @mlp_kernel(%arg0: i32, %arg1: memref<8x784xf32, #tpu.memory_space<vmem>>, %arg2: memref<784x512xbf16, #tpu.memory_space<vmem>>, %arg3: memref<1x512xf32, #tpu.memory_space<vmem>>, %arg4: memref<512x512xbf16, #tpu.memory_space<vmem>>, %arg5: memref<1x512xf32, #tpu.memory_space<vmem>>, %arg6: memref<512x512xbf16, #tpu.memory_space<vmem>>, %arg7: memref<1x512xf32, #tpu.memory_space<vmem>>, %arg8: memref<512x128xbf16, #tpu.memory_space<vmem>>, %arg9: memref<1x128xf32, #tpu.memory_space<vmem>>, %arg10: memref<8x128xf32, #tpu.memory_space<vmem>>) attributes {dimension_semantics = [#tpu.dimension_semantics<parallel>], iteration_bounds = array<i64: 1>, scalar_prefetch = 0 : i64, scratch_operands = 0 : i64, tpu.core_type = #tpu.core_type<tc>, window_params = [{transform_indices = @transform_0, window_bounds = array<i64: 8, 784>}, {pipeline_mode = #tpu.pipeline_mode<synchronous>, transform_indices = @transform_1, window_bounds = array<i64: 784, 512>}, {pipeline_mode = #tpu.pipeline_mode<synchronous>, transform_indices = @transform_2, window_bounds = array<i64: 1, 512>}, {pipeline_mode = #tpu.pipeline_mode<synchronous>, transform_indices = @transform_3, window_bounds = array<i64: 512, 512>}, {pipeline_mode = #tpu.pipeline_mode<synchronous>, transform_indices = @transform_4, window_bounds = array<i64: 1, 512>}, {pipeline_mode = #tpu.pipeline_mode<synchronous>, transform_indices = @transform_5, window_bounds = array<i64: 512, 512>}, {pipeline_mode = #tpu.pipeline_mode<synchronous>, transform_indices = @transform_6, window_bounds = array<i64: 1, 512>}, {pipeline_mode = #tpu.pipeline_mode<synchronous>, transform_indices = @transform_7, window_bounds = array<i64: 512, 128>}, {pipeline_mode = #tpu.pipeline_mode<synchronous>, transform_indices = @transform_8, window_bounds = array<i64: 1, 128>}, {transform_indices = @transform_9, window_bounds = array<i64: 8, 128>}]} {
    %c0 = arith.constant 0 : index
    %c0_0 = arith.constant 0 : index
    %0 = vector.load %arg1[%c0, %c0_0] : memref<8x784xf32, #tpu.memory_space<vmem>>, vector<8x784xf32>
    %1 = arith.truncf %0 : vector<8x784xf32> to vector<8x784xbf16>
    %c0_1 = arith.constant 0 : index
    %c0_2 = arith.constant 0 : index
    %2 = vector.load %arg2[%c0_1, %c0_2] : memref<784x512xbf16, #tpu.memory_space<vmem>>, vector<784x512xbf16>
    %cst = arith.constant dense<0.000000e+00> : vector<8x512xf32>
    %3 = tpu.matmul %1, %2, %cst {dimension_numbers = #tpu.dot_dimension_numbers<[1], [0], [0], [1], [0, 0, 1, 1], [], []>} : vector<8x784xbf16>, vector<784x512xbf16>, vector<8x512xf32> -> vector<8x512xf32>
    %c0_3 = arith.constant 0 : index
    %c0_4 = arith.constant 0 : index
    %4 = vector.load %arg3[%c0_3, %c0_4] : memref<1x512xf32, #tpu.memory_space<vmem>>, vector<1x512xf32>
    %5 = vector.broadcast %4 : vector<1x512xf32> to vector<8x512xf32>
    %6 = arith.addf %3, %5 : vector<8x512xf32>
    %cst_5 = arith.constant 0.000000e+00 : f32
    %7 = vector.broadcast %cst_5 : f32 to vector<8x512xf32>
    %8 = arith.maximumf %6, %7 : vector<8x512xf32>
    %9 = arith.truncf %8 : vector<8x512xf32> to vector<8x512xbf16>
    %c0_6 = arith.constant 0 : index
    %c0_7 = arith.constant 0 : index
    %10 = vector.load %arg4[%c0_6, %c0_7] : memref<512x512xbf16, #tpu.memory_space<vmem>>, vector<512x512xbf16>
    %cst_8 = arith.constant dense<0.000000e+00> : vector<8x512xf32>
    %11 = tpu.matmul %9, %10, %cst_8 {dimension_numbers = #tpu.dot_dimension_numbers<[1], [0], [0], [1], [0, 0, 1, 1], [], []>} : vector<8x512xbf16>, vector<512x512xbf16>, vector<8x512xf32> -> vector<8x512xf32>
    %c0_9 = arith.constant 0 : index
    %c0_10 = arith.constant 0 : index
    %12 = vector.load %arg5[%c0_9, %c0_10] : memref<1x512xf32, #tpu.memory_space<vmem>>, vector<1x512xf32>
    %13 = vector.broadcast %12 : vector<1x512xf32> to vector<8x512xf32>
    %14 = arith.addf %11, %13 : vector<8x512xf32>
    %cst_11 = arith.constant 0.000000e+00 : f32
    %15 = vector.broadcast %cst_11 : f32 to vector<8x512xf32>
    %16 = arith.maximumf %14, %15 : vector<8x512xf32>
    %17 = arith.truncf %16 : vector<8x512xf32> to vector<8x512xbf16>
    %c0_12 = arith.constant 0 : index
    %c0_13 = arith.constant 0 : index
    %18 = vector.load %arg6[%c0_12, %c0_13] : memref<512x512xbf16, #tpu.memory_space<vmem>>, vector<512x512xbf16>
    %cst_14 = arith.constant dense<0.000000e+00> : vector<8x512xf32>
    %19 = tpu.matmul %17, %18, %cst_14 {dimension_numbers = #tpu.dot_dimension_numbers<[1], [0], [0], [1], [0, 0, 1, 1], [], []>} : vector<8x512xbf16>, vector<512x512xbf16>, vector<8x512xf32> -> vector<8x512xf32>
    %c0_15 = arith.constant 0 : index
    %c0_16 = arith.constant 0 : index
    %20 = vector.load %arg7[%c0_15, %c0_16] : memref<1x512xf32, #tpu.memory_space<vmem>>, vector<1x512xf32>
    %21 = vector.broadcast %20 : vector<1x512xf32> to vector<8x512xf32>
    %22 = arith.addf %19, %21 : vector<8x512xf32>
    %cst_17 = arith.constant 0.000000e+00 : f32
    %23 = vector.broadcast %cst_17 : f32 to vector<8x512xf32>
    %24 = arith.maximumf %22, %23 : vector<8x512xf32>
    %25 = arith.truncf %24 : vector<8x512xf32> to vector<8x512xbf16>
    %c0_18 = arith.constant 0 : index
    %c0_19 = arith.constant 0 : index
    %26 = vector.load %arg8[%c0_18, %c0_19] : memref<512x128xbf16, #tpu.memory_space<vmem>>, vector<512x128xbf16>
    %cst_20 = arith.constant dense<0.000000e+00> : vector<8x128xf32>
    %27 = tpu.matmul %25, %26, %cst_20 {dimension_numbers = #tpu.dot_dimension_numbers<[1], [0], [0], [1], [0, 0, 1, 1], [], []>} : vector<8x512xbf16>, vector<512x128xbf16>, vector<8x128xf32> -> vector<8x128xf32>
    %c0_21 = arith.constant 0 : index
    %c0_22 = arith.constant 0 : index
    %28 = vector.load %arg9[%c0_21, %c0_22] : memref<1x128xf32, #tpu.memory_space<vmem>>, vector<1x128xf32>
    %29 = vector.broadcast %28 : vector<1x128xf32> to vector<8x128xf32>
    %30 = arith.addf %27, %29 : vector<8x128xf32>
    %cst_23 = arith.constant dense<0xFF800000> : vector<8xf32>
    %31 = vector.multi_reduction <maximumf>, %30, %cst_23 [1] : vector<8x128xf32> to vector<8xf32>
    %32 = vector.shape_cast %31 : vector<8xf32> to vector<8x1xf32>
    %33 = vector.broadcast %32 : vector<8x1xf32> to vector<8x128xf32>
    %34 = arith.subf %30, %33 : vector<8x128xf32>
    %35 = math.exp %34 : vector<8x128xf32>
    %cst_24 = arith.constant dense<0.000000e+00> : vector<8xf32>
    %36 = vector.multi_reduction <add>, %35, %cst_24 [1] : vector<8x128xf32> to vector<8xf32>
    %37 = vector.shape_cast %36 : vector<8xf32> to vector<8x1xf32>
    %38 = math.log %37 : vector<8x1xf32>
    %39 = arith.addf %32, %38 : vector<8x1xf32>
    %40 = vector.broadcast %39 : vector<8x1xf32> to vector<8x128xf32>
    %41 = arith.subf %30, %40 : vector<8x128xf32>
    %c0_25 = arith.constant 0 : index
    %c0_26 = arith.constant 0 : index
    %42 = vector.load %arg10[%c0_25, %c0_26] : memref<8x128xf32, #tpu.memory_space<vmem>>, vector<8x128xf32>
    tpu.vector_store %arg10[%c0_25, %c0_26], %41 {strides = array<i32>} : memref<8x128xf32, #tpu.memory_space<vmem>>, vector<8x128xf32>,
    return
  }
  func.func @transform_0(%arg0: i32) -> (i32, i32) {
    %c0_i32 = arith.constant 0 : i32
    %c0_i32_0 = arith.constant 0 : i32
    return %arg0, %c0_i32 : i32, i32
  }
  func.func @transform_1(%arg0: i32) -> (i32, i32) {
    %c0_i32 = arith.constant 0 : i32
    %c0_i32_0 = arith.constant 0 : i32
    %c0_i32_1 = arith.constant 0 : i32
    return %c0_i32, %c0_i32_0 : i32, i32
  }
  func.func @transform_2(%arg0: i32) -> (i32, i32) {
    %c0_i32 = arith.constant 0 : i32
    %c0_i32_0 = arith.constant 0 : i32
    %c0_i32_1 = arith.constant 0 : i32
    return %c0_i32, %c0_i32_0 : i32, i32
  }
  func.func @transform_3(%arg0: i32) -> (i32, i32) {
    %c0_i32 = arith.constant 0 : i32
    %c0_i32_0 = arith.constant 0 : i32
    %c0_i32_1 = arith.constant 0 : i32
    return %c0_i32, %c0_i32_0 : i32, i32
  }
  func.func @transform_4(%arg0: i32) -> (i32, i32) {
    %c0_i32 = arith.constant 0 : i32
    %c0_i32_0 = arith.constant 0 : i32
    %c0_i32_1 = arith.constant 0 : i32
    return %c0_i32, %c0_i32_0 : i32, i32
  }
  func.func @transform_5(%arg0: i32) -> (i32, i32) {
    %c0_i32 = arith.constant 0 : i32
    %c0_i32_0 = arith.constant 0 : i32
    %c0_i32_1 = arith.constant 0 : i32
    return %c0_i32, %c0_i32_0 : i32, i32
  }
  func.func @transform_6(%arg0: i32) -> (i32, i32) {
    %c0_i32 = arith.constant 0 : i32
    %c0_i32_0 = arith.constant 0 : i32
    %c0_i32_1 = arith.constant 0 : i32
    return %c0_i32, %c0_i32_0 : i32, i32
  }
  func.func @transform_7(%arg0: i32) -> (i32, i32) {
    %c0_i32 = arith.constant 0 : i32
    %c0_i32_0 = arith.constant 0 : i32
    %c0_i32_1 = arith.constant 0 : i32
    return %c0_i32, %c0_i32_0 : i32, i32
  }
  func.func @transform_8(%arg0: i32) -> (i32, i32) {
    %c0_i32 = arith.constant 0 : i32
    %c0_i32_0 = arith.constant 0 : i32
    %c0_i32_1 = arith.constant 0 : i32
    return %c0_i32, %c0_i32_0 : i32, i32
  }
  func.func @transform_9(%arg0: i32) -> (i32, i32) {
    %c0_i32 = arith.constant 0 : i32
    %c0_i32_0 = arith.constant 0 : i32
    return %arg0, %c0_i32 : i32, i32
  }
}

</mosaic_0001>

<llo_original>
// kernel: mlp_forward.1
$region0: #{mlp_forward.1}
  #allocation0 [shape = 'u32[]', space=smem, size = 0x4, offset = 0x4, fixed_abs, tag = 'smem constant byte address 0x4 - core index']
  #allocation1 [shape = 'u32[144,128]{1,0:T(1,128)}', space=vmem, size = 0x12000, scoped, tag = 'internal scratch']
  %s0 = inlined_call_operand.hbm [shape: f32[8,784], index: 0, kind: input, shape index: {}]
  %s1 = inlined_call_operand.hbm [shape: bf16[784,512], index: 1, kind: input, shape index: {}]
  %s2 = inlined_call_operand.hbm [shape: f32[1,512], index: 2, kind: input, shape index: {}]
  %s3 = inlined_call_operand.hbm [shape: bf16[512,512], index: 3, kind: input, shape index: {}]
  %s4 = inlined_call_operand.vmem [shape: f32[1,512], index: 4, kind: input, shape index: {}]
  %s5 = inlined_call_operand.hbm [shape: bf16[512,512], index: 5, kind: input, shape index: {}]
  %s6 = inlined_call_operand.vmem [shape: f32[1,512], index: 6, kind: input, shape index: {}]
  %s7 = inlined_call_operand.hbm [shape: bf16[512,128], index: 7, kind: input, shape index: {}]
  %s8 = inlined_call_operand.vmem [shape: f32[1,128], index: 8, kind: input, shape index: {}]
  %s9 = inlined_call_operand.hbm [shape: f32[8,128], index: 9, kind: output, shape index: {}]
  %s10 = sld [smem:[#allocation0]]
  $region70: #{mlp_forward.1} parent=0
    _
  %s12 = ssub.s32 1, %s10
  %s13 = scalar_select 0, %s12, %s10
  $region1: #{mlp_forward.1} parent=0
    #allocation2 [shape = 'u8[28672]{0}', space=vmem, size = 0x7000, scoped, tag = 'input window, operand 0, single buffered']
    #allocation3 [shape = 's32[1]{0}', space=sflag, size = 0x4, scoped, tag = 'scoped memory for mlp_forward.1']
    #allocation4 [shape = 's32[1]{0}', space=sflag, size = 0x4, scoped, tag = 'scoped memory for mlp_forward.1']
    #allocation5 [shape = 'u8[802816]{0}', space=vmem, size = 0xc4000, scoped, tag = 'input window, operand 1, single buffered']
    #allocation6 [shape = 's32[1]{0}', space=sflag, size = 0x4, scoped, tag = 'scoped memory for mlp_forward.1']
    #allocation7 [shape = 'u8[2048]{0}', space=vmem, size = 0x800, scoped, tag = 'input window, operand 2, single buffered']
    #allocation8 [shape = 'u8[524288]{0}', space=vmem, size = 0x80000, scoped, tag = 'input window, operand 3, single buffered']
    #allocation9 [shape = 's32[1]{0}', space=sflag, size = 0x4, scoped, tag = 'scoped memory for mlp_forward.1']
    #allocation10 [shape = 'u8[524288]{0}', space=vmem, size = 0x80000, scoped, tag = 'input window, operand 5, single buffered']
    #allocation11 [shape = 'u8[131072]{0}', space=vmem, size = 0x20000, scoped, tag = 'input window, operand 7, single buffered']
    #allocation12 [shape = 's32[1]{0}', space=sflag, size = 0x4, scoped, tag = 'scoped memory for mlp_forward.1']
    #allocation13 [shape = 'u8[4096]{0}', space=vmem, size = 0x1000, scoped, tag = 'output window, operand 0, single buffered']
    %14 = vsyncpa [#allocation3], 0
    %15 = vsyncpa [#allocation6], 0
    %16 = vsyncpa [#allocation9], 0
    %17 = vsyncpa [#allocation12], 0
    %18 = vsyncpa [#allocation4], 0
    // Predicated region
    $region2: #{mlp_forward.1} parent=1 // pred_check
      _
    $region3: #{mlp_forward.1} parent=1 // pred_check_branch
      %20 = sbr.rel (0) target = $region5
    $region4: #{mlp_forward.1} parent=1 // pred_region
      %s22 = ssub.s32 896, 896
      %23 = vsyncadd [#allocation3], %s22
      %s25 = sshll.u32 [#allocation2], 4
      %s26 = int_to_ptr.vmem [resolvable:$true] %s25
      %28 = dma.hbm_to_vmem [thread:$0]  %s0, 896, %s26, [#allocation3]
    $region5: #{mlp_forward.1} parent=1 // pred_fallthru
      _
    // Predicated region
    $region6: #{mlp_forward.1} parent=1 // pred_check
      _
    $region7: #{mlp_forward.1} parent=1 // pred_check_branch
      %30 = sbr.rel (0) target = $region9
    $region8: #{mlp_forward.1} parent=1 // pred_region
      %s32 = ssub.s32 25088, 25088
      %33 = vsyncadd [#allocation6], %s32
      %s34 = sshll.u32 [#allocation5], 4
      %s35 = int_to_ptr.vmem [resolvable:$true] %s34
      %40 = dma.hbm_to_vmem [thread:$0]  %s1, 25088, %s35, [#allocation6], 256, 256, 16
    $region9: #{mlp_forward.1} parent=1 // pred_fallthru
      _
    // Predicated region
    $region10: #{mlp_forward.1} parent=1 // pred_check
      _
    $region11: #{mlp_forward.1} parent=1 // pred_check_branch
      %42 = sbr.rel (0) target = $region13
    $region12: #{mlp_forward.1} parent=1 // pred_region
      %s44 = ssub.s32 64, 64
      %45 = vsyncadd [#allocation6], %s44
      %s47 = sshll.u32 [#allocation7], 4
      %s48 = int_to_ptr.vmem [resolvable:$true] %s47
      %50 = dma.hbm_to_vmem [thread:$0]  %s2, 64, %s48, [#allocation6]
    $region13: #{mlp_forward.1} parent=1 // pred_fallthru
      _
    // Predicated region
    $region14: #{mlp_forward.1} parent=1 // pred_check
      _
    $region15: #{mlp_forward.1} parent=1 // pred_check_branch
      %52 = sbr.rel (0) target = $region17
    $region16: #{mlp_forward.1} parent=1 // pred_region
      %s54 = ssub.s32 16384, 16384
      %55 = vsyncadd [#allocation9], %s54
      %s56 = sshll.u32 [#allocation8], 4
      %s57 = int_to_ptr.vmem [resolvable:$true] %s56
      %62 = dma.hbm_to_vmem [thread:$0]  %s3, 16384, %s57, [#allocation9], 256, 256, 16
    $region17: #{mlp_forward.1} parent=1 // pred_fallthru
      _
    // Predicated region
    $region18: #{mlp_forward.1} parent=1 // pred_check
      _
    $region19: #{mlp_forward.1} parent=1 // pred_check_branch
      %64 = sbr.rel (0) target = $region21
    $region20: #{mlp_forward.1} parent=1 // pred_region
      _
    $region21: #{mlp_forward.1} parent=1 // pred_fallthru
      _
    // Predicated region
    $region22: #{mlp_forward.1} parent=1 // pred_check
      _
    $region23: #{mlp_forward.1} parent=1 // pred_check_branch
      %66 = sbr.rel (0) target = $region25
    $region24: #{mlp_forward.1} parent=1 // pred_region
      %s68 = ssub.s32 16384, 16384
      %69 = vsyncadd [#allocation9], %s68
      %s70 = sshll.u32 [#allocation10], 4
      %s71 = int_to_ptr.vmem [resolvable:$true] %s70
      %76 = dma.hbm_to_vmem [thread:$0]  %s5, 16384, %s71, [#allocation9], 256, 256, 16
    $region25: #{mlp_forward.1} parent=1 // pred_fallthru
      _
    // Predicated region
    $region26: #{mlp_forward.1} parent=1 // pred_check
      _
    $region27: #{mlp_forward.1} parent=1 // pred_check_branch
      %78 = sbr.rel (0) target = $region29
    $region28: #{mlp_forward.1} parent=1 // pred_region
      _
    $region29: #{mlp_forward.1} parent=1 // pred_fallthru
      _
    // Predicated region
    $region30: #{mlp_forward.1} parent=1 // pred_check
      _
    $region31: #{mlp_forward.1} parent=1 // pred_check_branch
      %80 = sbr.rel (0) target = $region33
    $region32: #{mlp_forward.1} parent=1 // pred_region
      %s82 = ssub.s32 4096, 4096
      %83 = vsyncadd [#allocation12], %s82
      %s84 = sshll.u32 [#allocation11], 4
      %s85 = int_to_ptr.vmem [resolvable:$true] %s84
      %90 = dma.hbm_to_vmem [thread:$0]  %s7, 4096, %s85, [#allocation12], 64, 64, 4
    $region33: #{mlp_forward.1} parent=1 // pred_fallthru
      _
    // Predicated region
    $region34: #{mlp_forward.1} parent=1 // pred_check
      _
    $region35: #{mlp_forward.1} parent=1 // pred_check_branch
      %92 = sbr.rel (0) target = $region37
    $region36: #{mlp_forward.1} parent=1 // pred_region
      _
    $region37: #{mlp_forward.1} parent=1 // pred_fallthru
      _
    // Predicated region
    $region38: #{mlp_forward.1} parent=1 // pred_check
      _
    $region39: #{mlp_forward.1} parent=1 // pred_check_branch
      %94 = sbr.rel (0) target = $region41
    $region40: #{mlp_forward.1} parent=1 // pred_region
      %95 = dma.done [#allocation3], 896
    $region41: #{mlp_forward.1} parent=1 // pred_fallthru
      _
    // Predicated region
    $region42: #{mlp_forward.1} parent=1 // pred_check
      _
    $region43: #{mlp_forward.1} parent=1 // pred_check_branch
      %97 = sbr.rel (0) target = $region45
    $region44: #{mlp_forward.1} parent=1 // pred_region
      %98 = dma.done [#allocation6], 25088
    $region45: #{mlp_forward.1} parent=1 // pred_fallthru
      _
    // Predicated region
    $region46: #{mlp_forward.1} parent=1 // pred_check
      _
    $region47: #{mlp_forward.1} parent=1 // pred_check_branch
      %100 = sbr.rel (0) target = $region49
    $region48: #{mlp_forward.1} parent=1 // pred_region
      %101 = dma.done [#allocation6], 64
    $region49: #{mlp_forward.1} parent=1 // pred_fallthru
      _
    // Predicated region
    $region50: #{mlp_forward.1} parent=1 // pred_check
      _
    $region51: #{mlp_forward.1} parent=1 // pred_check_branch
      %103 = sbr.rel (0) target = $region53
    $region52: #{mlp_forward.1} parent=1 // pred_region
      %104 = dma.done [#allocation9], 16384
    $region53: #{mlp_forward.1} parent=1 // pred_fallthru
      _
    // Predicated region
    $region54: #{mlp_forward.1} parent=1 // pred_check
      _
    $region55: #{mlp_forward.1} parent=1 // pred_check_branch
      %106 = sbr.rel (0) target = $region57
    $region56: #{mlp_forward.1} parent=1 // pred_region
      %107 = dma.done [#allocation9], 16384
    $region57: #{mlp_forward.1} parent=1 // pred_fallthru
      _
    // Predicated region
    $region58: #{mlp_forward.1} parent=1 // pred_check
      _
    $region59: #{mlp_forward.1} parent=1 // pred_check_branch
      %109 = sbr.rel (0) target = $region61
    $region60: #{mlp_forward.1} parent=1 // pred_region
      %110 = dma.done [#allocation12], 4096
    $region61: #{mlp_forward.1} parent=1 // pred_fallthru
      _
    %v112 = vld [vmem:[#allocation2] sm:$0xff]
    %v113 = vld [vmem:[#allocation2 + $0x8] sm:$0xff]
    %v114 = vld [vmem:[#allocation2 + $0x10] sm:$0xff]
    %v115 = vld [vmem:[#allocation2 + $0x18] sm:$0xff]
    %v116 = vld [vmem:[#allocation2 + $0x20] sm:$0xff]
    %v117 = vld [vmem:[#allocation2 + $0x28] sm:$0xff]
    %v118 = vld [vmem:[#allocation2 + $0x30] sm:$0xff]
    %v119 = vpack.c.bf16 %v112, %v112
    %v120 = vpack.c.bf16 %v113, %v113
    %v121 = vpack.c.bf16 %v114, %v114
    %v122 = vpack.c.bf16 %v115, %v115
    %v123 = vpack.c.bf16 %v116, %v116
    %v124 = vpack.c.bf16 %v117, %v117
    %v125 = vpack.c.bf16 %v118, %v118
    %v126 = vld [vmem:[#allocation5] sm:$0xff]
    %v127 = vld [vmem:[#allocation5 + $0x8] sm:$0xff]
    %v128 = vld [vmem:[#allocation5 + $0x10] sm:$0xff]
    %v129 = vld [vmem:[#allocation5 + $0x18] sm:$0xff]
    %v130 = vld [vmem:[#allocation5 + $0x20] sm:$0xff]
    %v131 = vld [vmem:[#allocation5 + $0x28] sm:$0xff]
    %v132 = vld [vmem:[#allocation5 + $0x30] sm:$0xff]
    %v133 = vld [vmem:[#allocation5 + $0x38] sm:$0xff]
    %v134 = vld [vmem:[#allocation5 + $0x40] sm:$0xff]
    %v135 = vld [vmem:[#allocation5 + $0x48] sm:$0xff]
    %v136 = vld [vmem:[#allocation5 + $0x50] sm:$0xff]
    %v137 = vld [vmem:[#allocation5 + $0x58] sm:$0xff]
    %v138 = vld [vmem:[#allocation5 + $0x60] sm:$0xff]
    %v139 = vld [vmem:[#allocation5 + $0x68] sm:$0xff]
    %v140 = vld [vmem:[#allocation5 + $0x70] sm:$0xff]
    %v141 = vld [vmem:[#allocation5 + $0x78] sm:$0xff]
    %v142 = vld [vmem:[#allocation5 + $0x80] sm:$0xff]
    %v143 = vld [vmem:[#allocation5 + $0x88] sm:$0xff]
    %v144 = vld [vmem:[#allocation5 + $0x90] sm:$0xff]
    %v145 = vld [vmem:[#allocation5 + $0x98] sm:$0xff]
    %v146 = vld [vmem:[#allocation5 + $0xa0] sm:$0xff]
    %v147 = vld [vmem:[#allocation5 + $0xa8] sm:$0xff]
    %v148 = vld [vmem:[#allocation5 + $0xb0] sm:$0xff]
    %v149 = vld [vmem:[#allocation5 + $0xb8] sm:$0xff]
    %v150 = vld [vmem:[#allocation5 + $0xc0] sm:$0xff]
    %v151 = vld [vmem:[#allocation5 + $0xc8] sm:$0xff]
    %v152 = vld [vmem:[#allocation5 + $0xd0] sm:$0xff]
    %v153 = vld [vmem:[#allocation5 + $0xd8] sm:$0xff]
    %v154 = vld [vmem:[#allocation5 + $0xe0] sm:$0xff]
    %v155 = vld [vmem:[#allocation5 + $0xe8] sm:$0xff]
    %v156 = vld [vmem:[#allocation5 + $0xf0] sm:$0xff]
    %v157 = vld [vmem:[#allocation5 + $0xf8] sm:$0xff]
    %v158 = vld [vmem:[#allocation5 + $0x100] sm:$0xff]
    %v159 = vld [vmem:[#allocation5 + $0x108] sm:$0xff]
    %v160 = vld [vmem:[#allocation5 + $0x110] sm:$0xff]
    %v161 = vld [vmem:[#allocation5 + $0x118] sm:$0xff]
    %v162 = vld [vmem:[#allocation5 + $0x120] sm:$0xff]
    %v163 = vld [vmem:[#allocation5 + $0x128] sm:$0xff]
    %v164 = vld [vmem:[#allocation5 + $0x130] sm:$0xff]
    %v165 = vld [vmem:[#allocation5 + $0x138] sm:$0xff]
    %v166 = vld [vmem:[#allocation5 + $0x140] sm:$0xff]
    %v167 = vld [vmem:[#allocation5 + $0x148] sm:$0xff]
    %v168 = vld [vmem:[#allocation5 + $0x150] sm:$0xff]
    %v169 = vld [vmem:[#allocation5 + $0x158] sm:$0xff]
    %v170 = vld [vmem:[#allocation5 + $0x160] sm:$0xff]
    %v171 = vld [vmem:[#allocation5 + $0x168] sm:$0xff]
    %v172 = vld [vmem:[#allocation5 + $0x170] sm:$0xff]
    %v173 = vld [vmem:[#allocation5 + $0x178] sm:$0xff]
    %v174 = vld [vmem:[#allocation5 + $0x180] sm:$0xff]
    %v175 = vld [vmem:[#allocation5 + $0x188] sm:$0xff]
    %v176 = vld [vmem:[#allocation5 + $0x190] sm:$0xff]
    %v177 = vld [vmem:[#allocation5 + $0x198] sm:$0xff]
    %v178 = vld [vmem:[#allocation5 + $0x1a0] sm:$0xff]
    %v179 = vld [vmem:[#allocation5 + $0x1a8] sm:$0xff]
    %v180 = vld [vmem:[#allocation5 + $0x1b0] sm:$0xff]
    %v181 = vld [vmem:[#allocation5 + $0x1b8] sm:$0xff]
    %v182 = vld [vmem:[#allocation5 + $0x1c0] sm:$0xff]
    %v183 = vld [vmem:[#allocation5 + $0x1c8] sm:$0xff]
    %v184 = vld [vmem:[#allocation5 + $0x1d0] sm:$0xff]
    %v185 = vld [vmem:[#allocation5 + $0x1d8] sm:$0xff]
    %v186 = vld [vmem:[#allocation5 + $0x1e0] sm:$0xff]
    %v187 = vld [vmem:[#allocation5 + $0x1e8] sm:$0xff]
    %v188 = vld [vmem:[#allocation5 + $0x1f0] sm:$0xff]
    %v189 = vld [vmem:[#allocation5 + $0x1f8] sm:$0xff]
    %v190 = vld [vmem:[#allocation5 + $0x200] sm:$0xff]
    %v191 = vld [vmem:[#allocation5 + $0x208] sm:$0xff]
    %v192 = vld [vmem:[#allocation5 + $0x210] sm:$0xff]
    %v193 = vld [vmem:[#allocation5 + $0x218] sm:$0xff]
    %v194 = vld [vmem:[#allocation5 + $0x220] sm:$0xff]
    %v195 = vld [vmem:[#allocation5 + $0x228] sm:$0xff]
    %v196 = vld [vmem:[#allocation5 + $0x230] sm:$0xff]
    %v197 = vld [vmem:[#allocation5 + $0x238] sm:$0xff]
    %v198 = vld [vmem:[#allocation5 + $0x240] sm:$0xff]
    %v199 = vld [vmem:[#allocation5 + $0x248] sm:$0xff]
    %v200 = vld [vmem:[#allocation5 + $0x250] sm:$0xff]
    %v201 = vld [vmem:[#allocation5 + $0x258] sm:$0xff]
    %v202 = vld [vmem:[#allocation5 + $0x260] sm:$0xff]
    %v203 = vld [vmem:[#allocation5 + $0x268] sm:$0xff]
    %v204 = vld [vmem:[#allocation5 + $0x270] sm:$0xff]
    %v205 = vld [vmem:[#allocation5 + $0x278] sm:$0xff]
    %v206 = vld [vmem:[#allocation5 + $0x280] sm:$0xff]
    %v207 = vld [vmem:[#allocation5 + $0x288] sm:$0xff]
    %v208 = vld [vmem:[#allocation5 + $0x290] sm:$0xff]
    %v209 = vld [vmem:[#allocation5 + $0x298] sm:$0xff]
    %v210 = vld [vmem:[#allocation5 + $0x2a0] sm:$0xff]
    %v211 = vld [vmem:[#allocation5 + $0x2a8] sm:$0xff]
    %v212 = vld [vmem:[#allocation5 + $0x2b0] sm:$0xff]
    %v213 = vld [vmem:[#allocation5 + $0x2b8] sm:$0xff]
    %v214 = vld [vmem:[#allocation5 + $0x2c0] sm:$0xff]
    %v215 = vld [vmem:[#allocation5 + $0x2c8] sm:$0xff]
    %v216 = vld [vmem:[#allocation5 + $0x2d0] sm:$0xff]
    %v217 = vld [vmem:[#allocation5 + $0x2d8] sm:$0xff]
    %v218 = vld [vmem:[#allocation5 + $0x2e0] sm:$0xff]
    %v219 = vld [vmem:[#allocation5 + $0x2e8] sm:$0xff]
    %v220 = vld [vmem:[#allocation5 + $0x2f0] sm:$0xff]
    %v221 = vld [vmem:[#allocation5 + $0x2f8] sm:$0xff]
    %v222 = vld [vmem:[#allocation5 + $0x300] sm:$0xff]
    %v223 = vld [vmem:[#allocation5 + $0x308] sm:$0xff]
    %v224 = vld [vmem:[#allocation5 + $0x310] sm:$0xff]
    %v225 = vld [vmem:[#allocation5 + $0x318] sm:$0xff]
    %v226 = vld [vmem:[#allocation5 + $0x320] sm:$0xff]
    %v227 = vld [vmem:[#allocation5 + $0x328] sm:$0xff]
    %v228 = vld [vmem:[#allocation5 + $0x330] sm:$0xff]
    %v229 = vld [vmem:[#allocation5 + $0x338] sm:$0xff]
    %v230 = vld [vmem:[#allocation5 + $0x340] sm:$0xff]
    %v231 = vld [vmem:[#allocation5 + $0x348] sm:$0xff]
    %v232 = vld [vmem:[#allocation5 + $0x350] sm:$0xff]
    %v233 = vld [vmem:[#allocation5 + $0x358] sm:$0xff]
    %v234 = vld [vmem:[#allocation5 + $0x360] sm:$0xff]
    %v235 = vld [vmem:[#allocation5 + $0x368] sm:$0xff]
    %v236 = vld [vmem:[#allocation5 + $0x370] sm:$0xff]
    %v237 = vld [vmem:[#allocation5 + $0x378] sm:$0xff]
    %v238 = vld [vmem:[#allocation5 + $0x380] sm:$0xff]
    %v239 = vld [vmem:[#allocation5 + $0x388] sm:$0xff]
    %v240 = vld [vmem:[#allocation5 + $0x390] sm:$0xff]
    %v241 = vld [vmem:[#allocation5 + $0x398] sm:$0xff]
    %v242 = vld [vmem:[#allocation5 + $0x3a0] sm:$0xff]
    %v243 = vld [vmem:[#allocation5 + $0x3a8] sm:$0xff]
    %v244 = vld [vmem:[#allocation5 + $0x3b0] sm:$0xff]
    %v245 = vld [vmem:[#allocation5 + $0x3b8] sm:$0xff]
    %v246 = vld [vmem:[#allocation5 + $0x3c0] sm:$0xff]
    %v247 = vld [vmem:[#allocation5 + $0x3c8] sm:$0xff]
    %v248 = vld [vmem:[#allocation5 + $0x3d0] sm:$0xff]
    %v249 = vld [vmem:[#allocation5 + $0x3d8] sm:$0xff]
    %v250 = vld [vmem:[#allocation5 + $0x3e0] sm:$0xff]
    %v251 = vld [vmem:[#allocation5 + $0x3e8] sm:$0xff]
    %v252 = vld [vmem:[#allocation5 + $0x3f0] sm:$0xff]
    %v253 = vld [vmem:[#allocation5 + $0x3f8] sm:$0xff]
    %v254 = vld [vmem:[#allocation5 + $0x400] sm:$0xff]
    %v255 = vld [vmem:[#allocation5 + $0x408] sm:$0xff]
    %v256 = vld [vmem:[#allocation5 + $0x410] sm:$0xff]
    %v257 = vld [vmem:[#allocation5 + $0x418] sm:$0xff]
    %v258 = vld [vmem:[#allocation5 + $0x420] sm:$0xff]
    %v259 = vld [vmem:[#allocation5 + $0x428] sm:$0xff]
    %v260 = vld [vmem:[#allocation5 + $0x430] sm:$0xff]
    %v261 = vld [vmem:[#allocation5 + $0x438] sm:$0xff]
    %v262 = vld [vmem:[#allocation5 + $0x440] sm:$0xff]
    %v263 = vld [vmem:[#allocation5 + $0x448] sm:$0xff]
    %v264 = vld [vmem:[#allocation5 + $0x450] sm:$0xff]
    %v265 = vld [vmem:[#allocation5 + $0x458] sm:$0xff]
    %v266 = vld [vmem:[#allocation5 + $0x460] sm:$0xff]
    %v267 = vld [vmem:[#allocation5 + $0x468] sm:$0xff]
    %v268 = vld [vmem:[#allocation5 + $0x470] sm:$0xff]
    %v269 = vld [vmem:[#allocation5 + $0x478] sm:$0xff]
    %v270 = vld [vmem:[#allocation5 + $0x480] sm:$0xff]
    %v271 = vld [vmem:[#allocation5 + $0x488] sm:$0xff]
    %v272 = vld [vmem:[#allocation5 + $0x490] sm:$0xff]
    %v273 = vld [vmem:[#allocation5 + $0x498] sm:$0xff]
    %v274 = vld [vmem:[#allocation5 + $0x4a0] sm:$0xff]
    %v275 = vld [vmem:[#allocation5 + $0x4a8] sm:$0xff]
    %v276 = vld [vmem:[#allocation5 + $0x4b0] sm:$0xff]
    %v277 = vld [vmem:[#allocation5 + $0x4b8] sm:$0xff]
    %v278 = vld [vmem:[#allocation5 + $0x4c0] sm:$0xff]
    %v279 = vld [vmem:[#allocation5 + $0x4c8] sm:$0xff]
    %v280 = vld [vmem:[#allocation5 + $0x4d0] sm:$0xff]
    %v281 = vld [vmem:[#allocation5 + $0x4d8] sm:$0xff]
    %v282 = vld [vmem:[#allocation5 + $0x4e0] sm:$0xff]
    %v283 = vld [vmem:[#allocation5 + $0x4e8] sm:$0xff]
    %v284 = vld [vmem:[#allocation5 + $0x4f0] sm:$0xff]
    %v285 = vld [vmem:[#allocation5 + $0x4f8] sm:$0xff]
    %v286 = vld [vmem:[#allocation5 + $0x500] sm:$0xff]
    %v287 = vld [vmem:[#allocation5 + $0x508] sm:$0xff]
    %v288 = vld [vmem:[#allocation5 + $0x510] sm:$0xff]
    %v289 = vld [vmem:[#allocation5 + $0x518] sm:$0xff]
    %v290 = vld [vmem:[#allocation5 + $0x520] sm:$0xff]
    %v291 = vld [vmem:[#allocation5 + $0x528] sm:$0xff]
    %v292 = vld [vmem:[#allocation5 + $0x530] sm:$0xff]
    %v293 = vld [vmem:[#allocation5 + $0x538] sm:$0xff]
    %v294 = vld [vmem:[#allocation5 + $0x540] sm:$0xff]
    %v295 = vld [vmem:[#allocation5 + $0x548] sm:$0xff]
    %v296 = vld [vmem:[#allocation5 + $0x550] sm:$0xff]
    %v297 = vld [vmem:[#allocation5 + $0x558] sm:$0xff]
    %v298 = vld [vmem:[#allocation5 + $0x560] sm:$0xff]
    %v299 = vld [vmem:[#allocation5 + $0x568] sm:$0xff]
    %v300 = vld [vmem:[#allocation5 + $0x570] sm:$0xff]
    %v301 = vld [vmem:[#allocation5 + $0x578] sm:$0xff]
    %v302 = vld [vmem:[#allocation5 + $0x580] sm:$0xff]
    %v303 = vld [vmem:[#allocation5 + $0x588] sm:$0xff]
    %v304 = vld [vmem:[#allocation5 + $0x590] sm:$0xff]
    %v305 = vld [vmem:[#allocation5 + $0x598] sm:$0xff]
    %v306 = vld [vmem:[#allocation5 + $0x5a0] sm:$0xff]
    %v307 = vld [vmem:[#allocation5 + $0x5a8] sm:$0xff]
    %v308 = vld [vmem:[#allocation5 + $0x5b0] sm:$0xff]
    %v309 = vld [vmem:[#allocation5 + $0x5b8] sm:$0xff]
    %v310 = vld [vmem:[#allocation5 + $0x5c0] sm:$0xff]
    %v311 = vld [vmem:[#allocation5 + $0x5c8] sm:$0xff]
    %v312 = vld [vmem:[#allocation5 + $0x5d0] sm:$0xff]
    %v313 = vld [vmem:[#allocation5 + $0x5d8] sm:$0xff]
    %v314 = vld [vmem:[#allocation5 + $0x5e0] sm:$0xff]
    %v315 = vld [vmem:[#allocation5 + $0x5e8] sm:$0xff]
    %v316 = vld [vmem:[#allocation5 + $0x5f0] sm:$0xff]
    %v317 = vld [vmem:[#allocation5 + $0x5f8] sm:$0xff]
    %v318 = vld [vmem:[#allocation5 + $0x600] sm:$0xff]
    %v319 = vld [vmem:[#allocation5 + $0x608] sm:$0xff]
    %v320 = vld [vmem:[#allocation5 + $0x610] sm:$0xff]
    %v321 = vld [vmem:[#allocation5 + $0x618] sm:$0xff]
    %v322 = vld [vmem:[#allocation7] sm:$0xf]
    %v324 = vlaneseq
    %v325 = vshrl.u32 %v324, 7
    %v326 = vsub.s32 0, %v325
    %v327 = vrot.slane %v322, %v326
    %v328 = vlaneseq
    %v329 = vshrl.u32 %v328, 7
    %v330 = vsub.s32 1, %v329
    %v331 = vrot.slane %v322, %v330
    %v332 = vlaneseq
    %v333 = vshrl.u32 %v332, 7
    %v334 = vsub.s32 2, %v333
    %v335 = vrot.slane %v322, %v334
    %v336 = vlaneseq
    %v337 = vshrl.u32 %v336, 7
    %v338 = vsub.s32 3, %v337
    %v339 = vrot.slane %v322, %v338
    %v540 = vunpack.c.l.b16 %v126
    %v541 = vunpack.c.h.b16 %v126
    %v542 = vunpack.c.l.b16 %v127
    %v543 = vunpack.c.h.b16 %v127
    %v544 = vunpack.c.l.b16 %v128
    %v545 = vunpack.c.h.b16 %v128
    %v546 = vunpack.c.l.b16 %v129
    %v547 = vunpack.c.h.b16 %v129
    %v548 = vunpack.c.l.b16 %v130
    %v549 = vunpack.c.h.b16 %v130
    %v550 = vunpack.c.l.b16 %v131
    %v551 = vunpack.c.h.b16 %v131
    %v552 = vunpack.c.l.b16 %v132
    %v553 = vunpack.c.h.b16 %v132
    %v554 = vunpack.c.l.b16 %v133
    %v555 = vunpack.c.h.b16 %v133
    %v556 = vunpack.c.l.b16 %v134
    %v557 = vunpack.c.h.b16 %v134
    %v558 = vunpack.c.l.b16 %v135
    %v559 = vunpack.c.h.b16 %v135
    %v560 = vunpack.c.l.b16 %v136
    %v561 = vunpack.c.h.b16 %v136
    %v562 = vunpack.c.l.b16 %v137
    %v563 = vunpack.c.h.b16 %v137
    %v564 = vunpack.c.l.b16 %v138
    %v565 = vunpack.c.h.b16 %v138
    %v566 = vunpack.c.l.b16 %v139
    %v567 = vunpack.c.h.b16 %v139
    %v568 = vunpack.c.l.b16 %v140
    %v569 = vunpack.c.h.b16 %v140
    %v570 = vunpack.c.l.b16 %v141
    %v571 = vunpack.c.h.b16 %v141
    %v572 = vunpack.c.l.b16 %v142
    %v573 = vunpack.c.h.b16 %v142
    %v574 = vunpack.c.l.b16 %v143
    %v575 = vunpack.c.h.b16 %v143
    %v576 = vunpack.c.l.b16 %v144
    %v577 = vunpack.c.h.b16 %v144
    %v578 = vunpack.c.l.b16 %v145
    %v579 = vunpack.c.h.b16 %v145
    %v580 = vunpack.c.l.b16 %v146
    %v581 = vunpack.c.h.b16 %v146
    %v582 = vunpack.c.l.b16 %v147
    %v583 = vunpack.c.h.b16 %v147
    %v584 = vunpack.c.l.b16 %v148
    %v585 = vunpack.c.h.b16 %v148
    %v586 = vunpack.c.l.b16 %v149
    %v587 = vunpack.c.h.b16 %v149
    %v588 = vunpack.c.l.b16 %v150
    %v589 = vunpack.c.h.b16 %v150
    %v590 = vunpack.c.l.b16 %v151
    %v591 = vunpack.c.h.b16 %v151
    %v592 = vunpack.c.l.b16 %v152
    %v593 = vunpack.c.h.b16 %v152
    %v594 = vunpack.c.l.b16 %v153
    %v595 = vunpack.c.h.b16 %v153
    %v596 = vunpack.c.l.b16 %v154
    %v597 = vunpack.c.h.b16 %v154
    %v598 = vunpack.c.l.b16 %v155
    %v599 = vunpack.c.h.b16 %v155
    %v600 = vunpack.c.l.b16 %v156
    %v601 = vunpack.c.h.b16 %v156
    %v602 = vunpack.c.l.b16 %v157
    %v603 = vunpack.c.h.b16 %v157
    %v604 = vunpack.c.l.b16 %v158
    %v605 = vunpack.c.h.b16 %v158
    %v606 = vunpack.c.l.b16 %v159
    %v607 = vunpack.c.h.b16 %v159
    %v608 = vunpack.c.l.b16 %v160
    %v609 = vunpack.c.h.b16 %v160
    %v610 = vunpack.c.l.b16 %v161
    %v611 = vunpack.c.h.b16 %v161
    %v612 = vunpack.c.l.b16 %v162
    %v613 = vunpack.c.h.b16 %v162
    %v614 = vunpack.c.l.b16 %v163
    %v615 = vunpack.c.h.b16 %v163
    %v616 = vunpack.c.l.b16 %v164
    %v617 = vunpack.c.h.b16 %v164
    %v618 = vunpack.c.l.b16 %v165
    %v619 = vunpack.c.h.b16 %v165
    %v620 = vunpack.c.l.b16 %v166
    %v621 = vunpack.c.h.b16 %v166
    %v622 = vunpack.c.l.b16 %v167
    %v623 = vunpack.c.h.b16 %v167
    %v624 = vunpack.c.l.b16 %v168
    %v625 = vunpack.c.h.b16 %v168
    %v626 = vunpack.c.l.b16 %v169
    %v627 = vunpack.c.h.b16 %v169
    %v628 = vunpack.c.l.b16 %v170
    %v629 = vunpack.c.h.b16 %v170
    %v630 = vunpack.c.l.b16 %v171
    %v631 = vunpack.c.h.b16 %v171
    %v632 = vunpack.c.l.b16 %v172
    %v633 = vunpack.c.h.b16 %v172
    %v634 = vunpack.c.l.b16 %v173
    %v635 = vunpack.c.h.b16 %v173
    %v636 = vunpack.c.l.b16 %v174
    %v637 = vunpack.c.h.b16 %v174
    %v638 = vunpack.c.l.b16 %v175
    %v639 = vunpack.c.h.b16 %v175
    %v640 = vunpack.c.l.b16 %v176
    %v641 = vunpack.c.h.b16 %v176
    %v642 = vunpack.c.l.b16 %v177
    %v643 = vunpack.c.h.b16 %v177
    %v644 = vunpack.c.l.b16 %v178
    %v645 = vunpack.c.h.b16 %v178
    %v646 = vunpack.c.l.b16 %v179
    %v647 = vunpack.c.h.b16 %v179
    %v648 = vunpack.c.l.b16 %v180
    %v649 = vunpack.c.h.b16 %v180
    %v650 = vunpack.c.l.b16 %v181
    %v651 = vunpack.c.h.b16 %v181
    %v652 = vunpack.c.l.b16 %v182
    %v653 = vunpack.c.h.b16 %v182
    %v654 = vunpack.c.l.b16 %v183
    %v655 = vunpack.c.h.b16 %v183
    %v656 = vunpack.c.l.b16 %v184
    %v657 = vunpack.c.h.b16 %v184
    %v658 = vunpack.c.l.b16 %v185
    %v659 = vunpack.c.h.b16 %v185
    %v660 = vunpack.c.l.b16 %v186
    %v661 = vunpack.c.h.b16 %v186
    %v662 = vunpack.c.l.b16 %v187
    %v663 = vunpack.c.h.b16 %v187
    %v664 = vunpack.c.l.b16 %v188
    %v665 = vunpack.c.h.b16 %v188
    %v666 = vunpack.c.l.b16 %v189
    %v667 = vunpack.c.h.b16 %v189
    %v668 = vunpack.c.l.b16 %v190
    %v669 = vunpack.c.h.b16 %v190
    %v670 = vunpack.c.l.b16 %v191
    %v671 = vunpack.c.h.b16 %v191
    %v672 = vunpack.c.l.b16 %v192
    %v673 = vunpack.c.h.b16 %v192
    %v674 = vunpack.c.l.b16 %v193
    %v675 = vunpack.c.h.b16 %v193
    %v676 = vunpack.c.l.b16 %v194
    %v677 = vunpack.c.h.b16 %v194
    %v678 = vunpack.c.l.b16 %v195
    %v679 = vunpack.c.h.b16 %v195
    %v680 = vunpack.c.l.b16 %v196
    %v681 = vunpack.c.h.b16 %v196
    %v682 = vunpack.c.l.b16 %v197
    %v683 = vunpack.c.h.b16 %v197
    %v684 = vunpack.c.l.b16 %v198
    %v685 = vunpack.c.h.b16 %v198
    %v686 = vunpack.c.l.b16 %v199
    %v687 = vunpack.c.h.b16 %v199
    %v688 = vunpack.c.l.b16 %v200
    %v689 = vunpack.c.h.b16 %v200
    %v690 = vunpack.c.l.b16 %v201
    %v691 = vunpack.c.h.b16 %v201
    %v692 = vunpack.c.l.b16 %v202
    %v693 = vunpack.c.h.b16 %v202
    %v694 = vunpack.c.l.b16 %v203
    %v695 = vunpack.c.h.b16 %v203
    %v696 = vunpack.c.l.b16 %v204
    %v697 = vunpack.c.h.b16 %v204
    %v698 = vunpack.c.l.b16 %v205
    %v699 = vunpack.c.h.b16 %v205
    %v700 = vunpack.c.l.b16 %v206
    %v701 = vunpack.c.h.b16 %v206
    %v702 = vunpack.c.l.b16 %v207
    %v703 = vunpack.c.h.b16 %v207
    %v704 = vunpack.c.l.b16 %v208
    %v705 = vunpack.c.h.b16 %v208
    %v706 = vunpack.c.l.b16 %v209
    %v707 = vunpack.c.h.b16 %v209
    %v708 = vunpack.c.l.b16 %v210
    %v709 = vunpack.c.h.b16 %v210
    %v710 = vunpack.c.l.b16 %v211
    %v711 = vunpack.c.h.b16 %v211
    %v712 = vunpack.c.l.b16 %v212
    %v713 = vunpack.c.h.b16 %v212
    %v714 = vunpack.c.l.b16 %v213
    %v715 = vunpack.c.h.b16 %v213
    %v716 = vunpack.c.l.b16 %v214
    %v717 = vunpack.c.h.b16 %v214
    %v718 = vunpack.c.l.b16 %v215
    %v719 = vunpack.c.h.b16 %v215
    %v720 = vunpack.c.l.b16 %v216
    %v721 = vunpack.c.h.b16 %v216
    %v722 = vunpack.c.l.b16 %v217
    %v723 = vunpack.c.h.b16 %v217
    %v724 = vunpack.c.l.b16 %v218
    %v725 = vunpack.c.h.b16 %v218
    %v726 = vunpack.c.l.b16 %v219
    %v727 = vunpack.c.h.b16 %v219
    %v728 = vunpack.c.l.b16 %v220
    %v729 = vunpack.c.h.b16 %v220
    %v730 = vunpack.c.l.b16 %v221
    %v731 = vunpack.c.h.b16 %v221
    %v732 = vunpack.c.l.b16 %v222
    %v733 = vunpack.c.h.b16 %v222
    %v734 = vunpack.c.l.b16 %v223
    %v735 = vunpack.c.h.b16 %v223
    %v736 = vunpack.c.l.b16 %v224
    %v737 = vunpack.c.h.b16 %v224
    %v738 = vunpack.c.l.b16 %v225
    %v739 = vunpack.c.h.b16 %v225
    %v740 = vunpack.c.l.b16 %v226
    %v741 = vunpack.c.h.b16 %v226
    %v742 = vunpack.c.l.b16 %v227
    %v743 = vunpack.c.h.b16 %v227
    %v744 = vunpack.c.l.b16 %v228
    %v745 = vunpack.c.h.b16 %v228
    %v746 = vunpack.c.l.b16 %v229
    %v747 = vunpack.c.h.b16 %v229
    %v748 = vunpack.c.l.b16 %v230
    %v749 = vunpack.c.h.b16 %v230
    %v750 = vunpack.c.l.b16 %v231
    %v751 = vunpack.c.h.b16 %v231
    %v752 = vunpack.c.l.b16 %v232
    %v753 = vunpack.c.h.b16 %v232
    %v754 = vunpack.c.l.b16 %v233
    %v755 = vunpack.c.h.b16 %v233
    %v756 = vunpack.c.l.b16 %v234
    %v757 = vunpack.c.h.b16 %v234
    %v758 = vunpack.c.l.b16 %v235
    %v759 = vunpack.c.h.b16 %v235
    %v760 = vunpack.c.l.b16 %v236
    %v761 = vunpack.c.h.b16 %v236
    %v762 = vunpack.c.l.b16 %v237
    %v763 = vunpack.c.h.b16 %v237
    %v764 = vunpack.c.l.b16 %v238
    %v765 = vunpack.c.h.b16 %v238
    %v766 = vunpack.c.l.b16 %v239
    %v767 = vunpack.c.h.b16 %v239
    %v768 = vunpack.c.l.b16 %v240
    %v769 = vunpack.c.h.b16 %v240
    %v770 = vunpack.c.l.b16 %v241
    %v771 = vunpack.c.h.b16 %v241
    %v772 = vunpack.c.l.b16 %v242
    %v773 = vunpack.c.h.b16 %v242
    %v774 = vunpack.c.l.b16 %v243
    %v775 = vunpack.c.h.b16 %v243
    %v776 = vunpack.c.l.b16 %v244
    %v777 = vunpack.c.h.b16 %v244
    %v778 = vunpack.c.l.b16 %v245
    %v779 = vunpack.c.h.b16 %v245
    %v780 = vunpack.c.l.b16 %v246
    %v781 = vunpack.c.h.b16 %v246
    %v782 = vunpack.c.l.b16 %v247
    %v783 = vunpack.c.h.b16 %v247
    %v784 = vunpack.c.l.b16 %v248
    %v785 = vunpack.c.h.b16 %v248
    %v786 = vunpack.c.l.b16 %v249
    %v787 = vunpack.c.h.b16 %v249
    %v788 = vunpack.c.l.b16 %v250
    %v789 = vunpack.c.h.b16 %v250
    %v790 = vunpack.c.l.b16 %v251
    %v791 = vunpack.c.h.b16 %v251
    %v792 = vunpack.c.l.b16 %v252
    %v793 = vunpack.c.h.b16 %v252
    %v794 = vunpack.c.l.b16 %v253
    %v795 = vunpack.c.h.b16 %v253
    %v796 = vunpack.c.l.b16 %v254
    %v797 = vunpack.c.h.b16 %v254
    %v798 = vunpack.c.l.b16 %v255
    %v799 = vunpack.c.h.b16 %v255
    %v800 = vunpack.c.l.b16 %v256
    %v801 = vunpack.c.h.b16 %v256
    %v802 = vunpack.c.l.b16 %v257
    %v803 = vunpack.c.h.b16 %v257
    %v804 = vunpack.c.l.b16 %v258
    %v805 = vunpack.c.h.b16 %v258
    %v806 = vunpack.c.l.b16 %v259
    %v807 = vunpack.c.h.b16 %v259
    %v808 = vunpack.c.l.b16 %v260
    %v809 = vunpack.c.h.b16 %v260
    %v810 = vunpack.c.l.b16 %v261
    %v811 = vunpack.c.h.b16 %v261
    %v812 = vunpack.c.l.b16 %v262
    %v813 = vunpack.c.h.b16 %v262
    %v814 = vunpack.c.l.b16 %v263
    %v815 = vunpack.c.h.b16 %v263
    %v816 = vunpack.c.l.b16 %v264
    %v817 = vunpack.c.h.b16 %v264
    %v818 = vunpack.c.l.b16 %v265
    %v819 = vunpack.c.h.b16 %v265
    %v820 = vunpack.c.l.b16 %v266
    %v821 = vunpack.c.h.b16 %v266
    %v822 = vunpack.c.l.b16 %v267
    %v823 = vunpack.c.h.b16 %v267
    %v824 = vunpack.c.l.b16 %v268
    %v825 = vunpack.c.h.b16 %v268
    %v826 = vunpack.c.l.b16 %v269
    %v827 = vunpack.c.h.b16 %v269
    %v828 = vunpack.c.l.b16 %v270
    %v829 = vunpack.c.h.b16 %v270
    %v830 = vunpack.c.l.b16 %v271
    %v831 = vunpack.c.h.b16 %v271
    %v832 = vunpack.c.l.b16 %v272
    %v833 = vunpack.c.h.b16 %v272
    %v834 = vunpack.c.l.b16 %v273
    %v835 = vunpack.c.h.b16 %v273
    %v836 = vunpack.c.l.b16 %v274
    %v837 = vunpack.c.h.b16 %v274
    %v838 = vunpack.c.l.b16 %v275
    %v839 = vunpack.c.h.b16 %v275
    %v840 = vunpack.c.l.b16 %v276
    %v841 = vunpack.c.h.b16 %v276
    %v842 = vunpack.c.l.b16 %v277
    %v843 = vunpack.c.h.b16 %v277
    %v844 = vunpack.c.l.b16 %v278
    %v845 = vunpack.c.h.b16 %v278
    %v846 = vunpack.c.l.b16 %v279
    %v847 = vunpack.c.h.b16 %v279
    %v848 = vunpack.c.l.b16 %v280
    %v849 = vunpack.c.h.b16 %v280
    %v850 = vunpack.c.l.b16 %v281
    %v851 = vunpack.c.h.b16 %v281
    %v852 = vunpack.c.l.b16 %v282
    %v853 = vunpack.c.h.b16 %v282
    %v854 = vunpack.c.l.b16 %v283
    %v855 = vunpack.c.h.b16 %v283
    %v856 = vunpack.c.l.b16 %v284
    %v857 = vunpack.c.h.b16 %v284
    %v858 = vunpack.c.l.b16 %v285
    %v859 = vunpack.c.h.b16 %v285
    %v860 = vunpack.c.l.b16 %v286
    %v861 = vunpack.c.h.b16 %v286
    %v862 = vunpack.c.l.b16 %v287
    %v863 = vunpack.c.h.b16 %v287
    %v864 = vunpack.c.l.b16 %v288
    %v865 = vunpack.c.h.b16 %v288
    %v866 = vunpack.c.l.b16 %v289
    %v867 = vunpack.c.h.b16 %v289
    %v868 = vunpack.c.l.b16 %v290
    %v869 = vunpack.c.h.b16 %v290
    %v870 = vunpack.c.l.b16 %v291
    %v871 = vunpack.c.h.b16 %v291
    %v872 = vunpack.c.l.b16 %v292
    %v873 = vunpack.c.h.b16 %v292
    %v874 = vunpack.c.l.b16 %v293
    %v875 = vunpack.c.h.b16 %v293
    %v876 = vunpack.c.l.b16 %v294
    %v877 = vunpack.c.h.b16 %v294
    %v878 = vunpack.c.l.b16 %v295
    %v879 = vunpack.c.h.b16 %v295
    %v880 = vunpack.c.l.b16 %v296
    %v881 = vunpack.c.h.b16 %v296
    %v882 = vunpack.c.l.b16 %v297
    %v883 = vunpack.c.h.b16 %v297
    %v884 = vunpack.c.l.b16 %v298
    %v885 = vunpack.c.h.b16 %v298
    %v886 = vunpack.c.l.b16 %v299
    %v887 = vunpack.c.h.b16 %v299
    %v888 = vunpack.c.l.b16 %v300
    %v889 = vunpack.c.h.b16 %v300
    %v890 = vunpack.c.l.b16 %v301
    %v891 = vunpack.c.h.b16 %v301
    %v892 = vunpack.c.l.b16 %v302
    %v893 = vunpack.c.h.b16 %v302
    %v894 = vunpack.c.l.b16 %v303
    %v895 = vunpack.c.h.b16 %v303
    %v896 = vunpack.c.l.b16 %v304
    %v897 = vunpack.c.h.b16 %v304
    %v898 = vunpack.c.l.b16 %v305
    %v899 = vunpack.c.h.b16 %v305
    %v900 = vunpack.c.l.b16 %v306
    %v901 = vunpack.c.h.b16 %v306
    %v902 = vunpack.c.l.b16 %v307
    %v903 = vunpack.c.h.b16 %v307
    %v904 = vunpack.c.l.b16 %v308
    %v905 = vunpack.c.h.b16 %v308
    %v906 = vunpack.c.l.b16 %v309
    %v907 = vunpack.c.h.b16 %v309
    %v908 = vunpack.c.l.b16 %v310
    %v909 = vunpack.c.h.b16 %v310
    %v910 = vunpack.c.l.b16 %v311
    %v911 = vunpack.c.h.b16 %v311
    %v912 = vunpack.c.l.b16 %v312
    %v913 = vunpack.c.h.b16 %v312
    %v914 = vunpack.c.l.b16 %v313
    %v915 = vunpack.c.h.b16 %v313
    %v916 = vunpack.c.l.b16 %v314
    %v917 = vunpack.c.h.b16 %v314
    %v918 = vunpack.c.l.b16 %v315
    %v919 = vunpack.c.h.b16 %v315
    %v920 = vunpack.c.l.b16 %v316
    %v921 = vunpack.c.h.b16 %v316
    %v922 = vunpack.c.l.b16 %v317
    %v923 = vunpack.c.h.b16 %v317
    %v924 = vunpack.c.l.b16 %v318
    %v925 = vunpack.c.h.b16 %v318
    %v926 = vunpack.c.l.b16 %v319
    %v927 = vunpack.c.h.b16 %v319
    %v928 = vunpack.c.l.b16 %v320
    %v929 = vunpack.c.h.b16 %v320
    %v930 = vunpack.c.l.b16 %v321
    %v931 = vunpack.c.h.b16 %v321
    %v932 = vpack.c.b16 %v544, %v540
    %v933 = vpack.c.b16 %v545, %v541
    %v934 = vpack.c.b16 %v546, %v542
    %v935 = vpack.c.b16 %v547, %v543
    %v936 = vpack.c.b16 %v552, %v548
    %v937 = vpack.c.b16 %v553, %v549
    %v938 = vpack.c.b16 %v554, %v550
    %v939 = vpack.c.b16 %v555, %v551
    %v940 = vpack.c.b16 %v560, %v556
    %v941 = vpack.c.b16 %v561, %v557
    %v942 = vpack.c.b16 %v562, %v558
    %v943 = vpack.c.b16 %v563, %v559
    %v944 = vpack.c.b16 %v568, %v564
    %v945 = vpack.c.b16 %v569, %v565
    %v946 = vpack.c.b16 %v570, %v566
    %v947 = vpack.c.b16 %v571, %v567
    %v948 = vpack.c.b16 %v576, %v572
    %v949 = vpack.c.b16 %v577, %v573
    %v950 = vpack.c.b16 %v578, %v574
    %v951 = vpack.c.b16 %v579, %v575
    %v952 = vpack.c.b16 %v584, %v580
    %v953 = vpack.c.b16 %v585, %v581
    %v954 = vpack.c.b16 %v586, %v582
    %v955 = vpack.c.b16 %v587, %v583
    %v956 = vpack.c.b16 %v592, %v588
    %v957 = vpack.c.b16 %v593, %v589
    %v958 = vpack.c.b16 %v594, %v590
    %v959 = vpack.c.b16 %v595, %v591
    %v960 = vpack.c.b16 %v600, %v596
    %v961 = vpack.c.b16 %v601, %v597
    %v962 = vpack.c.b16 %v602, %v598
    %v963 = vpack.c.b16 %v603, %v599
    %v964 = vpack.c.b16 %v608, %v604
    %v965 = vpack.c.b16 %v609, %v605
    %v966 = vpack.c.b16 %v610, %v606
    %v967 = vpack.c.b16 %v611, %v607
    %v968 = vpack.c.b16 %v616, %v612
    %v969 = vpack.c.b16 %v617, %v613
    %v970 = vpack.c.b16 %v618, %v614
    %v971 = vpack.c.b16 %v619, %v615
    %v972 = vpack.c.b16 %v624, %v620
    %v973 = vpack.c.b16 %v625, %v621
    %v974 = vpack.c.b16 %v626, %v622
    %v975 = vpack.c.b16 %v627, %v623
    %v976 = vpack.c.b16 %v632, %v628
    %v977 = vpack.c.b16 %v633, %v629
    %v978 = vpack.c.b16 %v634, %v630
    %v979 = vpack.c.b16 %v635, %v631
    %v980 = vpack.c.b16 %v640, %v636
    %v981 = vpack.c.b16 %v641, %v637
    %v982 = vpack.c.b16 %v642, %v638
    %v983 = vpack.c.b16 %v643, %v639
    %v984 = vpack.c.b16 %v648, %v644
    %v985 = vpack.c.b16 %v649, %v645
    %v986 = vpack.c.b16 %v650, %v646
    %v987 = vpack.c.b16 %v651, %v647
    %v988 = vpack.c.b16 %v656, %v652
    %v989 = vpack.c.b16 %v657, %v653
    %v990 = vpack.c.b16 %v658, %v654
    %v991 = vpack.c.b16 %v659, %v655
    %v992 = vpack.c.b16 %v664, %v660
    %v993 = vpack.c.b16 %v665, %v661
    %v994 = vpack.c.b16 %v666, %v662
    %v995 = vpack.c.b16 %v667, %v663
    %v996 = vpack.c.b16 %v672, %v668
    %v997 = vpack.c.b16 %v673, %v669
    %v998 = vpack.c.b16 %v674, %v670
    %v999 = vpack.c.b16 %v675, %v671
    %v1000 = vpack.c.b16 %v680, %v676
    %v1001 = vpack.c.b16 %v681, %v677
    %v1002 = vpack.c.b16 %v682, %v678
    %v1003 = vpack.c.b16 %v683, %v679
    %v1004 = vpack.c.b16 %v688, %v684
    %v1005 = vpack.c.b16 %v689, %v685
    %v1006 = vpack.c.b16 %v690, %v686
    %v1007 = vpack.c.b16 %v691, %v687
    %v1008 = vpack.c.b16 %v696, %v692
    %v1009 = vpack.c.b16 %v697, %v693
    %v1010 = vpack.c.b16 %v698, %v694
    %v1011 = vpack.c.b16 %v699, %v695
    %v1012 = vpack.c.b16 %v704, %v700
    %v1013 = vpack.c.b16 %v705, %v701
    %v1014 = vpack.c.b16 %v706, %v702
    %v1015 = vpack.c.b16 %v707, %v703
    %v1016 = vpack.c.b16 %v712, %v708
    %v1017 = vpack.c.b16 %v713, %v709
    %v1018 = vpack.c.b16 %v714, %v710
    %v1019 = vpack.c.b16 %v715, %v711
    %v1020 = vpack.c.b16 %v720, %v716
    %v1021 = vpack.c.b16 %v721, %v717
    %v1022 = vpack.c.b16 %v722, %v718
    %v1023 = vpack.c.b16 %v723, %v719
    %v1024 = vpack.c.b16 %v728, %v724
    %v1025 = vpack.c.b16 %v729, %v725
    %v1026 = vpack.c.b16 %v730, %v726
    %v1027 = vpack.c.b16 %v731, %v727
    %v1028 = vpack.c.b16 %v736, %v732
    %v1029 = vpack.c.b16 %v737, %v733
    %v1030 = vpack.c.b16 %v738, %v734
    %v1031 = vpack.c.b16 %v739, %v735
    %v1032 = vpack.c.b16 %v744, %v740
    %v1033 = vpack.c.b16 %v745, %v741
    %v1034 = vpack.c.b16 %v746, %v742
    %v1035 = vpack.c.b16 %v747, %v743
    %v1036 = vpack.c.b16 %v752, %v748
    %v1037 = vpack.c.b16 %v753, %v749
    %v1038 = vpack.c.b16 %v754, %v750
    %v1039 = vpack.c.b16 %v755, %v751
    %v1040 = vpack.c.b16 %v760, %v756
    %v1041 = vpack.c.b16 %v761, %v757
    %v1042 = vpack.c.b16 %v762, %v758
    %v1043 = vpack.c.b16 %v763, %v759
    %v1044 = vpack.c.b16 %v768, %v764
    %v1045 = vpack.c.b16 %v769, %v765
    %v1046 = vpack.c.b16 %v770, %v766
    %v1047 = vpack.c.b16 %v771, %v767
    %v1048 = vpack.c.b16 %v776, %v772
    %v1049 = vpack.c.b16 %v777, %v773
    %v1050 = vpack.c.b16 %v778, %v774
    %v1051 = vpack.c.b16 %v779, %v775
    %v1052 = vpack.c.b16 %v784, %v780
    %v1053 = vpack.c.b16 %v785, %v781
    %v1054 = vpack.c.b16 %v786, %v782
    %v1055 = vpack.c.b16 %v787, %v783
    %v1056 = vpack.c.b16 %v792, %v788
    %v1057 = vpack.c.b16 %v793, %v789
    %v1058 = vpack.c.b16 %v794, %v790
    %v1059 = vpack.c.b16 %v795, %v791
    %v1060 = vpack.c.b16 %v800, %v796
    %v1061 = vpack.c.b16 %v801, %v797
    %v1062 = vpack.c.b16 %v802, %v798
    %v1063 = vpack.c.b16 %v803, %v799
    %v1064 = vpack.c.b16 %v808, %v804
    %v1065 = vpack.c.b16 %v809, %v805
    %v1066 = vpack.c.b16 %v810, %v806
    %v1067 = vpack.c.b16 %v811, %v807
    %v1068 = vpack.c.b16 %v816, %v812
    %v1069 = vpack.c.b16 %v817, %v813
    %v1070 = vpack.c.b16 %v818, %v814
    %v1071 = vpack.c.b16 %v819, %v815
    %v1072 = vpack.c.b16 %v824, %v820
    %v1073 = vpack.c.b16 %v825, %v821
    %v1074 = vpack.c.b16 %v826, %v822
    %v1075 = vpack.c.b16 %v827, %v823
    %v1076 = vpack.c.b16 %v832, %v828
    %v1077 = vpack.c.b16 %v833, %v829
    %v1078 = vpack.c.b16 %v834, %v830
    %v1079 = vpack.c.b16 %v835, %v831
    %v1080 = vpack.c.b16 %v840, %v836
    %v1081 = vpack.c.b16 %v841, %v837
    %v1082 = vpack.c.b16 %v842, %v838
    %v1083 = vpack.c.b16 %v843, %v839
    %v1084 = vpack.c.b16 %v848, %v844
    %v1085 = vpack.c.b16 %v849, %v845
    %v1086 = vpack.c.b16 %v850, %v846
    %v1087 = vpack.c.b16 %v851, %v847
    %v1088 = vpack.c.b16 %v856, %v852
    %v1089 = vpack.c.b16 %v857, %v853
    %v1090 = vpack.c.b16 %v858, %v854
    %v1091 = vpack.c.b16 %v859, %v855
    %v1092 = vpack.c.b16 %v864, %v860
    %v1093 = vpack.c.b16 %v865, %v861
    %v1094 = vpack.c.b16 %v866, %v862
    %v1095 = vpack.c.b16 %v867, %v863
    %v1096 = vpack.c.b16 %v872, %v868
    %v1097 = vpack.c.b16 %v873, %v869
    %v1098 = vpack.c.b16 %v874, %v870
    %v1099 = vpack.c.b16 %v875, %v871
    %v1100 = vpack.c.b16 %v880, %v876
    %v1101 = vpack.c.b16 %v881, %v877
    %v1102 = vpack.c.b16 %v882, %v878
    %v1103 = vpack.c.b16 %v883, %v879
    %v1104 = vpack.c.b16 %v888, %v884
    %v1105 = vpack.c.b16 %v889, %v885
    %v1106 = vpack.c.b16 %v890, %v886
    %v1107 = vpack.c.b16 %v891, %v887
    %v1108 = vpack.c.b16 %v896, %v892
    %v1109 = vpack.c.b16 %v897, %v893
    %v1110 = vpack.c.b16 %v898, %v894
    %v1111 = vpack.c.b16 %v899, %v895
    %v1112 = vpack.c.b16 %v904, %v900
    %v1113 = vpack.c.b16 %v905, %v901
    %v1114 = vpack.c.b16 %v906, %v902
    %v1115 = vpack.c.b16 %v907, %v903
    %v1116 = vpack.c.b16 %v912, %v908
    %v1117 = vpack.c.b16 %v913, %v909
    %v1118 = vpack.c.b16 %v914, %v910
    %v1119 = vpack.c.b16 %v915, %v911
    %v1120 = vpack.c.b16 %v920, %v916
    %v1121 = vpack.c.b16 %v921, %v917
    %v1122 = vpack.c.b16 %v922, %v918
    %v1123 = vpack.c.b16 %v923, %v919
    %v1124 = vpack.c.b16 %v928, %v924
    %v1125 = vpack.c.b16 %v929, %v925
    %v1126 = vpack.c.b16 %v930, %v926
    %v1127 = vpack.c.b16 %v931, %v927
    %vm1324 = vcmask 130048
    %v1326 = vsel %vm1324, %v125, 0
    %1328 = vmatprep.subr.bf16.mxu0 %v933
    %1329 = vmatpush1.bf16.msra.mxu0 %v932
    %1330 = vmatprep.subr.bf16.mxu0 %v937
    %1331 = vmatpush1.bf16.msra.mxu0 %v936
    %1332 = vmatprep.subr.bf16.mxu0 %v941
    %1333 = vmatpush1.bf16.msra.mxu0 %v940
    %1334 = vmatprep.subr.bf16.mxu0 %v945
    %1335 = vmatpush1.bf16.msra.mxu0 %v944
    %1336 = vmatprep.subr.bf16.mxu0 %v949
    %1337 = vmatpush1.bf16.msra.mxu0 %v948
    %1338 = vmatprep.subr.bf16.mxu0 %v953
    %1339 = vmatpush1.bf16.msra.mxu0 %v952
    %1340 = vmatprep.subr.bf16.mxu0 %v957
    %1341 = vmatpush1.bf16.msra.mxu0 %v956
    %1342 = vmatprep.subr.bf16.mxu0 %v961
    %1343 = vmatpush1.bf16.msra.mxu0 %v960
    %1344 = vmatprep.subr.bf16.mxu0 %v965
    %1345 = vmatpush1.bf16.msra.mxu0 %v964
    %1346 = vmatprep.subr.bf16.mxu0 %v969
    %1347 = vmatpush1.bf16.msra.mxu0 %v968
    %1348 = vmatprep.subr.bf16.mxu0 %v973
    %1349 = vmatpush1.bf16.msra.mxu0 %v972
    %1350 = vmatprep.subr.bf16.mxu0 %v977
    %1351 = vmatpush1.bf16.msra.mxu0 %v976
    %1352 = vmatprep.subr.bf16.mxu0 %v981
    %1353 = vmatpush1.bf16.msra.mxu0 %v980
    %1354 = vmatprep.subr.bf16.mxu0 %v985
    %1355 = vmatpush1.bf16.msra.mxu0 %v984
    %1356 = vmatprep.subr.bf16.mxu0 %v989
    %1357 = vmatpush1.bf16.msra.mxu0 %v988
    %1358 = vmatprep.subr.bf16.mxu0 %v993
    %1359 = vmatpush1.bf16.msra.mxu0 %v992
    %1360 = vmatprep.mubr.bf16.mxu0 %v120
    %1361 = vmatmul.mubr.bf16.gmra.mrb[0].mxu0 %v119
    %v1362 = vpop.f32.mrb[0].mxu0
    %v1363 = vadd.f32 %v327, %v1362
    %v1364 = vpop.f32.mrb[0].mxu0
    %v1365 = vadd.f32 %v331, %v1364
    %v1366 = vpop.f32.mrb[0].mxu0
    %v1367 = vpop.f32.mrb[0].mxu0
    %1368 = vdwg.mxu0
    %1369 = vmatprep.subr.bf16.mxu0 %v997
    %1370 = vmatpush1.bf16.msra.mxu0 %v996
    %1371 = vmatprep.subr.bf16.mxu0 %v1001
    %1372 = vmatpush1.bf16.msra.mxu0 %v1000
    %1373 = vmatprep.subr.bf16.mxu0 %v1005
    %1374 = vmatpush1.bf16.msra.mxu0 %v1004
    %1375 = vmatprep.subr.bf16.mxu0 %v1009
    %1376 = vmatpush1.bf16.msra.mxu0 %v1008
    %1377 = vmatprep.subr.bf16.mxu0 %v1013
    %1378 = vmatpush1.bf16.msra.mxu0 %v1012
    %1379 = vmatprep.subr.bf16.mxu0 %v1017
    %1380 = vmatpush1.bf16.msra.mxu0 %v1016
    %1381 = vmatprep.subr.bf16.mxu0 %v1021
    %1382 = vmatpush1.bf16.msra.mxu0 %v1020
    %1383 = vmatprep.subr.bf16.mxu0 %v1025
    %1384 = vmatpush1.bf16.msra.mxu0 %v1024
    %1385 = vmatprep.subr.bf16.mxu0 %v1029
    %1386 = vmatpush1.bf16.msra.mxu0 %v1028
    %1387 = vmatprep.subr.bf16.mxu0 %v1033
    %1388 = vmatpush1.bf16.msra.mxu0 %v1032
    %1389 = vmatprep.subr.bf16.mxu0 %v1037
    %1390 = vmatpush1.bf16.msra.mxu0 %v1036
    %1391 = vmatprep.subr.bf16.mxu0 %v1041
    %1392 = vmatpush1.bf16.msra.mxu0 %v1040
    %1393 = vmatprep.subr.bf16.mxu0 %v1045
    %1394 = vmatpush1.bf16.msra.mxu0 %v1044
    %1395 = vmatprep.subr.bf16.mxu0 %v1049
    %1396 = vmatpush1.bf16.msra.mxu0 %v1048
    %1397 = vmatprep.subr.bf16.mxu0 %v1053
    %1398 = vmatpush1.bf16.msra.mxu0 %v1052
    %1399 = vmatprep.subr.bf16.mxu0 %v1057
    %1400 = vmatpush1.bf16.msra.mxu0 %v1056
    %1401 = vmatprep.mubr.bf16.mxu0 %v122
    %1402 = vmatmul.mubr.bf16.gmra.mrb[0].mxu0 %v121
    %v1403 = vpop.f32.mrb[0].mxu0
    %v1404 = vadd.f32 %v1363, %v1403
    %v1405 = vpop.f32.mrb[0].mxu0
    %v1406 = vadd.f32 %v1365, %v1405
    %v1407 = vpop.f32.mrb[0].mxu0
    %v1408 = vpop.f32.mrb[0].mxu0
    %1409 = vdwg.mxu0
    %1410 = vmatprep.subr.bf16.mxu0 %v1061
    %1411 = vmatpush1.bf16.msra.mxu0 %v1060
    %1412 = vmatprep.subr.bf16.mxu0 %v1065
    %1413 = vmatpush1.bf16.msra.mxu0 %v1064
    %1414 = vmatprep.subr.bf16.mxu0 %v1069
    %1415 = vmatpush1.bf16.msra.mxu0 %v1068
    %1416 = vmatprep.subr.bf16.mxu0 %v1073
    %1417 = vmatpush1.bf16.msra.mxu0 %v1072
    %1418 = vmatprep.subr.bf16.mxu0 %v1077
    %1419 = vmatpush1.bf16.msra.mxu0 %v1076
    %1420 = vmatprep.subr.bf16.mxu0 %v1081
    %1421 = vmatpush1.bf16.msra.mxu0 %v1080
    %1422 = vmatprep.subr.bf16.mxu0 %v1085
    %1423 = vmatpush1.bf16.msra.mxu0 %v1084
    %1424 = vmatprep.subr.bf16.mxu0 %v1089
    %1425 = vmatpush1.bf16.msra.mxu0 %v1088
    %1426 = vmatprep.subr.bf16.mxu0 %v1093
    %1427 = vmatpush1.bf16.msra.mxu0 %v1092
    %1428 = vmatprep.subr.bf16.mxu0 %v1097
    %1429 = vmatpush1.bf16.msra.mxu0 %v1096
    %1430 = vmatprep.subr.bf16.mxu0 %v1101
    %1431 = vmatpush1.bf16.msra.mxu0 %v1100
    %1432 = vmatprep.subr.bf16.mxu0 %v1105
    %1433 = vmatpush1.bf16.msra.mxu0 %v1104
    %1434 = vmatprep.subr.bf16.mxu0 %v1109
    %1435 = vmatpush1.bf16.msra.mxu0 %v1108
    %1436 = vmatprep.subr.bf16.mxu0 %v1113
    %1437 = vmatpush1.bf16.msra.mxu0 %v1112
    %1438 = vmatprep.subr.bf16.mxu0 %v1117
    %1439 = vmatpush1.bf16.msra.mxu0 %v1116
    %1440 = vmatprep.subr.bf16.mxu0 %v1121
    %1441 = vmatpush1.bf16.msra.mxu0 %v1120
    %1442 = vmatprep.mubr.bf16.mxu0 %v124
    %1443 = vmatmul.mubr.bf16.gmra.mrb[0].mxu0 %v123
    %v1444 = vpop.f32.mrb[0].mxu0
    %v1445 = vadd.f32 %v1404, %v1444
    %v1446 = vpop.f32.mrb[0].mxu0
    %v1447 = vadd.f32 %v1406, %v1446
    %v1448 = vpop.f32.mrb[0].mxu0
    %v1449 = vpop.f32.mrb[0].mxu0
    %1450 = vdwg.mxu0
    %1451 = vmatprep.subr.bf16.mxu0 %v1125
    %1452 = vmatpush1.bf16.msra.mxu0 %v1124
    %1453 = vmatprep.subr.bf16.mxu0 0
    %1454 = vmatpush1.bf16.msra.mxu0 0
    %1455 = vmatprep.subr.bf16.mxu0 0
    %1456 = vmatpush1.bf16.msra.mxu0 0
    %1457 = vmatprep.subr.bf16.mxu0 0
    %1458 = vmatpush1.bf16.msra.mxu0 0
    %1459 = vmatprep.subr.bf16.mxu0 0
    %1460 = vmatpush1.bf16.msra.mxu0 0
    %1461 = vmatprep.subr.bf16.mxu0 0
    %1462 = vmatpush1.bf16.msra.mxu0 0
    %1463 = vmatprep.subr.bf16.mxu0 0
    %1464 = vmatpush1.bf16.msra.mxu0 0
    %1465 = vmatprep.subr.bf16.mxu0 0
    %1466 = vmatpush1.bf16.msra.mxu0 0
    %1467 = vmatprep.subr.bf16.mxu0 0
    %1468 = vmatpush1.bf16.msra.mxu0 0
    %1469 = vmatprep.subr.bf16.mxu0 0
    %1470 = vmatpush1.bf16.msra.mxu0 0
    %1471 = vmatprep.subr.bf16.mxu0 0
    %1472 = vmatpush1.bf16.msra.mxu0 0
    %1473 = vmatprep.subr.bf16.mxu0 0
    %1474 = vmatpush1.bf16.msra.mxu0 0
    %1475 = vmatprep.subr.bf16.mxu0 0
    %1476 = vmatpush1.bf16.msra.mxu0 0
    %1477 = vmatprep.subr.bf16.mxu0 0
    %1478 = vmatpush1.bf16.msra.mxu0 0
    %1479 = vmatprep.subr.bf16.mxu0 0
    %1480 = vmatpush1.bf16.msra.mxu0 0
    %1481 = vmatprep.subr.bf16.mxu0 0
    %1482 = vmatpush1.bf16.msra.mxu0 0
    %1483 = vmatprep.mubr.bf16.mxu0 0
    %1484 = vmatmul.mubr.bf16.gmra.mrb[0].mxu0 %v1326
    %v1485 = vpop.f32.mrb[0].mxu0
    %v1486 = vadd.f32 %v1445, %v1485
    %v1487 = vpop.f32.mrb[0].mxu0
    %v1488 = vadd.f32 %v1447, %v1487
    %v1489 = vpop.f32.mrb[0].mxu0
    %v1490 = vpop.f32.mrb[0].mxu0
    %1491 = vdwg.mxu0
    %1492 = vmatprep.subr.bf16.mxu0 %v935
    %1493 = vmatpush1.bf16.msra.mxu0 %v934
    %1494 = vmatprep.subr.bf16.mxu0 %v939
    %1495 = vmatpush1.bf16.msra.mxu0 %v938
    %1496 = vmatprep.subr.bf16.mxu0 %v943
    %1497 = vmatpush1.bf16.msra.mxu0 %v942
    %1498 = vmatprep.subr.bf16.mxu0 %v947
    %1499 = vmatpush1.bf16.msra.mxu0 %v946
    %1500 = vmatprep.subr.bf16.mxu0 %v951
    %1501 = vmatpush1.bf16.msra.mxu0 %v950
    %1502 = vmatprep.subr.bf16.mxu0 %v955
    %1503 = vmatpush1.bf16.msra.mxu0 %v954
    %1504 = vmatprep.subr.bf16.mxu0 %v959
    %1505 = vmatpush1.bf16.msra.mxu0 %v958
    %1506 = vmatprep.subr.bf16.mxu0 %v963
    %1507 = vmatpush1.bf16.msra.mxu0 %v962
    %1508 = vmatprep.subr.bf16.mxu0 %v967
    %1509 = vmatpush1.bf16.msra.mxu0 %v966
    %1510 = vmatprep.subr.bf16.mxu0 %v971
    %1511 = vmatpush1.bf16.msra.mxu0 %v970
    %1512 = vmatprep.subr.bf16.mxu0 %v975
    %1513 = vmatpush1.bf16.msra.mxu0 %v974
    %1514 = vmatprep.subr.bf16.mxu0 %v979
    %1515 = vmatpush1.bf16.msra.mxu0 %v978
    %1516 = vmatprep.subr.bf16.mxu0 %v983
    %1517 = vmatpush1.bf16.msra.mxu0 %v982
    %1518 = vmatprep.subr.bf16.mxu0 %v987
    %1519 = vmatpush1.bf16.msra.mxu0 %v986
    %1520 = vmatprep.subr.bf16.mxu0 %v991
    %1521 = vmatpush1.bf16.msra.mxu0 %v990
    %1522 = vmatprep.subr.bf16.mxu0 %v995
    %1523 = vmatpush1.bf16.msra.mxu0 %v994
    %1524 = vmatprep.mubr.bf16.mxu0 %v120
    %1525 = vmatmul.mubr.bf16.gmra.mrb[0].mxu0 %v119
    %v1526 = vpop.f32.mrb[0].mxu0
    %v1527 = vadd.f32 %v335, %v1526
    %v1528 = vpop.f32.mrb[0].mxu0
    %v1529 = vadd.f32 %v339, %v1528
    %v1530 = vpop.f32.mrb[0].mxu0
    %v1531 = vpop.f32.mrb[0].mxu0
    %1532 = vdwg.mxu0
    %1533 = vmatprep.subr.bf16.mxu0 %v999
    %1534 = vmatpush1.bf16.msra.mxu0 %v998
    %1535 = vmatprep.subr.bf16.mxu0 %v1003
    %1536 = vmatpush1.bf16.msra.mxu0 %v1002
    %1537 = vmatprep.subr.bf16.mxu0 %v1007
    %1538 = vmatpush1.bf16.msra.mxu0 %v1006
    %1539 = vmatprep.subr.bf16.mxu0 %v1011
    %1540 = vmatpush1.bf16.msra.mxu0 %v1010
    %1541 = vmatprep.subr.bf16.mxu0 %v1015
    %1542 = vmatpush1.bf16.msra.mxu0 %v1014
    %1543 = vmatprep.subr.bf16.mxu0 %v1019
    %1544 = vmatpush1.bf16.msra.mxu0 %v1018
    %1545 = vmatprep.subr.bf16.mxu0 %v1023
    %1546 = vmatpush1.bf16.msra.mxu0 %v1022
    %1547 = vmatprep.subr.bf16.mxu0 %v1027
    %1548 = vmatpush1.bf16.msra.mxu0 %v1026
    %1549 = vmatprep.subr.bf16.mxu0 %v1031
    %1550 = vmatpush1.bf16.msra.mxu0 %v1030
    %1551 = vmatprep.subr.bf16.mxu0 %v1035
    %1552 = vmatpush1.bf16.msra.mxu0 %v1034
    %1553 = vmatprep.subr.bf16.mxu0 %v1039
    %1554 = vmatpush1.bf16.msra.mxu0 %v1038
    %1555 = vmatprep.subr.bf16.mxu0 %v1043
    %1556 = vmatpush1.bf16.msra.mxu0 %v1042
    %1557 = vmatprep.subr.bf16.mxu0 %v1047
    %1558 = vmatpush1.bf16.msra.mxu0 %v1046
    %1559 = vmatprep.subr.bf16.mxu0 %v1051
    %1560 = vmatpush1.bf16.msra.mxu0 %v1050
    %1561 = vmatprep.subr.bf16.mxu0 %v1055
    %1562 = vmatpush1.bf16.msra.mxu0 %v1054
    %1563 = vmatprep.subr.bf16.mxu0 %v1059
    %1564 = vmatpush1.bf16.msra.mxu0 %v1058
    %1565 = vmatprep.mubr.bf16.mxu0 %v122
    %1566 = vmatmul.mubr.bf16.gmra.mrb[0].mxu0 %v121
    %v1567 = vpop.f32.mrb[0].mxu0
    %v1568 = vadd.f32 %v1527, %v1567
    %v1569 = vpop.f32.mrb[0].mxu0
    %v1570 = vadd.f32 %v1529, %v1569
    %v1571 = vpop.f32.mrb[0].mxu0
    %v1572 = vpop.f32.mrb[0].mxu0
    %1573 = vdwg.mxu0
    %1574 = vmatprep.subr.bf16.mxu0 %v1063
    %1575 = vmatpush1.bf16.msra.mxu0 %v1062
    %1576 = vmatprep.subr.bf16.mxu0 %v1067
    %1577 = vmatpush1.bf16.msra.mxu0 %v1066
    %1578 = vmatprep.subr.bf16.mxu0 %v1071
    %1579 = vmatpush1.bf16.msra.mxu0 %v1070
    %1580 = vmatprep.subr.bf16.mxu0 %v1075
    %1581 = vmatpush1.bf16.msra.mxu0 %v1074
    %1582 = vmatprep.subr.bf16.mxu0 %v1079
    %1583 = vmatpush1.bf16.msra.mxu0 %v1078
    %1584 = vmatprep.subr.bf16.mxu0 %v1083
    %1585 = vmatpush1.bf16.msra.mxu0 %v1082
    %1586 = vmatprep.subr.bf16.mxu0 %v1087
    %1587 = vmatpush1.bf16.msra.mxu0 %v1086
    %1588 = vmatprep.subr.bf16.mxu0 %v1091
    %1589 = vmatpush1.bf16.msra.mxu0 %v1090
    %1590 = vmatprep.subr.bf16.mxu0 %v1095
    %1591 = vmatpush1.bf16.msra.mxu0 %v1094
    %1592 = vmatprep.subr.bf16.mxu0 %v1099
    %1593 = vmatpush1.bf16.msra.mxu0 %v1098
    %1594 = vmatprep.subr.bf16.mxu0 %v1103
    %1595 = vmatpush1.bf16.msra.mxu0 %v1102
    %1596 = vmatprep.subr.bf16.mxu0 %v1107
    %1597 = vmatpush1.bf16.msra.mxu0 %v1106
    %1598 = vmatprep.subr.bf16.mxu0 %v1111
    %1599 = vmatpush1.bf16.msra.mxu0 %v1110
    %1600 = vmatprep.subr.bf16.mxu0 %v1115
    %1601 = vmatpush1.bf16.msra.mxu0 %v1114
    %1602 = vmatprep.subr.bf16.mxu0 %v1119
    %1603 = vmatpush1.bf16.msra.mxu0 %v1118
    %1604 = vmatprep.subr.bf16.mxu0 %v1123
    %1605 = vmatpush1.bf16.msra.mxu0 %v1122
    %1606 = vmatprep.mubr.bf16.mxu0 %v124
    %1607 = vmatmul.mubr.bf16.gmra.mrb[0].mxu0 %v123
    %v1608 = vpop.f32.mrb[0].mxu0
    %v1609 = vadd.f32 %v1568, %v1608
    %v1610 = vpop.f32.mrb[0].mxu0
    %v1611 = vadd.f32 %v1570, %v1610
    %v1612 = vpop.f32.mrb[0].mxu0
    %v1613 = vpop.f32.mrb[0].mxu0
    %1614 = vdwg.mxu0
    %1615 = vmatprep.subr.bf16.mxu0 %v1127
    %1616 = vmatpush1.bf16.msra.mxu0 %v1126
    %1617 = vmatprep.subr.bf16.mxu0 0
    %1618 = vmatpush1.bf16.msra.mxu0 0
    %1619 = vmatprep.subr.bf16.mxu0 0
    %1620 = vmatpush1.bf16.msra.mxu0 0
    %1621 = vmatprep.subr.bf16.mxu0 0
    %1622 = vmatpush1.bf16.msra.mxu0 0
    %1623 = vmatprep.subr.bf16.mxu0 0
    %1624 = vmatpush1.bf16.msra.mxu0 0
    %1625 = vmatprep.subr.bf16.mxu0 0
    %1626 = vmatpush1.bf16.msra.mxu0 0
    %1627 = vmatprep.subr.bf16.mxu0 0
    %1628 = vmatpush1.bf16.msra.mxu0 0
    %1629 = vmatprep.subr.bf16.mxu0 0
    %1630 = vmatpush1.bf16.msra.mxu0 0
    %1631 = vmatprep.subr.bf16.mxu0 0
    %1632 = vmatpush1.bf16.msra.mxu0 0
    %1633 = vmatprep.subr.bf16.mxu0 0
    %1634 = vmatpush1.bf16.msra.mxu0 0
    %1635 = vmatprep.subr.bf16.mxu0 0
    %1636 = vmatpush1.bf16.msra.mxu0 0
    %1637 = vmatprep.subr.bf16.mxu0 0
    %1638 = vmatpush1.bf16.msra.mxu0 0
    %1639 = vmatprep.subr.bf16.mxu0 0
    %1640 = vmatpush1.bf16.msra.mxu0 0
    %1641 = vmatprep.subr.bf16.mxu0 0
    %1642 = vmatpush1.bf16.msra.mxu0 0
    %1643 = vmatprep.subr.bf16.mxu0 0
    %1644 = vmatpush1.bf16.msra.mxu0 0
    %1645 = vmatprep.subr.bf16.mxu0 0
    %1646 = vmatpush1.bf16.msra.mxu0 0
    %1647 = vmatprep.mubr.bf16.mxu0 0
    %1648 = vmatmul.mubr.bf16.gmra.mrb[0].mxu0 %v1326
    %v1649 = vpop.f32.mrb[0].mxu0
    %v1650 = vadd.f32 %v1609, %v1649
    %v1651 = vpop.f32.mrb[0].mxu0
    %v1652 = vadd.f32 %v1611, %v1651
    %v1653 = vpop.f32.mrb[0].mxu0
    %v1654 = vpop.f32.mrb[0].mxu0
    %1655 = vdwg.mxu0
    %v1656 = vmax.f32 %v1486, 0.0
    %v1657 = vmax.f32 %v1488, 0.0
    %v1658 = vmax.f32 %v1650, 0.0
    %v1659 = vmax.f32 %v1652, 0.0
    %v1660 = vpack.c.bf16 %v1656, %v1656
    %v1661 = vpack.c.bf16 %v1657, %v1657
    %v1662 = vpack.c.bf16 %v1658, %v1658
    %v1663 = vpack.c.bf16 %v1659, %v1659
    %v1664 = vld [vmem:[#allocation8] sm:$0xff]
    %v1665 = vld [vmem:[#allocation8 + $0x8] sm:$0xff]
    %v1666 = vld [vmem:[#allocation8 + $0x10] sm:$0xff]
    %v1667 = vld [vmem:[#allocation8 + $0x18] sm:$0xff]
    %v1668 = vld [vmem:[#allocation8 + $0x20] sm:$0xff]
    %v1669 = vld [vmem:[#allocation8 + $0x28] sm:$0xff]
    %v1670 = vld [vmem:[#allocation8 + $0x30] sm:$0xff]
    %v1671 = vld [vmem:[#allocation8 + $0x38] sm:$0xff]
    %v1672 = vld [vmem:[#allocation8 + $0x40] sm:$0xff]
    %v1673 = vld [vmem:[#allocation8 + $0x48] sm:$0xff]
    %v1674 = vld [vmem:[#allocation8 + $0x50] sm:$0xff]
    %v1675 = vld [vmem:[#allocation8 + $0x58] sm:$0xff]
    %v1676 = vld [vmem:[#allocation8 + $0x60] sm:$0xff]
    %v1677 = vld [vmem:[#allocation8 + $0x68] sm:$0xff]
    %v1678 = vld [vmem:[#allocation8 + $0x70] sm:$0xff]
    %v1679 = vld [vmem:[#allocation8 + $0x78] sm:$0xff]
    %v1680 = vld [vmem:[#allocation8 + $0x80] sm:$0xff]
    %v1681 = vld [vmem:[#allocation8 + $0x88] sm:$0xff]
    %v1682 = vld [vmem:[#allocation8 + $0x90] sm:$0xff]
    %v1683 = vld [vmem:[#allocation8 + $0x98] sm:$0xff]
    %v1684 = vld [vmem:[#allocation8 + $0xa0] sm:$0xff]
    %v1685 = vld [vmem:[#allocation8 + $0xa8] sm:$0xff]
    %v1686 = vld [vmem:[#allocation8 + $0xb0] sm:$0xff]
    %v1687 = vld [vmem:[#allocation8 + $0xb8] sm:$0xff]
    %v1688 = vld [vmem:[#allocation8 + $0xc0] sm:$0xff]
    %v1689 = vld [vmem:[#allocation8 + $0xc8] sm:$0xff]
    %v1690 = vld [vmem:[#allocation8 + $0xd0] sm:$0xff]
    %v1691 = vld [vmem:[#allocation8 + $0xd8] sm:$0xff]
    %v1692 = vld [vmem:[#allocation8 + $0xe0] sm:$0xff]
    %v1693 = vld [vmem:[#allocation8 + $0xe8] sm:$0xff]
    %v1694 = vld [vmem:[#allocation8 + $0xf0] sm:$0xff]
    %v1695 = vld [vmem:[#allocation8 + $0xf8] sm:$0xff]
    %v1696 = vld [vmem:[#allocation8 + $0x100] sm:$0xff]
    %v1697 = vld [vmem:[#allocation8 + $0x108] sm:$0xff]
    %v1698 = vld [vmem:[#allocation8 + $0x110] sm:$0xff]
    %v1699 = vld [vmem:[#allocation8 + $0x118] sm:$0xff]
    %v1700 = vld [vmem:[#allocation8 + $0x120] sm:$0xff]
    %v1701 = vld [vmem:[#allocation8 + $0x128] sm:$0xff]
    %v1702 = vld [vmem:[#allocation8 + $0x130] sm:$0xff]
    %v1703 = vld [vmem:[#allocation8 + $0x138] sm:$0xff]
    %v1704 = vld [vmem:[#allocation8 + $0x140] sm:$0xff]
    %v1705 = vld [vmem:[#allocation8 + $0x148] sm:$0xff]
    %v1706 = vld [vmem:[#allocation8 + $0x150] sm:$0xff]
    %v1707 = vld [vmem:[#allocation8 + $0x158] sm:$0xff]
    %v1708 = vld [vmem:[#allocation8 + $0x160] sm:$0xff]
    %v1709 = vld [vmem:[#allocation8 + $0x168] sm:$0xff]
    %v1710 = vld [vmem:[#allocation8 + $0x170] sm:$0xff]
    %v1711 = vld [vmem:[#allocation8 + $0x178] sm:$0xff]
    %v1712 = vld [vmem:[#allocation8 + $0x180] sm:$0xff]
    %v1713 = vld [vmem:[#allocation8 + $0x188] sm:$0xff]
    %v1714 = vld [vmem:[#allocation8 + $0x190] sm:$0xff]
    %v1715 = vld [vmem:[#allocation8 + $0x198] sm:$0xff]
    %v1716 = vld [vmem:[#allocation8 + $0x1a0] sm:$0xff]
    %v1717 = vld [vmem:[#allocation8 + $0x1a8] sm:$0xff]
    %v1718 = vld [vmem:[#allocation8 + $0x1b0] sm:$0xff]
    %v1719 = vld [vmem:[#allocation8 + $0x1b8] sm:$0xff]
    %v1720 = vld [vmem:[#allocation8 + $0x1c0] sm:$0xff]
    %v1721 = vld [vmem:[#allocation8 + $0x1c8] sm:$0xff]
    %v1722 = vld [vmem:[#allocation8 + $0x1d0] sm:$0xff]
    %v1723 = vld [vmem:[#allocation8 + $0x1d8] sm:$0xff]
    %v1724 = vld [vmem:[#allocation8 + $0x1e0] sm:$0xff]
    %v1725 = vld [vmem:[#allocation8 + $0x1e8] sm:$0xff]
    %v1726 = vld [vmem:[#allocation8 + $0x1f0] sm:$0xff]
    %v1727 = vld [vmem:[#allocation8 + $0x1f8] sm:$0xff]
    %v1728 = vld [vmem:[#allocation8 + $0x200] sm:$0xff]
    %v1729 = vld [vmem:[#allocation8 + $0x208] sm:$0xff]
    %v1730 = vld [vmem:[#allocation8 + $0x210] sm:$0xff]
    %v1731 = vld [vmem:[#allocation8 + $0x218] sm:$0xff]
    %v1732 = vld [vmem:[#allocation8 + $0x220] sm:$0xff]
    %v1733 = vld [vmem:[#allocation8 + $0x228] sm:$0xff]
    %v1734 = vld [vmem:[#allocation8 + $0x230] sm:$0xff]
    %v1735 = vld [vmem:[#allocation8 + $0x238] sm:$0xff]
    %v1736 = vld [vmem:[#allocation8 + $0x240] sm:$0xff]
    %v1737 = vld [vmem:[#allocation8 + $0x248] sm:$0xff]
    %v1738 = vld [vmem:[#allocation8 + $0x250] sm:$0xff]
    %v1739 = vld [vmem:[#allocation8 + $0x258] sm:$0xff]
    %v1740 = vld [vmem:[#allocation8 + $0x260] sm:$0xff]
    %v1741 = vld [vmem:[#allocation8 + $0x268] sm:$0xff]
    %v1742 = vld [vmem:[#allocation8 + $0x270] sm:$0xff]
    %v1743 = vld [vmem:[#allocation8 + $0x278] sm:$0xff]
    %v1744 = vld [vmem:[#allocation8 + $0x280] sm:$0xff]
    %v1745 = vld [vmem:[#allocation8 + $0x288] sm:$0xff]
    %v1746 = vld [vmem:[#allocation8 + $0x290] sm:$0xff]
    %v1747 = vld [vmem:[#allocation8 + $0x298] sm:$0xff]
    %v1748 = vld [vmem:[#allocation8 + $0x2a0] sm:$0xff]
    %v1749 = vld [vmem:[#allocation8 + $0x2a8] sm:$0xff]
    %v1750 = vld [vmem:[#allocation8 + $0x2b0] sm:$0xff]
    %v1751 = vld [vmem:[#allocation8 + $0x2b8] sm:$0xff]
    %v1752 = vld [vmem:[#allocation8 + $0x2c0] sm:$0xff]
    %v1753 = vld [vmem:[#allocation8 + $0x2c8] sm:$0xff]
    %v1754 = vld [vmem:[#allocation8 + $0x2d0] sm:$0xff]
    %v1755 = vld [vmem:[#allocation8 + $0x2d8] sm:$0xff]
    %v1756 = vld [vmem:[#allocation8 + $0x2e0] sm:$0xff]
    %v1757 = vld [vmem:[#allocation8 + $0x2e8] sm:$0xff]
    %v1758 = vld [vmem:[#allocation8 + $0x2f0] sm:$0xff]
    %v1759 = vld [vmem:[#allocation8 + $0x2f8] sm:$0xff]
    %v1760 = vld [vmem:[#allocation8 + $0x300] sm:$0xff]
    %v1761 = vld [vmem:[#allocation8 + $0x308] sm:$0xff]
    %v1762 = vld [vmem:[#allocation8 + $0x310] sm:$0xff]
    %v1763 = vld [vmem:[#allocation8 + $0x318] sm:$0xff]
    %v1764 = vld [vmem:[#allocation8 + $0x320] sm:$0xff]
    %v1765 = vld [vmem:[#allocation8 + $0x328] sm:$0xff]
    %v1766 = vld [vmem:[#allocation8 + $0x330] sm:$0xff]
    %v1767 = vld [vmem:[#allocation8 + $0x338] sm:$0xff]
    %v1768 = vld [vmem:[#allocation8 + $0x340] sm:$0xff]
    %v1769 = vld [vmem:[#allocation8 + $0x348] sm:$0xff]
    %v1770 = vld [vmem:[#allocation8 + $0x350] sm:$0xff]
    %v1771 = vld [vmem:[#allocation8 + $0x358] sm:$0xff]
    %v1772 = vld [vmem:[#allocation8 + $0x360] sm:$0xff]
    %v1773 = vld [vmem:[#allocation8 + $0x368] sm:$0xff]
    %v1774 = vld [vmem:[#allocation8 + $0x370] sm:$0xff]
    %v1775 = vld [vmem:[#allocation8 + $0x378] sm:$0xff]
    %v1776 = vld [vmem:[#allocation8 + $0x380] sm:$0xff]
    %v1777 = vld [vmem:[#allocation8 + $0x388] sm:$0xff]
    %v1778 = vld [vmem:[#allocation8 + $0x390] sm:$0xff]
    %v1779 = vld [vmem:[#allocation8 + $0x398] sm:$0xff]
    %v1780 = vld [vmem:[#allocation8 + $0x3a0] sm:$0xff]
    %v1781 = vld [vmem:[#allocation8 + $0x3a8] sm:$0xff]
    %v1782 = vld [vmem:[#allocation8 + $0x3b0] sm:$0xff]
    %v1783 = vld [vmem:[#allocation8 + $0x3b8] sm:$0xff]
    %v1784 = vld [vmem:[#allocation8 + $0x3c0] sm:$0xff]
    %v1785 = vld [vmem:[#allocation8 + $0x3c8] sm:$0xff]
    %v1786 = vld [vmem:[#allocation8 + $0x3d0] sm:$0xff]
    %v1787 = vld [vmem:[#allocation8 + $0x3d8] sm:$0xff]
    %v1788 = vld [vmem:[#allocation8 + $0x3e0] sm:$0xff]
    %v1789 = vld [vmem:[#allocation8 + $0x3e8] sm:$0xff]
    %v1790 = vld [vmem:[#allocation8 + $0x3f0] sm:$0xff]
    %v1791 = vld [vmem:[#allocation8 + $0x3f8] sm:$0xff]
    %v1792 = vld [vmem:[%s4] sm:$0xf]
    %v1794 = vlaneseq
    %v1795 = vshrl.u32 %v1794, 7
    %v1796 = vsub.s32 0, %v1795
    %v1797 = vrot.slane %v1792, %v1796
    %v1798 = vlaneseq
    %v1799 = vshrl.u32 %v1798, 7
    %v1800 = vsub.s32 1, %v1799
    %v1801 = vrot.slane %v1792, %v1800
    %v1802 = vlaneseq
    %v1803 = vshrl.u32 %v1802, 7
    %v1804 = vsub.s32 2, %v1803
    %v1805 = vrot.slane %v1792, %v1804
    %v1806 = vlaneseq
    %v1807 = vshrl.u32 %v1806, 7
    %v1808 = vsub.s32 3, %v1807
    %v1809 = vrot.slane %v1792, %v1808
    %v1942 = vunpack.c.l.b16 %v1664
    %v1943 = vunpack.c.h.b16 %v1664
    %v1944 = vunpack.c.l.b16 %v1665
    %v1945 = vunpack.c.h.b16 %v1665
    %v1946 = vunpack.c.l.b16 %v1666
    %v1947 = vunpack.c.h.b16 %v1666
    %v1948 = vunpack.c.l.b16 %v1667
    %v1949 = vunpack.c.h.b16 %v1667
    %v1950 = vunpack.c.l.b16 %v1668
    %v1951 = vunpack.c.h.b16 %v1668
    %v1952 = vunpack.c.l.b16 %v1669
    %v1953 = vunpack.c.h.b16 %v1669
    %v1954 = vunpack.c.l.b16 %v1670
    %v1955 = vunpack.c.h.b16 %v1670
    %v1956 = vunpack.c.l.b16 %v1671
    %v1957 = vunpack.c.h.b16 %v1671
    %v1958 = vunpack.c.l.b16 %v1672
    %v1959 = vunpack.c.h.b16 %v1672
    %v1960 = vunpack.c.l.b16 %v1673
    %v1961 = vunpack.c.h.b16 %v1673
    %v1962 = vunpack.c.l.b16 %v1674
    %v1963 = vunpack.c.h.b16 %v1674
    %v1964 = vunpack.c.l.b16 %v1675
    %v1965 = vunpack.c.h.b16 %v1675
    %v1966 = vunpack.c.l.b16 %v1676
    %v1967 = vunpack.c.h.b16 %v1676
    %v1968 = vunpack.c.l.b16 %v1677
    %v1969 = vunpack.c.h.b16 %v1677
    %v1970 = vunpack.c.l.b16 %v1678
    %v1971 = vunpack.c.h.b16 %v1678
    %v1972 = vunpack.c.l.b16 %v1679
    %v1973 = vunpack.c.h.b16 %v1679
    %v1974 = vunpack.c.l.b16 %v1680
    %v1975 = vunpack.c.h.b16 %v1680
    %v1976 = vunpack.c.l.b16 %v1681
    %v1977 = vunpack.c.h.b16 %v1681
    %v1978 = vunpack.c.l.b16 %v1682
    %v1979 = vunpack.c.h.b16 %v1682
    %v1980 = vunpack.c.l.b16 %v1683
    %v1981 = vunpack.c.h.b16 %v1683
    %v1982 = vunpack.c.l.b16 %v1684
    %v1983 = vunpack.c.h.b16 %v1684
    %v1984 = vunpack.c.l.b16 %v1685
    %v1985 = vunpack.c.h.b16 %v1685
    %v1986 = vunpack.c.l.b16 %v1686
    %v1987 = vunpack.c.h.b16 %v1686
    %v1988 = vunpack.c.l.b16 %v1687
    %v1989 = vunpack.c.h.b16 %v1687
    %v1990 = vunpack.c.l.b16 %v1688
    %v1991 = vunpack.c.h.b16 %v1688
    %v1992 = vunpack.c.l.b16 %v1689
    %v1993 = vunpack.c.h.b16 %v1689
    %v1994 = vunpack.c.l.b16 %v1690
    %v1995 = vunpack.c.h.b16 %v1690
    %v1996 = vunpack.c.l.b16 %v1691
    %v1997 = vunpack.c.h.b16 %v1691
    %v1998 = vunpack.c.l.b16 %v1692
    %v1999 = vunpack.c.h.b16 %v1692
    %v2000 = vunpack.c.l.b16 %v1693
    %v2001 = vunpack.c.h.b16 %v1693
    %v2002 = vunpack.c.l.b16 %v1694
    %v2003 = vunpack.c.h.b16 %v1694
    %v2004 = vunpack.c.l.b16 %v1695
    %v2005 = vunpack.c.h.b16 %v1695
    %v2006 = vunpack.c.l.b16 %v1696
    %v2007 = vunpack.c.h.b16 %v1696
    %v2008 = vunpack.c.l.b16 %v1697
    %v2009 = vunpack.c.h.b16 %v1697
    %v2010 = vunpack.c.l.b16 %v1698
    %v2011 = vunpack.c.h.b16 %v1698
    %v2012 = vunpack.c.l.b16 %v1699
    %v2013 = vunpack.c.h.b16 %v1699
    %v2014 = vunpack.c.l.b16 %v1700
    %v2015 = vunpack.c.h.b16 %v1700
    %v2016 = vunpack.c.l.b16 %v1701
    %v2017 = vunpack.c.h.b16 %v1701
    %v2018 = vunpack.c.l.b16 %v1702
    %v2019 = vunpack.c.h.b16 %v1702
    %v2020 = vunpack.c.l.b16 %v1703
    %v2021 = vunpack.c.h.b16 %v1703
    %v2022 = vunpack.c.l.b16 %v1704
    %v2023 = vunpack.c.h.b16 %v1704
    %v2024 = vunpack.c.l.b16 %v1705
    %v2025 = vunpack.c.h.b16 %v1705
    %v2026 = vunpack.c.l.b16 %v1706
    %v2027 = vunpack.c.h.b16 %v1706
    %v2028 = vunpack.c.l.b16 %v1707
    %v2029 = vunpack.c.h.b16 %v1707
    %v2030 = vunpack.c.l.b16 %v1708
    %v2031 = vunpack.c.h.b16 %v1708
    %v2032 = vunpack.c.l.b16 %v1709
    %v2033 = vunpack.c.h.b16 %v1709
    %v2034 = vunpack.c.l.b16 %v1710
    %v2035 = vunpack.c.h.b16 %v1710
    %v2036 = vunpack.c.l.b16 %v1711
    %v2037 = vunpack.c.h.b16 %v1711
    %v2038 = vunpack.c.l.b16 %v1712
    %v2039 = vunpack.c.h.b16 %v1712
    %v2040 = vunpack.c.l.b16 %v1713
    %v2041 = vunpack.c.h.b16 %v1713
    %v2042 = vunpack.c.l.b16 %v1714
    %v2043 = vunpack.c.h.b16 %v1714
    %v2044 = vunpack.c.l.b16 %v1715
    %v2045 = vunpack.c.h.b16 %v1715
    %v2046 = vunpack.c.l.b16 %v1716
    %v2047 = vunpack.c.h.b16 %v1716
    %v2048 = vunpack.c.l.b16 %v1717
    %v2049 = vunpack.c.h.b16 %v1717
    %v2050 = vunpack.c.l.b16 %v1718
    %v2051 = vunpack.c.h.b16 %v1718
    %v2052 = vunpack.c.l.b16 %v1719
    %v2053 = vunpack.c.h.b16 %v1719
    %v2054 = vunpack.c.l.b16 %v1720
    %v2055 = vunpack.c.h.b16 %v1720
    %v2056 = vunpack.c.l.b16 %v1721
    %v2057 = vunpack.c.h.b16 %v1721
    %v2058 = vunpack.c.l.b16 %v1722
    %v2059 = vunpack.c.h.b16 %v1722
    %v2060 = vunpack.c.l.b16 %v1723
    %v2061 = vunpack.c.h.b16 %v1723
    %v2062 = vunpack.c.l.b16 %v1724
    %v2063 = vunpack.c.h.b16 %v1724
    %v2064 = vunpack.c.l.b16 %v1725
    %v2065 = vunpack.c.h.b16 %v1725
    %v2066 = vunpack.c.l.b16 %v1726
    %v2067 = vunpack.c.h.b16 %v1726
    %v2068 = vunpack.c.l.b16 %v1727
    %v2069 = vunpack.c.h.b16 %v1727
    %v2070 = vunpack.c.l.b16 %v1728
    %v2071 = vunpack.c.h.b16 %v1728
    %v2072 = vunpack.c.l.b16 %v1729
    %v2073 = vunpack.c.h.b16 %v1729
    %v2074 = vunpack.c.l.b16 %v1730
    %v2075 = vunpack.c.h.b16 %v1730
    %v2076 = vunpack.c.l.b16 %v1731
    %v2077 = vunpack.c.h.b16 %v1731
    %v2078 = vunpack.c.l.b16 %v1732
    %v2079 = vunpack.c.h.b16 %v1732
    %v2080 = vunpack.c.l.b16 %v1733
    %v2081 = vunpack.c.h.b16 %v1733
    %v2082 = vunpack.c.l.b16 %v1734
    %v2083 = vunpack.c.h.b16 %v1734
    %v2084 = vunpack.c.l.b16 %v1735
    %v2085 = vunpack.c.h.b16 %v1735
    %v2086 = vunpack.c.l.b16 %v1736
    %v2087 = vunpack.c.h.b16 %v1736
    %v2088 = vunpack.c.l.b16 %v1737
    %v2089 = vunpack.c.h.b16 %v1737
    %v2090 = vunpack.c.l.b16 %v1738
    %v2091 = vunpack.c.h.b16 %v1738
    %v2092 = vunpack.c.l.b16 %v1739
    %v2093 = vunpack.c.h.b16 %v1739
    %v2094 = vunpack.c.l.b16 %v1740
    %v2095 = vunpack.c.h.b16 %v1740
    %v2096 = vunpack.c.l.b16 %v1741
    %v2097 = vunpack.c.h.b16 %v1741
    %v2098 = vunpack.c.l.b16 %v1742
    %v2099 = vunpack.c.h.b16 %v1742
    %v2100 = vunpack.c.l.b16 %v1743
    %v2101 = vunpack.c.h.b16 %v1743
    %v2102 = vunpack.c.l.b16 %v1744
    %v2103 = vunpack.c.h.b16 %v1744
    %v2104 = vunpack.c.l.b16 %v1745
    %v2105 = vunpack.c.h.b16 %v1745
    %v2106 = vunpack.c.l.b16 %v1746
    %v2107 = vunpack.c.h.b16 %v1746
    %v2108 = vunpack.c.l.b16 %v1747
    %v2109 = vunpack.c.h.b16 %v1747
    %v2110 = vunpack.c.l.b16 %v1748
    %v2111 = vunpack.c.h.b16 %v1748
    %v2112 = vunpack.c.l.b16 %v1749
    %v2113 = vunpack.c.h.b16 %v1749
    %v2114 = vunpack.c.l.b16 %v1750
    %v2115 = vunpack.c.h.b16 %v1750
    %v2116 = vunpack.c.l.b16 %v1751
    %v2117 = vunpack.c.h.b16 %v1751
    %v2118 = vunpack.c.l.b16 %v1752
    %v2119 = vunpack.c.h.b16 %v1752
    %v2120 = vunpack.c.l.b16 %v1753
    %v2121 = vunpack.c.h.b16 %v1753
    %v2122 = vunpack.c.l.b16 %v1754
    %v2123 = vunpack.c.h.b16 %v1754
    %v2124 = vunpack.c.l.b16 %v1755
    %v2125 = vunpack.c.h.b16 %v1755
    %v2126 = vunpack.c.l.b16 %v1756
    %v2127 = vunpack.c.h.b16 %v1756
    %v2128 = vunpack.c.l.b16 %v1757
    %v2129 = vunpack.c.h.b16 %v1757
    %v2130 = vunpack.c.l.b16 %v1758
    %v2131 = vunpack.c.h.b16 %v1758
    %v2132 = vunpack.c.l.b16 %v1759
    %v2133 = vunpack.c.h.b16 %v1759
    %v2134 = vunpack.c.l.b16 %v1760
    %v2135 = vunpack.c.h.b16 %v1760
    %v2136 = vunpack.c.l.b16 %v1761
    %v2137 = vunpack.c.h.b16 %v1761
    %v2138 = vunpack.c.l.b16 %v1762
    %v2139 = vunpack.c.h.b16 %v1762
    %v2140 = vunpack.c.l.b16 %v1763
    %v2141 = vunpack.c.h.b16 %v1763
    %v2142 = vunpack.c.l.b16 %v1764
    %v2143 = vunpack.c.h.b16 %v1764
    %v2144 = vunpack.c.l.b16 %v1765
    %v2145 = vunpack.c.h.b16 %v1765
    %v2146 = vunpack.c.l.b16 %v1766
    %v2147 = vunpack.c.h.b16 %v1766
    %v2148 = vunpack.c.l.b16 %v1767
    %v2149 = vunpack.c.h.b16 %v1767
    %v2150 = vunpack.c.l.b16 %v1768
    %v2151 = vunpack.c.h.b16 %v1768
    %v2152 = vunpack.c.l.b16 %v1769
    %v2153 = vunpack.c.h.b16 %v1769
    %v2154 = vunpack.c.l.b16 %v1770
    %v2155 = vunpack.c.h.b16 %v1770
    %v2156 = vunpack.c.l.b16 %v1771
    %v2157 = vunpack.c.h.b16 %v1771
    %v2158 = vunpack.c.l.b16 %v1772
    %v2159 = vunpack.c.h.b16 %v1772
    %v2160 = vunpack.c.l.b16 %v1773
    %v2161 = vunpack.c.h.b16 %v1773
    %v2162 = vunpack.c.l.b16 %v1774
    %v2163 = vunpack.c.h.b16 %v1774
    %v2164 = vunpack.c.l.b16 %v1775
    %v2165 = vunpack.c.h.b16 %v1775
    %v2166 = vunpack.c.l.b16 %v1776
    %v2167 = vunpack.c.h.b16 %v1776
    %v2168 = vunpack.c.l.b16 %v1777
    %v2169 = vunpack.c.h.b16 %v1777
    %v2170 = vunpack.c.l.b16 %v1778
    %v2171 = vunpack.c.h.b16 %v1778
    %v2172 = vunpack.c.l.b16 %v1779
    %v2173 = vunpack.c.h.b16 %v1779
    %v2174 = vunpack.c.l.b16 %v1780
    %v2175 = vunpack.c.h.b16 %v1780
    %v2176 = vunpack.c.l.b16 %v1781
    %v2177 = vunpack.c.h.b16 %v1781
    %v2178 = vunpack.c.l.b16 %v1782
    %v2179 = vunpack.c.h.b16 %v1782
    %v2180 = vunpack.c.l.b16 %v1783
    %v2181 = vunpack.c.h.b16 %v1783
    %v2182 = vunpack.c.l.b16 %v1784
    %v2183 = vunpack.c.h.b16 %v1784
    %v2184 = vunpack.c.l.b16 %v1785
    %v2185 = vunpack.c.h.b16 %v1785
    %v2186 = vunpack.c.l.b16 %v1786
    %v2187 = vunpack.c.h.b16 %v1786
    %v2188 = vunpack.c.l.b16 %v1787
    %v2189 = vunpack.c.h.b16 %v1787
    %v2190 = vunpack.c.l.b16 %v1788
    %v2191 = vunpack.c.h.b16 %v1788
    %v2192 = vunpack.c.l.b16 %v1789
    %v2193 = vunpack.c.h.b16 %v1789
    %v2194 = vunpack.c.l.b16 %v1790
    %v2195 = vunpack.c.h.b16 %v1790
    %v2196 = vunpack.c.l.b16 %v1791
    %v2197 = vunpack.c.h.b16 %v1791
    %v2198 = vpack.c.b16 %v1946, %v1942
    %v2199 = vpack.c.b16 %v1947, %v1943
    %v2200 = vpack.c.b16 %v1948, %v1944
    %v2201 = vpack.c.b16 %v1949, %v1945
    %v2202 = vpack.c.b16 %v1954, %v1950
    %v2203 = vpack.c.b16 %v1955, %v1951
    %v2204 = vpack.c.b16 %v1956, %v1952
    %v2205 = vpack.c.b16 %v1957, %v1953
    %v2206 = vpack.c.b16 %v1962, %v1958
    %v2207 = vpack.c.b16 %v1963, %v1959
    %v2208 = vpack.c.b16 %v1964, %v1960
    %v2209 = vpack.c.b16 %v1965, %v1961
    %v2210 = vpack.c.b16 %v1970, %v1966
    %v2211 = vpack.c.b16 %v1971, %v1967
    %v2212 = vpack.c.b16 %v1972, %v1968
    %v2213 = vpack.c.b16 %v1973, %v1969
    %v2214 = vpack.c.b16 %v1978, %v1974
    %v2215 = vpack.c.b16 %v1979, %v1975
    %v2216 = vpack.c.b16 %v1980, %v1976
    %v2217 = vpack.c.b16 %v1981, %v1977
    %v2218 = vpack.c.b16 %v1986, %v1982
    %v2219 = vpack.c.b16 %v1987, %v1983
    %v2220 = vpack.c.b16 %v1988, %v1984
    %v2221 = vpack.c.b16 %v1989, %v1985
    %v2222 = vpack.c.b16 %v1994, %v1990
    %v2223 = vpack.c.b16 %v1995, %v1991
    %v2224 = vpack.c.b16 %v1996, %v1992
    %v2225 = vpack.c.b16 %v1997, %v1993
    %v2226 = vpack.c.b16 %v2002, %v1998
    %v2227 = vpack.c.b16 %v2003, %v1999
    %v2228 = vpack.c.b16 %v2004, %v2000
    %v2229 = vpack.c.b16 %v2005, %v2001
    %v2230 = vpack.c.b16 %v2010, %v2006
    %v2231 = vpack.c.b16 %v2011, %v2007
    %v2232 = vpack.c.b16 %v2012, %v2008
    %v2233 = vpack.c.b16 %v2013, %v2009
    %v2234 = vpack.c.b16 %v2018, %v2014
    %v2235 = vpack.c.b16 %v2019, %v2015
    %v2236 = vpack.c.b16 %v2020, %v2016
    %v2237 = vpack.c.b16 %v2021, %v2017
    %v2238 = vpack.c.b16 %v2026, %v2022
    %v2239 = vpack.c.b16 %v2027, %v2023
    %v2240 = vpack.c.b16 %v2028, %v2024
    %v2241 = vpack.c.b16 %v2029, %v2025
    %v2242 = vpack.c.b16 %v2034, %v2030
    %v2243 = vpack.c.b16 %v2035, %v2031
    %v2244 = vpack.c.b16 %v2036, %v2032
    %v2245 = vpack.c.b16 %v2037, %v2033
    %v2246 = vpack.c.b16 %v2042, %v2038
    %v2247 = vpack.c.b16 %v2043, %v2039
    %v2248 = vpack.c.b16 %v2044, %v2040
    %v2249 = vpack.c.b16 %v2045, %v2041
    %v2250 = vpack.c.b16 %v2050, %v2046
    %v2251 = vpack.c.b16 %v2051, %v2047
    %v2252 = vpack.c.b16 %v2052, %v2048
    %v2253 = vpack.c.b16 %v2053, %v2049
    %v2254 = vpack.c.b16 %v2058, %v2054
    %v2255 = vpack.c.b16 %v2059, %v2055
    %v2256 = vpack.c.b16 %v2060, %v2056
    %v2257 = vpack.c.b16 %v2061, %v2057
    %v2258 = vpack.c.b16 %v2066, %v2062
    %v2259 = vpack.c.b16 %v2067, %v2063
    %v2260 = vpack.c.b16 %v2068, %v2064
    %v2261 = vpack.c.b16 %v2069, %v2065
    %v2262 = vpack.c.b16 %v2074, %v2070
    %v2263 = vpack.c.b16 %v2075, %v2071
    %v2264 = vpack.c.b16 %v2076, %v2072
    %v2265 = vpack.c.b16 %v2077, %v2073
    %v2266 = vpack.c.b16 %v2082, %v2078
    %v2267 = vpack.c.b16 %v2083, %v2079
    %v2268 = vpack.c.b16 %v2084, %v2080
    %v2269 = vpack.c.b16 %v2085, %v2081
    %v2270 = vpack.c.b16 %v2090, %v2086
    %v2271 = vpack.c.b16 %v2091, %v2087
    %v2272 = vpack.c.b16 %v2092, %v2088
    %v2273 = vpack.c.b16 %v2093, %v2089
    %v2274 = vpack.c.b16 %v2098, %v2094
    %v2275 = vpack.c.b16 %v2099, %v2095
    %v2276 = vpack.c.b16 %v2100, %v2096
    %v2277 = vpack.c.b16 %v2101, %v2097
    %v2278 = vpack.c.b16 %v2106, %v2102
    %v2279 = vpack.c.b16 %v2107, %v2103
    %v2280 = vpack.c.b16 %v2108, %v2104
    %v2281 = vpack.c.b16 %v2109, %v2105
    %v2282 = vpack.c.b16 %v2114, %v2110
    %v2283 = vpack.c.b16 %v2115, %v2111
    %v2284 = vpack.c.b16 %v2116, %v2112
    %v2285 = vpack.c.b16 %v2117, %v2113
    %v2286 = vpack.c.b16 %v2122, %v2118
    %v2287 = vpack.c.b16 %v2123, %v2119
    %v2288 = vpack.c.b16 %v2124, %v2120
    %v2289 = vpack.c.b16 %v2125, %v2121
    %v2290 = vpack.c.b16 %v2130, %v2126
    %v2291 = vpack.c.b16 %v2131, %v2127
    %v2292 = vpack.c.b16 %v2132, %v2128
    %v2293 = vpack.c.b16 %v2133, %v2129
    %v2294 = vpack.c.b16 %v2138, %v2134
    %v2295 = vpack.c.b16 %v2139, %v2135
    %v2296 = vpack.c.b16 %v2140, %v2136
    %v2297 = vpack.c.b16 %v2141, %v2137
    %v2298 = vpack.c.b16 %v2146, %v2142
    %v2299 = vpack.c.b16 %v2147, %v2143
    %v2300 = vpack.c.b16 %v2148, %v2144
    %v2301 = vpack.c.b16 %v2149, %v2145
    %v2302 = vpack.c.b16 %v2154, %v2150
    %v2303 = vpack.c.b16 %v2155, %v2151
    %v2304 = vpack.c.b16 %v2156, %v2152
    %v2305 = vpack.c.b16 %v2157, %v2153
    %v2306 = vpack.c.b16 %v2162, %v2158
    %v2307 = vpack.c.b16 %v2163, %v2159
    %v2308 = vpack.c.b16 %v2164, %v2160
    %v2309 = vpack.c.b16 %v2165, %v2161
    %v2310 = vpack.c.b16 %v2170, %v2166
    %v2311 = vpack.c.b16 %v2171, %v2167
    %v2312 = vpack.c.b16 %v2172, %v2168
    %v2313 = vpack.c.b16 %v2173, %v2169
    %v2314 = vpack.c.b16 %v2178, %v2174
    %v2315 = vpack.c.b16 %v2179, %v2175
    %v2316 = vpack.c.b16 %v2180, %v2176
    %v2317 = vpack.c.b16 %v2181, %v2177
    %v2318 = vpack.c.b16 %v2186, %v2182
    %v2319 = vpack.c.b16 %v2187, %v2183
    %v2320 = vpack.c.b16 %v2188, %v2184
    %v2321 = vpack.c.b16 %v2189, %v2185
    %v2322 = vpack.c.b16 %v2194, %v2190
    %v2323 = vpack.c.b16 %v2195, %v2191
    %v2324 = vpack.c.b16 %v2196, %v2192
    %v2325 = vpack.c.b16 %v2197, %v2193
    %2454 = vmatprep.subr.bf16.mxu0 %v2199
    %2455 = vmatpush1.bf16.msra.mxu0 %v2198
    %2456 = vmatprep.subr.bf16.mxu0 %v2203
    %2457 = vmatpush1.bf16.msra.mxu0 %v2202
    %2458 = vmatprep.subr.bf16.mxu0 %v2207
    %2459 = vmatpush1.bf16.msra.mxu0 %v2206
    %2460 = vmatprep.subr.bf16.mxu0 %v2211
    %2461 = vmatpush1.bf16.msra.mxu0 %v2210
    %2462 = vmatprep.subr.bf16.mxu0 %v2215
    %2463 = vmatpush1.bf16.msra.mxu0 %v2214
    %2464 = vmatprep.subr.bf16.mxu0 %v2219
    %2465 = vmatpush1.bf16.msra.mxu0 %v2218
    %2466 = vmatprep.subr.bf16.mxu0 %v2223
    %2467 = vmatpush1.bf16.msra.mxu0 %v2222
    %2468 = vmatprep.subr.bf16.mxu0 %v2227
    %2469 = vmatpush1.bf16.msra.mxu0 %v2226
    %2470 = vmatprep.subr.bf16.mxu0 %v2231
    %2471 = vmatpush1.bf16.msra.mxu0 %v2230
    %2472 = vmatprep.subr.bf16.mxu0 %v2235
    %2473 = vmatpush1.bf16.msra.mxu0 %v2234
    %2474 = vmatprep.subr.bf16.mxu0 %v2239
    %2475 = vmatpush1.bf16.msra.mxu0 %v2238
    %2476 = vmatprep.subr.bf16.mxu0 %v2243
    %2477 = vmatpush1.bf16.msra.mxu0 %v2242
    %2478 = vmatprep.subr.bf16.mxu0 %v2247
    %2479 = vmatpush1.bf16.msra.mxu0 %v2246
    %2480 = vmatprep.subr.bf16.mxu0 %v2251
    %2481 = vmatpush1.bf16.msra.mxu0 %v2250
    %2482 = vmatprep.subr.bf16.mxu0 %v2255
    %2483 = vmatpush1.bf16.msra.mxu0 %v2254
    %2484 = vmatprep.subr.bf16.mxu0 %v2259
    %2485 = vmatpush1.bf16.msra.mxu0 %v2258
    %2486 = vmatprep.mubr.bf16.mxu0 %v1661
    %2487 = vmatmul.mubr.bf16.gmra.mrb[0].mxu0 %v1660
    %v2488 = vpop.f32.mrb[0].mxu0
    %v2489 = vadd.f32 %v1797, %v2488
    %v2490 = vpop.f32.mrb[0].mxu0
    %v2491 = vadd.f32 %v1801, %v2490
    %v2492 = vpop.f32.mrb[0].mxu0
    %v2493 = vpop.f32.mrb[0].mxu0
    %2494 = vdwg.mxu0
    %2495 = vmatprep.subr.bf16.mxu0 %v2263
    %2496 = vmatpush1.bf16.msra.mxu0 %v2262
    %2497 = vmatprep.subr.bf16.mxu0 %v2267
    %2498 = vmatpush1.bf16.msra.mxu0 %v2266
    %2499 = vmatprep.subr.bf16.mxu0 %v2271
    %2500 = vmatpush1.bf16.msra.mxu0 %v2270
    %2501 = vmatprep.subr.bf16.mxu0 %v2275
    %2502 = vmatpush1.bf16.msra.mxu0 %v2274
    %2503 = vmatprep.subr.bf16.mxu0 %v2279
    %2504 = vmatpush1.bf16.msra.mxu0 %v2278
    %2505 = vmatprep.subr.bf16.mxu0 %v2283
    %2506 = vmatpush1.bf16.msra.mxu0 %v2282
    %2507 = vmatprep.subr.bf16.mxu0 %v2287
    %2508 = vmatpush1.bf16.msra.mxu0 %v2286
    %2509 = vmatprep.subr.bf16.mxu0 %v2291
    %2510 = vmatpush1.bf16.msra.mxu0 %v2290
    %2511 = vmatprep.subr.bf16.mxu0 %v2295
    %2512 = vmatpush1.bf16.msra.mxu0 %v2294
    %2513 = vmatprep.subr.bf16.mxu0 %v2299
    %2514 = vmatpush1.bf16.msra.mxu0 %v2298
    %2515 = vmatprep.subr.bf16.mxu0 %v2303
    %2516 = vmatpush1.bf16.msra.mxu0 %v2302
    %2517 = vmatprep.subr.bf16.mxu0 %v2307
    %2518 = vmatpush1.bf16.msra.mxu0 %v2306
    %2519 = vmatprep.subr.bf16.mxu0 %v2311
    %2520 = vmatpush1.bf16.msra.mxu0 %v2310
    %2521 = vmatprep.subr.bf16.mxu0 %v2315
    %2522 = vmatpush1.bf16.msra.mxu0 %v2314
    %2523 = vmatprep.subr.bf16.mxu0 %v2319
    %2524 = vmatpush1.bf16.msra.mxu0 %v2318
    %2525 = vmatprep.subr.bf16.mxu0 %v2323
    %2526 = vmatpush1.bf16.msra.mxu0 %v2322
    %2527 = vmatprep.mubr.bf16.mxu0 %v1663
    %2528 = vmatmul.mubr.bf16.gmra.mrb[0].mxu0 %v1662
    %v2529 = vpop.f32.mrb[0].mxu0
    %v2530 = vadd.f32 %v2489, %v2529
    %v2531 = vpop.f32.mrb[0].mxu0
    %v2532 = vadd.f32 %v2491, %v2531
    %v2533 = vpop.f32.mrb[0].mxu0
    %v2534 = vpop.f32.mrb[0].mxu0
    %2535 = vdwg.mxu0
    %2536 = vmatprep.subr.bf16.mxu0 %v2201
    %2537 = vmatpush1.bf16.msra.mxu0 %v2200
    %2538 = vmatprep.subr.bf16.mxu0 %v2205
    %2539 = vmatpush1.bf16.msra.mxu0 %v2204
    %2540 = vmatprep.subr.bf16.mxu0 %v2209
    %2541 = vmatpush1.bf16.msra.mxu0 %v2208
    %2542 = vmatprep.subr.bf16.mxu0 %v2213
    %2543 = vmatpush1.bf16.msra.mxu0 %v2212
    %2544 = vmatprep.subr.bf16.mxu0 %v2217
    %2545 = vmatpush1.bf16.msra.mxu0 %v2216
    %2546 = vmatprep.subr.bf16.mxu0 %v2221
    %2547 = vmatpush1.bf16.msra.mxu0 %v2220
    %2548 = vmatprep.subr.bf16.mxu0 %v2225
    %2549 = vmatpush1.bf16.msra.mxu0 %v2224
    %2550 = vmatprep.subr.bf16.mxu0 %v2229
    %2551 = vmatpush1.bf16.msra.mxu0 %v2228
    %2552 = vmatprep.subr.bf16.mxu0 %v2233
    %2553 = vmatpush1.bf16.msra.mxu0 %v2232
    %2554 = vmatprep.subr.bf16.mxu0 %v2237
    %2555 = vmatpush1.bf16.msra.mxu0 %v2236
    %2556 = vmatprep.subr.bf16.mxu0 %v2241
    %2557 = vmatpush1.bf16.msra.mxu0 %v2240
    %2558 = vmatprep.subr.bf16.mxu0 %v2245
    %2559 = vmatpush1.bf16.msra.mxu0 %v2244
    %2560 = vmatprep.subr.bf16.mxu0 %v2249
    %2561 = vmatpush1.bf16.msra.mxu0 %v2248
    %2562 = vmatprep.subr.bf16.mxu0 %v2253
    %2563 = vmatpush1.bf16.msra.mxu0 %v2252
    %2564 = vmatprep.subr.bf16.mxu0 %v2257
    %2565 = vmatpush1.bf16.msra.mxu0 %v2256
    %2566 = vmatprep.subr.bf16.mxu0 %v2261
    %2567 = vmatpush1.bf16.msra.mxu0 %v2260
    %2568 = vmatprep.mubr.bf16.mxu0 %v1661
    %2569 = vmatmul.mubr.bf16.gmra.mrb[0].mxu0 %v1660
    %v2570 = vpop.f32.mrb[0].mxu0
    %v2571 = vadd.f32 %v1805, %v2570
    %v2572 = vpop.f32.mrb[0].mxu0
    %v2573 = vadd.f32 %v1809, %v2572
    %v2574 = vpop.f32.mrb[0].mxu0
    %v2575 = vpop.f32.mrb[0].mxu0
    %2576 = vdwg.mxu0
    %2577 = vmatprep.subr.bf16.mxu0 %v2265
    %2578 = vmatpush1.bf16.msra.mxu0 %v2264
    %2579 = vmatprep.subr.bf16.mxu0 %v2269
    %2580 = vmatpush1.bf16.msra.mxu0 %v2268
    %2581 = vmatprep.subr.bf16.mxu0 %v2273
    %2582 = vmatpush1.bf16.msra.mxu0 %v2272
    %2583 = vmatprep.subr.bf16.mxu0 %v2277
    %2584 = vmatpush1.bf16.msra.mxu0 %v2276
    %2585 = vmatprep.subr.bf16.mxu0 %v2281
    %2586 = vmatpush1.bf16.msra.mxu0 %v2280
    %2587 = vmatprep.subr.bf16.mxu0 %v2285
    %2588 = vmatpush1.bf16.msra.mxu0 %v2284
    %2589 = vmatprep.subr.bf16.mxu0 %v2289
    %2590 = vmatpush1.bf16.msra.mxu0 %v2288
    %2591 = vmatprep.subr.bf16.mxu0 %v2293
    %2592 = vmatpush1.bf16.msra.mxu0 %v2292
    %2593 = vmatprep.subr.bf16.mxu0 %v2297
    %2594 = vmatpush1.bf16.msra.mxu0 %v2296
    %2595 = vmatprep.subr.bf16.mxu0 %v2301
    %2596 = vmatpush1.bf16.msra.mxu0 %v2300
    %2597 = vmatprep.subr.bf16.mxu0 %v2305
    %2598 = vmatpush1.bf16.msra.mxu0 %v2304
    %2599 = vmatprep.subr.bf16.mxu0 %v2309
    %2600 = vmatpush1.bf16.msra.mxu0 %v2308
    %2601 = vmatprep.subr.bf16.mxu0 %v2313
    %2602 = vmatpush1.bf16.msra.mxu0 %v2312
    %2603 = vmatprep.subr.bf16.mxu0 %v2317
    %2604 = vmatpush1.bf16.msra.mxu0 %v2316
    %2605 = vmatprep.subr.bf16.mxu0 %v2321
    %2606 = vmatpush1.bf16.msra.mxu0 %v2320
    %2607 = vmatprep.subr.bf16.mxu0 %v2325
    %2608 = vmatpush1.bf16.msra.mxu0 %v2324
    %2609 = vmatprep.mubr.bf16.mxu0 %v1663
    %2610 = vmatmul.mubr.bf16.gmra.mrb[0].mxu0 %v1662
    %v2611 = vpop.f32.mrb[0].mxu0
    %v2612 = vadd.f32 %v2571, %v2611
    %v2613 = vpop.f32.mrb[0].mxu0
    %v2614 = vadd.f32 %v2573, %v2613
    %v2615 = vpop.f32.mrb[0].mxu0
    %v2616 = vpop.f32.mrb[0].mxu0
    %2617 = vdwg.mxu0
    %v2618 = vmax.f32 %v2530, 0.0
    %v2619 = vmax.f32 %v2532, 0.0
    %v2620 = vmax.f32 %v2612, 0.0
    %v2621 = vmax.f32 %v2614, 0.0
    %v2622 = vpack.c.bf16 %v2618, %v2618
    %v2623 = vpack.c.bf16 %v2619, %v2619
    %v2624 = vpack.c.bf16 %v2620, %v2620
    %v2625 = vpack.c.bf16 %v2621, %v2621
    %v2626 = vld [vmem:[#allocation10] sm:$0xff]
    %v2627 = vld [vmem:[#allocation10 + $0x8] sm:$0xff]
    %v2628 = vld [vmem:[#allocation10 + $0x10] sm:$0xff]
    %v2629 = vld [vmem:[#allocation10 + $0x18] sm:$0xff]
    %v2630 = vld [vmem:[#allocation10 + $0x20] sm:$0xff]
    %v2631 = vld [vmem:[#allocation10 + $0x28] sm:$0xff]
    %v2632 = vld [vmem:[#allocation10 + $0x30] sm:$0xff]
    %v2633 = vld [vmem:[#allocation10 + $0x38] sm:$0xff]
    %v2634 = vld [vmem:[#allocation10 + $0x40] sm:$0xff]
    %v2635 = vld [vmem:[#allocation10 + $0x48] sm:$0xff]
    %v2636 = vld [vmem:[#allocation10 + $0x50] sm:$0xff]
    %v2637 = vld [vmem:[#allocation10 + $0x58] sm:$0xff]
    %v2638 = vld [vmem:[#allocation10 + $0x60] sm:$0xff]
    %v2639 = vld [vmem:[#allocation10 + $0x68] sm:$0xff]
    %v2640 = vld [vmem:[#allocation10 + $0x70] sm:$0xff]
    %v2641 = vld [vmem:[#allocation10 + $0x78] sm:$0xff]
    %v2642 = vld [vmem:[#allocation10 + $0x80] sm:$0xff]
    %v2643 = vld [vmem:[#allocation10 + $0x88] sm:$0xff]
    %v2644 = vld [vmem:[#allocation10 + $0x90] sm:$0xff]
    %v2645 = vld [vmem:[#allocation10 + $0x98] sm:$0xff]
    %v2646 = vld [vmem:[#allocation10 + $0xa0] sm:$0xff]
    %v2647 = vld [vmem:[#allocation10 + $0xa8] sm:$0xff]
    %v2648 = vld [vmem:[#allocation10 + $0xb0] sm:$0xff]
    %v2649 = vld [vmem:[#allocation10 + $0xb8] sm:$0xff]
    %v2650 = vld [vmem:[#allocation10 + $0xc0] sm:$0xff]
    %v2651 = vld [vmem:[#allocation10 + $0xc8] sm:$0xff]
    %v2652 = vld [vmem:[#allocation10 + $0xd0] sm:$0xff]
    %v2653 = vld [vmem:[#allocation10 + $0xd8] sm:$0xff]
    %v2654 = vld [vmem:[#allocation10 + $0xe0] sm:$0xff]
    %v2655 = vld [vmem:[#allocation10 + $0xe8] sm:$0xff]
    %v2656 = vld [vmem:[#allocation10 + $0xf0] sm:$0xff]
    %v2657 = vld [vmem:[#allocation10 + $0xf8] sm:$0xff]
    %v2658 = vld [vmem:[#allocation10 + $0x100] sm:$0xff]
    %v2659 = vld [vmem:[#allocation10 + $0x108] sm:$0xff]
    %v2660 = vld [vmem:[#allocation10 + $0x110] sm:$0xff]
    %v2661 = vld [vmem:[#allocation10 + $0x118] sm:$0xff]
    %v2662 = vld [vmem:[#allocation10 + $0x120] sm:$0xff]
    %v2663 = vld [vmem:[#allocation10 + $0x128] sm:$0xff]
    %v2664 = vld [vmem:[#allocation10 + $0x130] sm:$0xff]
    %v2665 = vld [vmem:[#allocation10 + $0x138] sm:$0xff]
    %v2666 = vld [vmem:[#allocation10 + $0x140] sm:$0xff]
    %v2667 = vld [vmem:[#allocation10 + $0x148] sm:$0xff]
    %v2668 = vld [vmem:[#allocation10 + $0x150] sm:$0xff]
    %v2669 = vld [vmem:[#allocation10 + $0x158] sm:$0xff]
    %v2670 = vld [vmem:[#allocation10 + $0x160] sm:$0xff]
    %v2671 = vld [vmem:[#allocation10 + $0x168] sm:$0xff]
    %v2672 = vld [vmem:[#allocation10 + $0x170] sm:$0xff]
    %v2673 = vld [vmem:[#allocation10 + $0x178] sm:$0xff]
    %v2674 = vld [vmem:[#allocation10 + $0x180] sm:$0xff]
    %v2675 = vld [vmem:[#allocation10 + $0x188] sm:$0xff]
    %v2676 = vld [vmem:[#allocation10 + $0x190] sm:$0xff]
    %v2677 = vld [vmem:[#allocation10 + $0x198] sm:$0xff]
    %v2678 = vld [vmem:[#allocation10 + $0x1a0] sm:$0xff]
    %v2679 = vld [vmem:[#allocation10 + $0x1a8] sm:$0xff]
    %v2680 = vld [vmem:[#allocation10 + $0x1b0] sm:$0xff]
    %v2681 = vld [vmem:[#allocation10 + $0x1b8] sm:$0xff]
    %v2682 = vld [vmem:[#allocation10 + $0x1c0] sm:$0xff]
    %v2683 = vld [vmem:[#allocation10 + $0x1c8] sm:$0xff]
    %v2684 = vld [vmem:[#allocation10 + $0x1d0] sm:$0xff]
    %v2685 = vld [vmem:[#allocation10 + $0x1d8] sm:$0xff]
    %v2686 = vld [vmem:[#allocation10 + $0x1e0] sm:$0xff]
    %v2687 = vld [vmem:[#allocation10 + $0x1e8] sm:$0xff]
    %v2688 = vld [vmem:[#allocation10 + $0x1f0] sm:$0xff]
    %v2689 = vld [vmem:[#allocation10 + $0x1f8] sm:$0xff]
    %v2690 = vld [vmem:[#allocation10 + $0x200] sm:$0xff]
    %v2691 = vld [vmem:[#allocation10 + $0x208] sm:$0xff]
    %v2692 = vld [vmem:[#allocation10 + $0x210] sm:$0xff]
    %v2693 = vld [vmem:[#allocation10 + $0x218] sm:$0xff]
    %v2694 = vld [vmem:[#allocation10 + $0x220] sm:$0xff]
    %v2695 = vld [vmem:[#allocation10 + $0x228] sm:$0xff]
    %v2696 = vld [vmem:[#allocation10 + $0x230] sm:$0xff]
    %v2697 = vld [vmem:[#allocation10 + $0x238] sm:$0xff]
    %v2698 = vld [vmem:[#allocation10 + $0x240] sm:$0xff]
    %v2699 = vld [vmem:[#allocation10 + $0x248] sm:$0xff]
    %v2700 = vld [vmem:[#allocation10 + $0x250] sm:$0xff]
    %v2701 = vld [vmem:[#allocation10 + $0x258] sm:$0xff]
    %v2702 = vld [vmem:[#allocation10 + $0x260] sm:$0xff]
    %v2703 = vld [vmem:[#allocation10 + $0x268] sm:$0xff]
    %v2704 = vld [vmem:[#allocation10 + $0x270] sm:$0xff]
    %v2705 = vld [vmem:[#allocation10 + $0x278] sm:$0xff]
    %v2706 = vld [vmem:[#allocation10 + $0x280] sm:$0xff]
    %v2707 = vld [vmem:[#allocation10 + $0x288] sm:$0xff]
    %v2708 = vld [vmem:[#allocation10 + $0x290] sm:$0xff]
    %v2709 = vld [vmem:[#allocation10 + $0x298] sm:$0xff]
    %v2710 = vld [vmem:[#allocation10 + $0x2a0] sm:$0xff]
    %v2711 = vld [vmem:[#allocation10 + $0x2a8] sm:$0xff]
    %v2712 = vld [vmem:[#allocation10 + $0x2b0] sm:$0xff]
    %v2713 = vld [vmem:[#allocation10 + $0x2b8] sm:$0xff]
    %v2714 = vld [vmem:[#allocation10 + $0x2c0] sm:$0xff]
    %v2715 = vld [vmem:[#allocation10 + $0x2c8] sm:$0xff]
    %v2716 = vld [vmem:[#allocation10 + $0x2d0] sm:$0xff]
    %v2717 = vld [vmem:[#allocation10 + $0x2d8] sm:$0xff]
    %v2718 = vld [vmem:[#allocation10 + $0x2e0] sm:$0xff]
    %v2719 = vld [vmem:[#allocation10 + $0x2e8] sm:$0xff]
    %v2720 = vld [vmem:[#allocation10 + $0x2f0] sm:$0xff]
    %v2721 = vld [vmem:[#allocation10 + $0x2f8] sm:$0xff]
    %v2722 = vld [vmem:[#allocation10 + $0x300] sm:$0xff]
    %v2723 = vld [vmem:[#allocation10 + $0x308] sm:$0xff]
    %v2724 = vld [vmem:[#allocation10 + $0x310] sm:$0xff]
    %v2725 = vld [vmem:[#allocation10 + $0x318] sm:$0xff]
    %v2726 = vld [vmem:[#allocation10 + $0x320] sm:$0xff]
    %v2727 = vld [vmem:[#allocation10 + $0x328] sm:$0xff]
    %v2728 = vld [vmem:[#allocation10 + $0x330] sm:$0xff]
    %v2729 = vld [vmem:[#allocation10 + $0x338] sm:$0xff]
    %v2730 = vld [vmem:[#allocation10 + $0x340] sm:$0xff]
    %v2731 = vld [vmem:[#allocation10 + $0x348] sm:$0xff]
    %v2732 = vld [vmem:[#allocation10 + $0x350] sm:$0xff]
    %v2733 = vld [vmem:[#allocation10 + $0x358] sm:$0xff]
    %v2734 = vld [vmem:[#allocation10 + $0x360] sm:$0xff]
    %v2735 = vld [vmem:[#allocation10 + $0x368] sm:$0xff]
    %v2736 = vld [vmem:[#allocation10 + $0x370] sm:$0xff]
    %v2737 = vld [vmem:[#allocation10 + $0x378] sm:$0xff]
    %v2738 = vld [vmem:[#allocation10 + $0x380] sm:$0xff]
    %v2739 = vld [vmem:[#allocation10 + $0x388] sm:$0xff]
    %v2740 = vld [vmem:[#allocation10 + $0x390] sm:$0xff]
    %v2741 = vld [vmem:[#allocation10 + $0x398] sm:$0xff]
    %v2742 = vld [vmem:[#allocation10 + $0x3a0] sm:$0xff]
    %v2743 = vld [vmem:[#allocation10 + $0x3a8] sm:$0xff]
    %v2744 = vld [vmem:[#allocation10 + $0x3b0] sm:$0xff]
    %v2745 = vld [vmem:[#allocation10 + $0x3b8] sm:$0xff]
    %v2746 = vld [vmem:[#allocation10 + $0x3c0] sm:$0xff]
    %v2747 = vld [vmem:[#allocation10 + $0x3c8] sm:$0xff]
    %v2748 = vld [vmem:[#allocation10 + $0x3d0] sm:$0xff]
    %v2749 = vld [vmem:[#allocation10 + $0x3d8] sm:$0xff]
    %v2750 = vld [vmem:[#allocation10 + $0x3e0] sm:$0xff]
    %v2751 = vld [vmem:[#allocation10 + $0x3e8] sm:$0xff]
    %v2752 = vld [vmem:[#allocation10 + $0x3f0] sm:$0xff]
    %v2753 = vld [vmem:[#allocation10 + $0x3f8] sm:$0xff]
    %v2754 = vld [vmem:[%s6] sm:$0xf]
    %v2756 = vlaneseq
    %v2757 = vshrl.u32 %v2756, 7
    %v2758 = vsub.s32 0, %v2757
    %v2759 = vrot.slane %v2754, %v2758
    %v2760 = vlaneseq
    %v2761 = vshrl.u32 %v2760, 7
    %v2762 = vsub.s32 1, %v2761
    %v2763 = vrot.slane %v2754, %v2762
    %v2764 = vlaneseq
    %v2765 = vshrl.u32 %v2764, 7
    %v2766 = vsub.s32 2, %v2765
    %v2767 = vrot.slane %v2754, %v2766
    %v2768 = vlaneseq
    %v2769 = vshrl.u32 %v2768, 7
    %v2770 = vsub.s32 3, %v2769
    %v2771 = vrot.slane %v2754, %v2770
    %v2904 = vunpack.c.l.b16 %v2626
    %v2905 = vunpack.c.h.b16 %v2626
    %v2906 = vunpack.c.l.b16 %v2627
    %v2907 = vunpack.c.h.b16 %v2627
    %v2908 = vunpack.c.l.b16 %v2628
    %v2909 = vunpack.c.h.b16 %v2628
    %v2910 = vunpack.c.l.b16 %v2629
    %v2911 = vunpack.c.h.b16 %v2629
    %v2912 = vunpack.c.l.b16 %v2630
    %v2913 = vunpack.c.h.b16 %v2630
    %v2914 = vunpack.c.l.b16 %v2631
    %v2915 = vunpack.c.h.b16 %v2631
    %v2916 = vunpack.c.l.b16 %v2632
    %v2917 = vunpack.c.h.b16 %v2632
    %v2918 = vunpack.c.l.b16 %v2633
    %v2919 = vunpack.c.h.b16 %v2633
    %v2920 = vunpack.c.l.b16 %v2634
    %v2921 = vunpack.c.h.b16 %v2634
    %v2922 = vunpack.c.l.b16 %v2635
    %v2923 = vunpack.c.h.b16 %v2635
    %v2924 = vunpack.c.l.b16 %v2636
    %v2925 = vunpack.c.h.b16 %v2636
    %v2926 = vunpack.c.l.b16 %v2637
    %v2927 = vunpack.c.h.b16 %v2637
    %v2928 = vunpack.c.l.b16 %v2638
    %v2929 = vunpack.c.h.b16 %v2638
    %v2930 = vunpack.c.l.b16 %v2639
    %v2931 = vunpack.c.h.b16 %v2639
    %v2932 = vunpack.c.l.b16 %v2640
    %v2933 = vunpack.c.h.b16 %v2640
    %v2934 = vunpack.c.l.b16 %v2641
    %v2935 = vunpack.c.h.b16 %v2641
    %v2936 = vunpack.c.l.b16 %v2642
    %v2937 = vunpack.c.h.b16 %v2642
    %v2938 = vunpack.c.l.b16 %v2643
    %v2939 = vunpack.c.h.b16 %v2643
    %v2940 = vunpack.c.l.b16 %v2644
    %v2941 = vunpack.c.h.b16 %v2644
    %v2942 = vunpack.c.l.b16 %v2645
    %v2943 = vunpack.c.h.b16 %v2645
    %v2944 = vunpack.c.l.b16 %v2646
    %v2945 = vunpack.c.h.b16 %v2646
    %v2946 = vunpack.c.l.b16 %v2647
    %v2947 = vunpack.c.h.b16 %v2647
    %v2948 = vunpack.c.l.b16 %v2648
    %v2949 = vunpack.c.h.b16 %v2648
    %v2950 = vunpack.c.l.b16 %v2649
    %v2951 = vunpack.c.h.b16 %v2649
    %v2952 = vunpack.c.l.b16 %v2650
    %v2953 = vunpack.c.h.b16 %v2650
    %v2954 = vunpack.c.l.b16 %v2651
    %v2955 = vunpack.c.h.b16 %v2651
    %v2956 = vunpack.c.l.b16 %v2652
    %v2957 = vunpack.c.h.b16 %v2652
    %v2958 = vunpack.c.l.b16 %v2653
    %v2959 = vunpack.c.h.b16 %v2653
    %v2960 = vunpack.c.l.b16 %v2654
    %v2961 = vunpack.c.h.b16 %v2654
    %v2962 = vunpack.c.l.b16 %v2655
    %v2963 = vunpack.c.h.b16 %v2655
    %v2964 = vunpack.c.l.b16 %v2656
    %v2965 = vunpack.c.h.b16 %v2656
    %v2966 = vunpack.c.l.b16 %v2657
    %v2967 = vunpack.c.h.b16 %v2657
    %v2968 = vunpack.c.l.b16 %v2658
    %v2969 = vunpack.c.h.b16 %v2658
    %v2970 = vunpack.c.l.b16 %v2659
    %v2971 = vunpack.c.h.b16 %v2659
    %v2972 = vunpack.c.l.b16 %v2660
    %v2973 = vunpack.c.h.b16 %v2660
    %v2974 = vunpack.c.l.b16 %v2661
    %v2975 = vunpack.c.h.b16 %v2661
    %v2976 = vunpack.c.l.b16 %v2662
    %v2977 = vunpack.c.h.b16 %v2662
    %v2978 = vunpack.c.l.b16 %v2663
    %v2979 = vunpack.c.h.b16 %v2663
    %v2980 = vunpack.c.l.b16 %v2664
    %v2981 = vunpack.c.h.b16 %v2664
    %v2982 = vunpack.c.l.b16 %v2665
    %v2983 = vunpack.c.h.b16 %v2665
    %v2984 = vunpack.c.l.b16 %v2666
    %v2985 = vunpack.c.h.b16 %v2666
    %v2986 = vunpack.c.l.b16 %v2667
    %v2987 = vunpack.c.h.b16 %v2667
    %v2988 = vunpack.c.l.b16 %v2668
    %v2989 = vunpack.c.h.b16 %v2668
    %v2990 = vunpack.c.l.b16 %v2669
    %v2991 = vunpack.c.h.b16 %v2669
    %v2992 = vunpack.c.l.b16 %v2670
    %v2993 = vunpack.c.h.b16 %v2670
    %v2994 = vunpack.c.l.b16 %v2671
    %v2995 = vunpack.c.h.b16 %v2671
    %v2996 = vunpack.c.l.b16 %v2672
    %v2997 = vunpack.c.h.b16 %v2672
    %v2998 = vunpack.c.l.b16 %v2673
    %v2999 = vunpack.c.h.b16 %v2673
    %v3000 = vunpack.c.l.b16 %v2674
    %v3001 = vunpack.c.h.b16 %v2674
    %v3002 = vunpack.c.l.b16 %v2675
    %v3003 = vunpack.c.h.b16 %v2675
    %v3004 = vunpack.c.l.b16 %v2676
    %v3005 = vunpack.c.h.b16 %v2676
    %v3006 = vunpack.c.l.b16 %v2677
    %v3007 = vunpack.c.h.b16 %v2677
    %v3008 = vunpack.c.l.b16 %v2678
    %v3009 = vunpack.c.h.b16 %v2678
    %v3010 = vunpack.c.l.b16 %v2679
    %v3011 = vunpack.c.h.b16 %v2679
    %v3012 = vunpack.c.l.b16 %v2680
    %v3013 = vunpack.c.h.b16 %v2680
    %v3014 = vunpack.c.l.b16 %v2681
    %v3015 = vunpack.c.h.b16 %v2681
    %v3016 = vunpack.c.l.b16 %v2682
    %v3017 = vunpack.c.h.b16 %v2682
    %v3018 = vunpack.c.l.b16 %v2683
    %v3019 = vunpack.c.h.b16 %v2683
    %v3020 = vunpack.c.l.b16 %v2684
    %v3021 = vunpack.c.h.b16 %v2684
    %v3022 = vunpack.c.l.b16 %v2685
    %v3023 = vunpack.c.h.b16 %v2685
    %v3024 = vunpack.c.l.b16 %v2686
    %v3025 = vunpack.c.h.b16 %v2686
    %v3026 = vunpack.c.l.b16 %v2687
    %v3027 = vunpack.c.h.b16 %v2687
    %v3028 = vunpack.c.l.b16 %v2688
    %v3029 = vunpack.c.h.b16 %v2688
    %v3030 = vunpack.c.l.b16 %v2689
    %v3031 = vunpack.c.h.b16 %v2689
    %v3032 = vunpack.c.l.b16 %v2690
    %v3033 = vunpack.c.h.b16 %v2690
    %v3034 = vunpack.c.l.b16 %v2691
    %v3035 = vunpack.c.h.b16 %v2691
    %v3036 = vunpack.c.l.b16 %v2692
    %v3037 = vunpack.c.h.b16 %v2692
    %v3038 = vunpack.c.l.b16 %v2693
    %v3039 = vunpack.c.h.b16 %v2693
    %v3040 = vunpack.c.l.b16 %v2694
    %v3041 = vunpack.c.h.b16 %v2694
    %v3042 = vunpack.c.l.b16 %v2695
    %v3043 = vunpack.c.h.b16 %v2695
    %v3044 = vunpack.c.l.b16 %v2696
    %v3045 = vunpack.c.h.b16 %v2696
    %v3046 = vunpack.c.l.b16 %v2697
    %v3047 = vunpack.c.h.b16 %v2697
    %v3048 = vunpack.c.l.b16 %v2698
    %v3049 = vunpack.c.h.b16 %v2698
    %v3050 = vunpack.c.l.b16 %v2699
    %v3051 = vunpack.c.h.b16 %v2699
    %v3052 = vunpack.c.l.b16 %v2700
    %v3053 = vunpack.c.h.b16 %v2700
    %v3054 = vunpack.c.l.b16 %v2701
    %v3055 = vunpack.c.h.b16 %v2701
    %v3056 = vunpack.c.l.b16 %v2702
    %v3057 = vunpack.c.h.b16 %v2702
    %v3058 = vunpack.c.l.b16 %v2703
    %v3059 = vunpack.c.h.b16 %v2703
    %v3060 = vunpack.c.l.b16 %v2704
    %v3061 = vunpack.c.h.b16 %v2704
    %v3062 = vunpack.c.l.b16 %v2705
    %v3063 = vunpack.c.h.b16 %v2705
    %v3064 = vunpack.c.l.b16 %v2706
    %v3065 = vunpack.c.h.b16 %v2706
    %v3066 = vunpack.c.l.b16 %v2707
    %v3067 = vunpack.c.h.b16 %v2707
    %v3068 = vunpack.c.l.b16 %v2708
    %v3069 = vunpack.c.h.b16 %v2708
    %v3070 = vunpack.c.l.b16 %v2709
    %v3071 = vunpack.c.h.b16 %v2709
    %v3072 = vunpack.c.l.b16 %v2710
    %v3073 = vunpack.c.h.b16 %v2710
    %v3074 = vunpack.c.l.b16 %v2711
    %v3075 = vunpack.c.h.b16 %v2711
    %v3076 = vunpack.c.l.b16 %v2712
    %v3077 = vunpack.c.h.b16 %v2712
    %v3078 = vunpack.c.l.b16 %v2713
    %v3079 = vunpack.c.h.b16 %v2713
    %v3080 = vunpack.c.l.b16 %v2714
    %v3081 = vunpack.c.h.b16 %v2714
    %v3082 = vunpack.c.l.b16 %v2715
    %v3083 = vunpack.c.h.b16 %v2715
    %v3084 = vunpack.c.l.b16 %v2716
    %v3085 = vunpack.c.h.b16 %v2716
    %v3086 = vunpack.c.l.b16 %v2717
    %v3087 = vunpack.c.h.b16 %v2717
    %v3088 = vunpack.c.l.b16 %v2718
    %v3089 = vunpack.c.h.b16 %v2718
    %v3090 = vunpack.c.l.b16 %v2719
    %v3091 = vunpack.c.h.b16 %v2719
    %v3092 = vunpack.c.l.b16 %v2720
    %v3093 = vunpack.c.h.b16 %v2720
    %v3094 = vunpack.c.l.b16 %v2721
    %v3095 = vunpack.c.h.b16 %v2721
    %v3096 = vunpack.c.l.b16 %v2722
    %v3097 = vunpack.c.h.b16 %v2722
    %v3098 = vunpack.c.l.b16 %v2723
    %v3099 = vunpack.c.h.b16 %v2723
    %v3100 = vunpack.c.l.b16 %v2724
    %v3101 = vunpack.c.h.b16 %v2724
    %v3102 = vunpack.c.l.b16 %v2725
    %v3103 = vunpack.c.h.b16 %v2725
    %v3104 = vunpack.c.l.b16 %v2726
    %v3105 = vunpack.c.h.b16 %v2726
    %v3106 = vunpack.c.l.b16 %v2727
    %v3107 = vunpack.c.h.b16 %v2727
    %v3108 = vunpack.c.l.b16 %v2728
    %v3109 = vunpack.c.h.b16 %v2728
    %v3110 = vunpack.c.l.b16 %v2729
    %v3111 = vunpack.c.h.b16 %v2729
    %v3112 = vunpack.c.l.b16 %v2730
    %v3113 = vunpack.c.h.b16 %v2730
    %v3114 = vunpack.c.l.b16 %v2731
    %v3115 = vunpack.c.h.b16 %v2731
    %v3116 = vunpack.c.l.b16 %v2732
    %v3117 = vunpack.c.h.b16 %v2732
    %v3118 = vunpack.c.l.b16 %v2733
    %v3119 = vunpack.c.h.b16 %v2733
    %v3120 = vunpack.c.l.b16 %v2734
    %v3121 = vunpack.c.h.b16 %v2734
    %v3122 = vunpack.c.l.b16 %v2735
    %v3123 = vunpack.c.h.b16 %v2735
    %v3124 = vunpack.c.l.b16 %v2736
    %v3125 = vunpack.c.h.b16 %v2736
    %v3126 = vunpack.c.l.b16 %v2737
    %v3127 = vunpack.c.h.b16 %v2737
    %v3128 = vunpack.c.l.b16 %v2738
    %v3129 = vunpack.c.h.b16 %v2738
    %v3130 = vunpack.c.l.b16 %v2739
    %v3131 = vunpack.c.h.b16 %v2739
    %v3132 = vunpack.c.l.b16 %v2740
    %v3133 = vunpack.c.h.b16 %v2740
    %v3134 = vunpack.c.l.b16 %v2741
    %v3135 = vunpack.c.h.b16 %v2741
    %v3136 = vunpack.c.l.b16 %v2742
    %v3137 = vunpack.c.h.b16 %v2742
    %v3138 = vunpack.c.l.b16 %v2743
    %v3139 = vunpack.c.h.b16 %v2743
    %v3140 = vunpack.c.l.b16 %v2744
    %v3141 = vunpack.c.h.b16 %v2744
    %v3142 = vunpack.c.l.b16 %v2745
    %v3143 = vunpack.c.h.b16 %v2745
    %v3144 = vunpack.c.l.b16 %v2746
    %v3145 = vunpack.c.h.b16 %v2746
    %v3146 = vunpack.c.l.b16 %v2747
    %v3147 = vunpack.c.h.b16 %v2747
    %v3148 = vunpack.c.l.b16 %v2748
    %v3149 = vunpack.c.h.b16 %v2748
    %v3150 = vunpack.c.l.b16 %v2749
    %v3151 = vunpack.c.h.b16 %v2749
    %v3152 = vunpack.c.l.b16 %v2750
    %v3153 = vunpack.c.h.b16 %v2750
    %v3154 = vunpack.c.l.b16 %v2751
    %v3155 = vunpack.c.h.b16 %v2751
    %v3156 = vunpack.c.l.b16 %v2752
    %v3157 = vunpack.c.h.b16 %v2752
    %v3158 = vunpack.c.l.b16 %v2753
    %v3159 = vunpack.c.h.b16 %v2753
    %v3160 = vpack.c.b16 %v2908, %v2904
    %v3161 = vpack.c.b16 %v2909, %v2905
    %v3162 = vpack.c.b16 %v2910, %v2906
    %v3163 = vpack.c.b16 %v2911, %v2907
    %v3164 = vpack.c.b16 %v2916, %v2912
    %v3165 = vpack.c.b16 %v2917, %v2913
    %v3166 = vpack.c.b16 %v2918, %v2914
    %v3167 = vpack.c.b16 %v2919, %v2915
    %v3168 = vpack.c.b16 %v2924, %v2920
    %v3169 = vpack.c.b16 %v2925, %v2921
    %v3170 = vpack.c.b16 %v2926, %v2922
    %v3171 = vpack.c.b16 %v2927, %v2923
    %v3172 = vpack.c.b16 %v2932, %v2928
    %v3173 = vpack.c.b16 %v2933, %v2929
    %v3174 = vpack.c.b16 %v2934, %v2930
    %v3175 = vpack.c.b16 %v2935, %v2931
    %v3176 = vpack.c.b16 %v2940, %v2936
    %v3177 = vpack.c.b16 %v2941, %v2937
    %v3178 = vpack.c.b16 %v2942, %v2938
    %v3179 = vpack.c.b16 %v2943, %v2939
    %v3180 = vpack.c.b16 %v2948, %v2944
    %v3181 = vpack.c.b16 %v2949, %v2945
    %v3182 = vpack.c.b16 %v2950, %v2946
    %v3183 = vpack.c.b16 %v2951, %v2947
    %v3184 = vpack.c.b16 %v2956, %v2952
    %v3185 = vpack.c.b16 %v2957, %v2953
    %v3186 = vpack.c.b16 %v2958, %v2954
    %v3187 = vpack.c.b16 %v2959, %v2955
    %v3188 = vpack.c.b16 %v2964, %v2960
    %v3189 = vpack.c.b16 %v2965, %v2961
    %v3190 = vpack.c.b16 %v2966, %v2962
    %v3191 = vpack.c.b16 %v2967, %v2963
    %v3192 = vpack.c.b16 %v2972, %v2968
    %v3193 = vpack.c.b16 %v2973, %v2969
    %v3194 = vpack.c.b16 %v2974, %v2970
    %v3195 = vpack.c.b16 %v2975, %v2971
    %v3196 = vpack.c.b16 %v2980, %v2976
    %v3197 = vpack.c.b16 %v2981, %v2977
    %v3198 = vpack.c.b16 %v2982, %v2978
    %v3199 = vpack.c.b16 %v2983, %v2979
    %v3200 = vpack.c.b16 %v2988, %v2984
    %v3201 = vpack.c.b16 %v2989, %v2985
    %v3202 = vpack.c.b16 %v2990, %v2986
    %v3203 = vpack.c.b16 %v2991, %v2987
    %v3204 = vpack.c.b16 %v2996, %v2992
    %v3205 = vpack.c.b16 %v2997, %v2993
    %v3206 = vpack.c.b16 %v2998, %v2994
    %v3207 = vpack.c.b16 %v2999, %v2995
    %v3208 = vpack.c.b16 %v3004, %v3000
    %v3209 = vpack.c.b16 %v3005, %v3001
    %v3210 = vpack.c.b16 %v3006, %v3002
    %v3211 = vpack.c.b16 %v3007, %v3003
    %v3212 = vpack.c.b16 %v3012, %v3008
    %v3213 = vpack.c.b16 %v3013, %v3009
    %v3214 = vpack.c.b16 %v3014, %v3010
    %v3215 = vpack.c.b16 %v3015, %v3011
    %v3216 = vpack.c.b16 %v3020, %v3016
    %v3217 = vpack.c.b16 %v3021, %v3017
    %v3218 = vpack.c.b16 %v3022, %v3018
    %v3219 = vpack.c.b16 %v3023, %v3019
    %v3220 = vpack.c.b16 %v3028, %v3024
    %v3221 = vpack.c.b16 %v3029, %v3025
    %v3222 = vpack.c.b16 %v3030, %v3026
    %v3223 = vpack.c.b16 %v3031, %v3027
    %v3224 = vpack.c.b16 %v3036, %v3032
    %v3225 = vpack.c.b16 %v3037, %v3033
    %v3226 = vpack.c.b16 %v3038, %v3034
    %v3227 = vpack.c.b16 %v3039, %v3035
    %v3228 = vpack.c.b16 %v3044, %v3040
    %v3229 = vpack.c.b16 %v3045, %v3041
    %v3230 = vpack.c.b16 %v3046, %v3042
    %v3231 = vpack.c.b16 %v3047, %v3043
    %v3232 = vpack.c.b16 %v3052, %v3048
    %v3233 = vpack.c.b16 %v3053, %v3049
    %v3234 = vpack.c.b16 %v3054, %v3050
    %v3235 = vpack.c.b16 %v3055, %v3051
    %v3236 = vpack.c.b16 %v3060, %v3056
    %v3237 = vpack.c.b16 %v3061, %v3057
    %v3238 = vpack.c.b16 %v3062, %v3058
    %v3239 = vpack.c.b16 %v3063, %v3059
    %v3240 = vpack.c.b16 %v3068, %v3064
    %v3241 = vpack.c.b16 %v3069, %v3065
    %v3242 = vpack.c.b16 %v3070, %v3066
    %v3243 = vpack.c.b16 %v3071, %v3067
    %v3244 = vpack.c.b16 %v3076, %v3072
    %v3245 = vpack.c.b16 %v3077, %v3073
    %v3246 = vpack.c.b16 %v3078, %v3074
    %v3247 = vpack.c.b16 %v3079, %v3075
    %v3248 = vpack.c.b16 %v3084, %v3080
    %v3249 = vpack.c.b16 %v3085, %v3081
    %v3250 = vpack.c.b16 %v3086, %v3082
    %v3251 = vpack.c.b16 %v3087, %v3083
    %v3252 = vpack.c.b16 %v3092, %v3088
    %v3253 = vpack.c.b16 %v3093, %v3089
    %v3254 = vpack.c.b16 %v3094, %v3090
    %v3255 = vpack.c.b16 %v3095, %v3091
    %v3256 = vpack.c.b16 %v3100, %v3096
    %v3257 = vpack.c.b16 %v3101, %v3097
    %v3258 = vpack.c.b16 %v3102, %v3098
    %v3259 = vpack.c.b16 %v3103, %v3099
    %v3260 = vpack.c.b16 %v3108, %v3104
    %v3261 = vpack.c.b16 %v3109, %v3105
    %v3262 = vpack.c.b16 %v3110, %v3106
    %v3263 = vpack.c.b16 %v3111, %v3107
    %v3264 = vpack.c.b16 %v3116, %v3112
    %v3265 = vpack.c.b16 %v3117, %v3113
    %v3266 = vpack.c.b16 %v3118, %v3114
    %v3267 = vpack.c.b16 %v3119, %v3115
    %v3268 = vpack.c.b16 %v3124, %v3120
    %v3269 = vpack.c.b16 %v3125, %v3121
    %v3270 = vpack.c.b16 %v3126, %v3122
    %v3271 = vpack.c.b16 %v3127, %v3123
    %v3272 = vpack.c.b16 %v3132, %v3128
    %v3273 = vpack.c.b16 %v3133, %v3129
    %v3274 = vpack.c.b16 %v3134, %v3130
    %v3275 = vpack.c.b16 %v3135, %v3131
    %v3276 = vpack.c.b16 %v3140, %v3136
    %v3277 = vpack.c.b16 %v3141, %v3137
    %v3278 = vpack.c.b16 %v3142, %v3138
    %v3279 = vpack.c.b16 %v3143, %v3139
    %v3280 = vpack.c.b16 %v3148, %v3144
    %v3281 = vpack.c.b16 %v3149, %v3145
    %v3282 = vpack.c.b16 %v3150, %v3146
    %v3283 = vpack.c.b16 %v3151, %v3147
    %v3284 = vpack.c.b16 %v3156, %v3152
    %v3285 = vpack.c.b16 %v3157, %v3153
    %v3286 = vpack.c.b16 %v3158, %v3154
    %v3287 = vpack.c.b16 %v3159, %v3155
    %3416 = vmatprep.subr.bf16.mxu0 %v3161
    %3417 = vmatpush1.bf16.msra.mxu0 %v3160
    %3418 = vmatprep.subr.bf16.mxu0 %v3165
    %3419 = vmatpush1.bf16.msra.mxu0 %v3164
    %3420 = vmatprep.subr.bf16.mxu0 %v3169
    %3421 = vmatpush1.bf16.msra.mxu0 %v3168
    %3422 = vmatprep.subr.bf16.mxu0 %v3173
    %3423 = vmatpush1.bf16.msra.mxu0 %v3172
    %3424 = vmatprep.subr.bf16.mxu0 %v3177
    %3425 = vmatpush1.bf16.msra.mxu0 %v3176
    %3426 = vmatprep.subr.bf16.mxu0 %v3181
    %3427 = vmatpush1.bf16.msra.mxu0 %v3180
    %3428 = vmatprep.subr.bf16.mxu0 %v3185
    %3429 = vmatpush1.bf16.msra.mxu0 %v3184
    %3430 = vmatprep.subr.bf16.mxu0 %v3189
    %3431 = vmatpush1.bf16.msra.mxu0 %v3188
    %3432 = vmatprep.subr.bf16.mxu0 %v3193
    %3433 = vmatpush1.bf16.msra.mxu0 %v3192
    %3434 = vmatprep.subr.bf16.mxu0 %v3197
    %3435 = vmatpush1.bf16.msra.mxu0 %v3196
    %3436 = vmatprep.subr.bf16.mxu0 %v3201
    %3437 = vmatpush1.bf16.msra.mxu0 %v3200
    %3438 = vmatprep.subr.bf16.mxu0 %v3205
    %3439 = vmatpush1.bf16.msra.mxu0 %v3204
    %3440 = vmatprep.subr.bf16.mxu0 %v3209
    %3441 = vmatpush1.bf16.msra.mxu0 %v3208
    %3442 = vmatprep.subr.bf16.mxu0 %v3213
    %3443 = vmatpush1.bf16.msra.mxu0 %v3212
    %3444 = vmatprep.subr.bf16.mxu0 %v3217
    %3445 = vmatpush1.bf16.msra.mxu0 %v3216
    %3446 = vmatprep.subr.bf16.mxu0 %v3221
    %3447 = vmatpush1.bf16.msra.mxu0 %v3220
    %3448 = vmatprep.mubr.bf16.mxu0 %v2623
    %3449 = vmatmul.mubr.bf16.gmra.mrb[0].mxu0 %v2622
    %v3450 = vpop.f32.mrb[0].mxu0
    %v3451 = vadd.f32 %v2759, %v3450
    %v3452 = vpop.f32.mrb[0].mxu0
    %v3453 = vadd.f32 %v2763, %v3452
    %v3454 = vpop.f32.mrb[0].mxu0
    %v3455 = vpop.f32.mrb[0].mxu0
    %3456 = vdwg.mxu0
    %3457 = vmatprep.subr.bf16.mxu0 %v3225
    %3458 = vmatpush1.bf16.msra.mxu0 %v3224
    %3459 = vmatprep.subr.bf16.mxu0 %v3229
    %3460 = vmatpush1.bf16.msra.mxu0 %v3228
    %3461 = vmatprep.subr.bf16.mxu0 %v3233
    %3462 = vmatpush1.bf16.msra.mxu0 %v3232
    %3463 = vmatprep.subr.bf16.mxu0 %v3237
    %3464 = vmatpush1.bf16.msra.mxu0 %v3236
    %3465 = vmatprep.subr.bf16.mxu0 %v3241
    %3466 = vmatpush1.bf16.msra.mxu0 %v3240
    %3467 = vmatprep.subr.bf16.mxu0 %v3245
    %3468 = vmatpush1.bf16.msra.mxu0 %v3244
    %3469 = vmatprep.subr.bf16.mxu0 %v3249
    %3470 = vmatpush1.bf16.msra.mxu0 %v3248
    %3471 = vmatprep.subr.bf16.mxu0 %v3253
    %3472 = vmatpush1.bf16.msra.mxu0 %v3252
    %3473 = vmatprep.subr.bf16.mxu0 %v3257
    %3474 = vmatpush1.bf16.msra.mxu0 %v3256
    %3475 = vmatprep.subr.bf16.mxu0 %v3261
    %3476 = vmatpush1.bf16.msra.mxu0 %v3260
    %3477 = vmatprep.subr.bf16.mxu0 %v3265
    %3478 = vmatpush1.bf16.msra.mxu0 %v3264
    %3479 = vmatprep.subr.bf16.mxu0 %v3269
    %3480 = vmatpush1.bf16.msra.mxu0 %v3268
    %3481 = vmatprep.subr.bf16.mxu0 %v3273
    %3482 = vmatpush1.bf16.msra.mxu0 %v3272
    %3483 = vmatprep.subr.bf16.mxu0 %v3277
    %3484 = vmatpush1.bf16.msra.mxu0 %v3276
    %3485 = vmatprep.subr.bf16.mxu0 %v3281
    %3486 = vmatpush1.bf16.msra.mxu0 %v3280
    %3487 = vmatprep.subr.bf16.mxu0 %v3285
    %3488 = vmatpush1.bf16.msra.mxu0 %v3284
    %3489 = vmatprep.mubr.bf16.mxu0 %v2625
    %3490 = vmatmul.mubr.bf16.gmra.mrb[0].mxu0 %v2624
    %v3491 = vpop.f32.mrb[0].mxu0
    %v3492 = vadd.f32 %v3451, %v3491
    %v3493 = vpop.f32.mrb[0].mxu0
    %v3494 = vadd.f32 %v3453, %v3493
    %v3495 = vpop.f32.mrb[0].mxu0
    %v3496 = vpop.f32.mrb[0].mxu0
    %3497 = vdwg.mxu0
    %3498 = vmatprep.subr.bf16.mxu0 %v3163
    %3499 = vmatpush1.bf16.msra.mxu0 %v3162
    %3500 = vmatprep.subr.bf16.mxu0 %v3167
    %3501 = vmatpush1.bf16.msra.mxu0 %v3166
    %3502 = vmatprep.subr.bf16.mxu0 %v3171
    %3503 = vmatpush1.bf16.msra.mxu0 %v3170
    %3504 = vmatprep.subr.bf16.mxu0 %v3175
    %3505 = vmatpush1.bf16.msra.mxu0 %v3174
    %3506 = vmatprep.subr.bf16.mxu0 %v3179
    %3507 = vmatpush1.bf16.msra.mxu0 %v3178
    %3508 = vmatprep.subr.bf16.mxu0 %v3183
    %3509 = vmatpush1.bf16.msra.mxu0 %v3182
    %3510 = vmatprep.subr.bf16.mxu0 %v3187
    %3511 = vmatpush1.bf16.msra.mxu0 %v3186
    %3512 = vmatprep.subr.bf16.mxu0 %v3191
    %3513 = vmatpush1.bf16.msra.mxu0 %v3190
    %3514 = vmatprep.subr.bf16.mxu0 %v3195
    %3515 = vmatpush1.bf16.msra.mxu0 %v3194
    %3516 = vmatprep.subr.bf16.mxu0 %v3199
    %3517 = vmatpush1.bf16.msra.mxu0 %v3198
    %3518 = vmatprep.subr.bf16.mxu0 %v3203
    %3519 = vmatpush1.bf16.msra.mxu0 %v3202
    %3520 = vmatprep.subr.bf16.mxu0 %v3207
    %3521 = vmatpush1.bf16.msra.mxu0 %v3206
    %3522 = vmatprep.subr.bf16.mxu0 %v3211
    %3523 = vmatpush1.bf16.msra.mxu0 %v3210
    %3524 = vmatprep.subr.bf16.mxu0 %v3215
    %3525 = vmatpush1.bf16.msra.mxu0 %v3214
    %3526 = vmatprep.subr.bf16.mxu0 %v3219
    %3527 = vmatpush1.bf16.msra.mxu0 %v3218
    %3528 = vmatprep.subr.bf16.mxu0 %v3223
    %3529 = vmatpush1.bf16.msra.mxu0 %v3222
    %3530 = vmatprep.mubr.bf16.mxu0 %v2623
    %3531 = vmatmul.mubr.bf16.gmra.mrb[0].mxu0 %v2622
    %v3532 = vpop.f32.mrb[0].mxu0
    %v3533 = vadd.f32 %v2767, %v3532
    %v3534 = vpop.f32.mrb[0].mxu0
    %v3535 = vadd.f32 %v2771, %v3534
    %v3536 = vpop.f32.mrb[0].mxu0
    %v3537 = vpop.f32.mrb[0].mxu0
    %3538 = vdwg.mxu0
    %3539 = vmatprep.subr.bf16.mxu0 %v3227
    %3540 = vmatpush1.bf16.msra.mxu0 %v3226
    %3541 = vmatprep.subr.bf16.mxu0 %v3231
    %3542 = vmatpush1.bf16.msra.mxu0 %v3230
    %3543 = vmatprep.subr.bf16.mxu0 %v3235
    %3544 = vmatpush1.bf16.msra.mxu0 %v3234
    %3545 = vmatprep.subr.bf16.mxu0 %v3239
    %3546 = vmatpush1.bf16.msra.mxu0 %v3238
    %3547 = vmatprep.subr.bf16.mxu0 %v3243
    %3548 = vmatpush1.bf16.msra.mxu0 %v3242
    %3549 = vmatprep.subr.bf16.mxu0 %v3247
    %3550 = vmatpush1.bf16.msra.mxu0 %v3246
    %3551 = vmatprep.subr.bf16.mxu0 %v3251
    %3552 = vmatpush1.bf16.msra.mxu0 %v3250
    %3553 = vmatprep.subr.bf16.mxu0 %v3255
    %3554 = vmatpush1.bf16.msra.mxu0 %v3254
    %3555 = vmatprep.subr.bf16.mxu0 %v3259
    %3556 = vmatpush1.bf16.msra.mxu0 %v3258
    %3557 = vmatprep.subr.bf16.mxu0 %v3263
    %3558 = vmatpush1.bf16.msra.mxu0 %v3262
    %3559 = vmatprep.subr.bf16.mxu0 %v3267
    %3560 = vmatpush1.bf16.msra.mxu0 %v3266
    %3561 = vmatprep.subr.bf16.mxu0 %v3271
    %3562 = vmatpush1.bf16.msra.mxu0 %v3270
    %3563 = vmatprep.subr.bf16.mxu0 %v3275
    %3564 = vmatpush1.bf16.msra.mxu0 %v3274
    %3565 = vmatprep.subr.bf16.mxu0 %v3279
    %3566 = vmatpush1.bf16.msra.mxu0 %v3278
    %3567 = vmatprep.subr.bf16.mxu0 %v3283
    %3568 = vmatpush1.bf16.msra.mxu0 %v3282
    %3569 = vmatprep.subr.bf16.mxu0 %v3287
    %3570 = vmatpush1.bf16.msra.mxu0 %v3286
    %3571 = vmatprep.mubr.bf16.mxu0 %v2625
    %3572 = vmatmul.mubr.bf16.gmra.mrb[0].mxu0 %v2624
    %v3573 = vpop.f32.mrb[0].mxu0
    %v3574 = vadd.f32 %v3533, %v3573
    %v3575 = vpop.f32.mrb[0].mxu0
    %v3576 = vadd.f32 %v3535, %v3575
    %v3577 = vpop.f32.mrb[0].mxu0
    %v3578 = vpop.f32.mrb[0].mxu0
    %3579 = vdwg.mxu0
    %v3580 = vmax.f32 %v3492, 0.0
    %v3581 = vmax.f32 %v3494, 0.0
    %v3582 = vmax.f32 %v3574, 0.0
    %v3583 = vmax.f32 %v3576, 0.0
    %v3584 = vpack.c.bf16 %v3580, %v3580
    %v3585 = vpack.c.bf16 %v3581, %v3581
    %v3586 = vpack.c.bf16 %v3582, %v3582
    %v3587 = vpack.c.bf16 %v3583, %v3583
    %v3588 = vld [vmem:[#allocation11] sm:$0xf]
    %v3589 = vld [vmem:[#allocation11 + $0x4] sm:$0xf]
    %v3590 = vld [vmem:[#allocation11 + $0x8] sm:$0xf]
    %v3591 = vld [vmem:[#allocation11 + $0xc] sm:$0xf]
    %v3592 = vld [vmem:[#allocation11 + $0x10] sm:$0xf]
    %v3593 = vld [vmem:[#allocation11 + $0x14] sm:$0xf]
    %v3594 = vld [vmem:[#allocation11 + $0x18] sm:$0xf]
    %v3595 = vld [vmem:[#allocation11 + $0x1c] sm:$0xf]
    %v3596 = vld [vmem:[#allocation11 + $0x20] sm:$0xf]
    %v3597 = vld [vmem:[#allocation11 + $0x24] sm:$0xf]
    %v3598 = vld [vmem:[#allocation11 + $0x28] sm:$0xf]
    %v3599 = vld [vmem:[#allocation11 + $0x2c] sm:$0xf]
    %v3600 = vld [vmem:[#allocation11 + $0x30] sm:$0xf]
    %v3601 = vld [vmem:[#allocation11 + $0x34] sm:$0xf]
    %v3602 = vld [vmem:[#allocation11 + $0x38] sm:$0xf]
    %v3603 = vld [vmem:[#allocation11 + $0x3c] sm:$0xf]
    %v3604 = vld [vmem:[#allocation11 + $0x40] sm:$0xf]
    %v3605 = vld [vmem:[#allocation11 + $0x44] sm:$0xf]
    %v3606 = vld [vmem:[#allocation11 + $0x48] sm:$0xf]
    %v3607 = vld [vmem:[#allocation11 + $0x4c] sm:$0xf]
    %v3608 = vld [vmem:[#allocation11 + $0x50] sm:$0xf]
    %v3609 = vld [vmem:[#allocation11 + $0x54] sm:$0xf]
    %v3610 = vld [vmem:[#allocation11 + $0x58] sm:$0xf]
    %v3611 = vld [vmem:[#allocation11 + $0x5c] sm:$0xf]
    %v3612 = vld [vmem:[#allocation11 + $0x60] sm:$0xf]
    %v3613 = vld [vmem:[#allocation11 + $0x64] sm:$0xf]
    %v3614 = vld [vmem:[#allocation11 + $0x68] sm:$0xf]
    %v3615 = vld [vmem:[#allocation11 + $0x6c] sm:$0xf]
    %v3616 = vld [vmem:[#allocation11 + $0x70] sm:$0xf]
    %v3617 = vld [vmem:[#allocation11 + $0x74] sm:$0xf]
    %v3618 = vld [vmem:[#allocation11 + $0x78] sm:$0xf]
    %v3619 = vld [vmem:[#allocation11 + $0x7c] sm:$0xf]
    %v3620 = vld [vmem:[#allocation11 + $0x80] sm:$0xf]
    %v3621 = vld [vmem:[#allocation11 + $0x84] sm:$0xf]
    %v3622 = vld [vmem:[#allocation11 + $0x88] sm:$0xf]
    %v3623 = vld [vmem:[#allocation11 + $0x8c] sm:$0xf]
    %v3624 = vld [vmem:[#allocation11 + $0x90] sm:$0xf]
    %v3625 = vld [vmem:[#allocation11 + $0x94] sm:$0xf]
    %v3626 = vld [vmem:[#allocation11 + $0x98] sm:$0xf]
    %v3627 = vld [vmem:[#allocation11 + $0x9c] sm:$0xf]
    %v3628 = vld [vmem:[#allocation11 + $0xa0] sm:$0xf]
    %v3629 = vld [vmem:[#allocation11 + $0xa4] sm:$0xf]
    %v3630 = vld [vmem:[#allocation11 + $0xa8] sm:$0xf]
    %v3631 = vld [vmem:[#allocation11 + $0xac] sm:$0xf]
    %v3632 = vld [vmem:[#allocation11 + $0xb0] sm:$0xf]
    %v3633 = vld [vmem:[#allocation11 + $0xb4] sm:$0xf]
    %v3634 = vld [vmem:[#allocation11 + $0xb8] sm:$0xf]
    %v3635 = vld [vmem:[#allocation11 + $0xbc] sm:$0xf]
    %v3636 = vld [vmem:[#allocation11 + $0xc0] sm:$0xf]
    %v3637 = vld [vmem:[#allocation11 + $0xc4] sm:$0xf]
    %v3638 = vld [vmem:[#allocation11 + $0xc8] sm:$0xf]
    %v3639 = vld [vmem:[#allocation11 + $0xcc] sm:$0xf]
    %v3640 = vld [vmem:[#allocation11 + $0xd0] sm:$0xf]
    %v3641 = vld [vmem:[#allocation11 + $0xd4] sm:$0xf]
    %v3642 = vld [vmem:[#allocation11 + $0xd8] sm:$0xf]
    %v3643 = vld [vmem:[#allocation11 + $0xdc] sm:$0xf]
    %v3644 = vld [vmem:[#allocation11 + $0xe0] sm:$0xf]
    %v3645 = vld [vmem:[#allocation11 + $0xe4] sm:$0xf]
    %v3646 = vld [vmem:[#allocation11 + $0xe8] sm:$0xf]
    %v3647 = vld [vmem:[#allocation11 + $0xec] sm:$0xf]
    %v3648 = vld [vmem:[#allocation11 + $0xf0] sm:$0xf]
    %v3649 = vld [vmem:[#allocation11 + $0xf4] sm:$0xf]
    %v3650 = vld [vmem:[#allocation11 + $0xf8] sm:$0xf]
    %v3651 = vld [vmem:[#allocation11 + $0xfc] sm:$0xf]
    %v3652 = vld [vmem:[%s8] sm:$0x1]
    %v3654 = vlaneseq
    %v3655 = vshrl.u32 %v3654, 7
    %v3656 = vsub.s32 0, %v3655
    %v3657 = vrot.slane %v3652, %v3656
    %v3723 = vunpack.c.l.b16 %v3588
    %v3724 = vunpack.c.l.b16 %v3589
    %v3725 = vunpack.c.l.b16 %v3590
    %v3726 = vunpack.c.l.b16 %v3591
    %v3727 = vunpack.c.l.b16 %v3592
    %v3728 = vunpack.c.l.b16 %v3593
    %v3729 = vunpack.c.l.b16 %v3594
    %v3730 = vunpack.c.l.b16 %v3595
    %v3731 = vunpack.c.l.b16 %v3596
    %v3732 = vunpack.c.l.b16 %v3597
    %v3733 = vunpack.c.l.b16 %v3598
    %v3734 = vunpack.c.l.b16 %v3599
    %v3735 = vunpack.c.l.b16 %v3600
    %v3736 = vunpack.c.l.b16 %v3601
    %v3737 = vunpack.c.l.b16 %v3602
    %v3738 = vunpack.c.l.b16 %v3603
    %v3739 = vunpack.c.l.b16 %v3604
    %v3740 = vunpack.c.l.b16 %v3605
    %v3741 = vunpack.c.l.b16 %v3606
    %v3742 = vunpack.c.l.b16 %v3607
    %v3743 = vunpack.c.l.b16 %v3608
    %v3744 = vunpack.c.l.b16 %v3609
    %v3745 = vunpack.c.l.b16 %v3610
    %v3746 = vunpack.c.l.b16 %v3611
    %v3747 = vunpack.c.l.b16 %v3612
    %v3748 = vunpack.c.l.b16 %v3613
    %v3749 = vunpack.c.l.b16 %v3614
    %v3750 = vunpack.c.l.b16 %v3615
    %v3751 = vunpack.c.l.b16 %v3616
    %v3752 = vunpack.c.l.b16 %v3617
    %v3753 = vunpack.c.l.b16 %v3618
    %v3754 = vunpack.c.l.b16 %v3619
    %v3755 = vunpack.c.l.b16 %v3620
    %v3756 = vunpack.c.l.b16 %v3621
    %v3757 = vunpack.c.l.b16 %v3622
    %v3758 = vunpack.c.l.b16 %v3623
    %v3759 = vunpack.c.l.b16 %v3624
    %v3760 = vunpack.c.l.b16 %v3625
    %v3761 = vunpack.c.l.b16 %v3626
    %v3762 = vunpack.c.l.b16 %v3627
    %v3763 = vunpack.c.l.b16 %v3628
    %v3764 = vunpack.c.l.b16 %v3629
    %v3765 = vunpack.c.l.b16 %v3630
    %v3766 = vunpack.c.l.b16 %v3631
    %v3767 = vunpack.c.l.b16 %v3632
    %v3768 = vunpack.c.l.b16 %v3633
    %v3769 = vunpack.c.l.b16 %v3634
    %v3770 = vunpack.c.l.b16 %v3635
    %v3771 = vunpack.c.l.b16 %v3636
    %v3772 = vunpack.c.l.b16 %v3637
    %v3773 = vunpack.c.l.b16 %v3638
    %v3774 = vunpack.c.l.b16 %v3639
    %v3775 = vunpack.c.l.b16 %v3640
    %v3776 = vunpack.c.l.b16 %v3641
    %v3777 = vunpack.c.l.b16 %v3642
    %v3778 = vunpack.c.l.b16 %v3643
    %v3779 = vunpack.c.l.b16 %v3644
    %v3780 = vunpack.c.l.b16 %v3645
    %v3781 = vunpack.c.l.b16 %v3646
    %v3782 = vunpack.c.l.b16 %v3647
    %v3783 = vunpack.c.l.b16 %v3648
    %v3784 = vunpack.c.l.b16 %v3649
    %v3785 = vunpack.c.l.b16 %v3650
    %v3786 = vunpack.c.l.b16 %v3651
    %v3787 = vpack.c.b16 %v3724, %v3723
    %v3788 = vpack.c.b16 %v3726, %v3725
    %v3789 = vpack.c.b16 %v3728, %v3727
    %v3790 = vpack.c.b16 %v3730, %v3729
    %v3791 = vpack.c.b16 %v3732, %v3731
    %v3792 = vpack.c.b16 %v3734, %v3733
    %v3793 = vpack.c.b16 %v3736, %v3735
    %v3794 = vpack.c.b16 %v3738, %v3737
    %v3795 = vpack.c.b16 %v3740, %v3739
    %v3796 = vpack.c.b16 %v3742, %v3741
    %v3797 = vpack.c.b16 %v3744, %v3743
    %v3798 = vpack.c.b16 %v3746, %v3745
    %v3799 = vpack.c.b16 %v3748, %v3747
    %v3800 = vpack.c.b16 %v3750, %v3749
    %v3801 = vpack.c.b16 %v3752, %v3751
    %v3802 = vpack.c.b16 %v3754, %v3753
    %v3803 = vpack.c.b16 %v3756, %v3755
    %v3804 = vpack.c.b16 %v3758, %v3757
    %v3805 = vpack.c.b16 %v3760, %v3759
    %v3806 = vpack.c.b16 %v3762, %v3761
    %v3807 = vpack.c.b16 %v3764, %v3763
    %v3808 = vpack.c.b16 %v3766, %v3765
    %v3809 = vpack.c.b16 %v3768, %v3767
    %v3810 = vpack.c.b16 %v3770, %v3769
    %v3811 = vpack.c.b16 %v3772, %v3771
    %v3812 = vpack.c.b16 %v3774, %v3773
    %v3813 = vpack.c.b16 %v3776, %v3775
    %v3814 = vpack.c.b16 %v3778, %v3777
    %v3815 = vpack.c.b16 %v3780, %v3779
    %v3816 = vpack.c.b16 %v3782, %v3781
    %v3817 = vpack.c.b16 %v3784, %v3783
    %v3818 = vpack.c.b16 %v3786, %v3785
    %3851 = vmatprep.subr.bf16.mxu0 0
    %3852 = vmatpush1.bf16.msra.mxu0 %v3787
    %3853 = vmatprep.subr.bf16.mxu0 0
    %3854 = vmatpush1.bf16.msra.mxu0 %v3788
    %3855 = vmatprep.subr.bf16.mxu0 0
    %3856 = vmatpush1.bf16.msra.mxu0 %v3789
    %3857 = vmatprep.subr.bf16.mxu0 0
    %3858 = vmatpush1.bf16.msra.mxu0 %v3790
    %3859 = vmatprep.subr.bf16.mxu0 0
    %3860 = vmatpush1.bf16.msra.mxu0 %v3791
    %3861 = vmatprep.subr.bf16.mxu0 0
    %3862 = vmatpush1.bf16.msra.mxu0 %v3792
    %3863 = vmatprep.subr.bf16.mxu0 0
    %3864 = vmatpush1.bf16.msra.mxu0 %v3793
    %3865 = vmatprep.subr.bf16.mxu0 0
    %3866 = vmatpush1.bf16.msra.mxu0 %v3794
    %3867 = vmatprep.subr.bf16.mxu0 0
    %3868 = vmatpush1.bf16.msra.mxu0 %v3795
    %3869 = vmatprep.subr.bf16.mxu0 0
    %3870 = vmatpush1.bf16.msra.mxu0 %v3796
    %3871 = vmatprep.subr.bf16.mxu0 0
    %3872 = vmatpush1.bf16.msra.mxu0 %v3797
    %3873 = vmatprep.subr.bf16.mxu0 0
    %3874 = vmatpush1.bf16.msra.mxu0 %v3798
    %3875 = vmatprep.subr.bf16.mxu0 0
    %3876 = vmatpush1.bf16.msra.mxu0 %v3799
    %3877 = vmatprep.subr.bf16.mxu0 0
    %3878 = vmatpush1.bf16.msra.mxu0 %v3800
    %3879 = vmatprep.subr.bf16.mxu0 0
    %3880 = vmatpush1.bf16.msra.mxu0 %v3801
    %3881 = vmatprep.subr.bf16.mxu0 0
    %3882 = vmatpush1.bf16.msra.mxu0 %v3802
    %3883 = vmatprep.mubr.bf16.mxu0 %v3585
    %3884 = vmatmul.mubr.bf16.gmra.mrb[0].mxu0 %v3584
    %v3885 = vpop.f32.mrb[0].mxu0
    %v3886 = vadd.f32 %v3657, %v3885
    %v3887 = vpop.f32.mrb[0].mxu0
    %v3888 = vpop.f32.mrb[0].mxu0
    %v3889 = vpop.f32.mrb[0].mxu0
    %3890 = vdwg.mxu0
    %3891 = vmatprep.subr.bf16.mxu0 0
    %3892 = vmatpush1.bf16.msra.mxu0 %v3803
    %3893 = vmatprep.subr.bf16.mxu0 0
    %3894 = vmatpush1.bf16.msra.mxu0 %v3804
    %3895 = vmatprep.subr.bf16.mxu0 0
    %3896 = vmatpush1.bf16.msra.mxu0 %v3805
    %3897 = vmatprep.subr.bf16.mxu0 0
    %3898 = vmatpush1.bf16.msra.mxu0 %v3806
    %3899 = vmatprep.subr.bf16.mxu0 0
    %3900 = vmatpush1.bf16.msra.mxu0 %v3807
    %3901 = vmatprep.subr.bf16.mxu0 0
    %3902 = vmatpush1.bf16.msra.mxu0 %v3808
    %3903 = vmatprep.subr.bf16.mxu0 0
    %3904 = vmatpush1.bf16.msra.mxu0 %v3809
    %3905 = vmatprep.subr.bf16.mxu0 0
    %3906 = vmatpush1.bf16.msra.mxu0 %v3810
    %3907 = vmatprep.subr.bf16.mxu0 0
    %3908 = vmatpush1.bf16.msra.mxu0 %v3811
    %3909 = vmatprep.subr.bf16.mxu0 0
    %3910 = vmatpush1.bf16.msra.mxu0 %v3812
    %3911 = vmatprep.subr.bf16.mxu0 0
    %3912 = vmatpush1.bf16.msra.mxu0 %v3813
    %3913 = vmatprep.subr.bf16.mxu0 0
    %3914 = vmatpush1.bf16.msra.mxu0 %v3814
    %3915 = vmatprep.subr.bf16.mxu0 0
    %3916 = vmatpush1.bf16.msra.mxu0 %v3815
    %3917 = vmatprep.subr.bf16.mxu0 0
    %3918 = vmatpush1.bf16.msra.mxu0 %v3816
    %3919 = vmatprep.subr.bf16.mxu0 0
    %3920 = vmatpush1.bf16.msra.mxu0 %v3817
    %3921 = vmatprep.subr.bf16.mxu0 0
    %3922 = vmatpush1.bf16.msra.mxu0 %v3818
    %3923 = vmatprep.mubr.bf16.mxu0 %v3587
    %3924 = vmatmul.mubr.bf16.gmra.mrb[0].mxu0 %v3586
    %v3925 = vpop.f32.mrb[0].mxu0
    %v3926 = vadd.f32 %v3886, %v3925
    %v3927 = vpop.f32.mrb[0].mxu0
    %v3928 = vpop.f32.mrb[0].mxu0
    %v3929 = vpop.f32.mrb[0].mxu0
    %3930 = vdwg.mxu0
    %3931 = vmax.xlane.f32.xlu0 %v3926
    %v3932 = vpop.xlane.xlu0 %3931
    %v3933 = vsub.f32 %v3926, %v3932
    %v3934 = vmul.f32 %v3933, 1.442695
    %v3935 = vpow.pop %v3934
    %3936 = vadd.xlane.f32.xlu0 %v3935
    %v3937 = vpop.xlane.xlu0 %3936
    %v3938 = vlog2.pop %v3937
    %v3939 = vmul.f32 %v3938, 0.6931472
    %v3940 = vadd.f32 %v3932, %v3939
    %v3941 = vsub.f32 %v3926, %v3940
    %3942 = vst [vmem:[#allocation13] sm:$0xff] %v3941
    // Predicated region
    $region62: #{mlp_forward.1} parent=1 // pred_check
      _
    $region63: #{mlp_forward.1} parent=1 // pred_check_branch
      %3944 = sbr.rel (0) target = $region65
    $region64: #{mlp_forward.1} parent=1 // pred_region
      %s3946 = ssub.s32 128, 128
      %3947 = vsyncadd [#allocation4], %s3946
      %s3949 = sshll.u32 [#allocation13], 4
      %s3950 = int_to_ptr.vmem [resolvable:$true] %s3949
      %3952 = dma.vmem_to_hbm [thread:$0]  %s3950, 128, %s9, [#allocation4]
    $region65: #{mlp_forward.1} parent=1 // pred_fallthru
      _
    // Predicated region
    $region66: #{mlp_forward.1} parent=1 // pred_check
      _
    $region67: #{mlp_forward.1} parent=1 // pred_check_branch
      %3954 = sbr.rel (0) target = $region69
    $region68: #{mlp_forward.1} parent=1 // pred_region
      %3955 = dma.done [#allocation4], 128
    $region69: #{mlp_forward.1} parent=1 // pred_fallthru
      _
    %3956 = vsyncpa [#allocation3], 1
    %3957 = vsyncpa [#allocation6], 1
    %3958 = vsyncpa [#allocation9], 1
    %3959 = vsyncpa [#allocation12], 1
    %3960 = vsyncpa [#allocation4], 1

</llo_original>
